<compile_context>
chip_gen: v7x
topology: tpu7x:2x2x1
jax: 0.10.0
libtpu: 0.0.40
codegen_flags: <defaults>
</compile_context>

<pallas_src>
import jax
import jax.numpy as jnp
from jax.experimental import pallas as pl
from jax.experimental.pallas import tpu as pltpu

# ----------------------------- sizes ---------------------------------------
EMBED = 16        # embed_size
HIDDEN = 32       # hidden_size
VOCAB = 4         # vocab_size
NUM_LAYERS = 2
S = 7             # caption tokens
T = S + 1         # packed sequence length (last_hidden prepended)
SEQ_LEN = 8       # number of encoder hidden states
LANES = 128

assert T * VOCAB == HIDDEN, "torch.dot in get_att_score needs T*vocab == hidden"

# ------------------- static weight slab layout (rows x 128) -----------------
R_WIH0 = 0                      # (EMBED, 4H)
R_WHH0 = R_WIH0 + EMBED         # 16   (H, 4H)
R_WIH1 = R_WHH0 + HIDDEN        # 48   (H, 4H)
R_WHH1 = R_WIH1 + HIDDEN        # 80   (H, 4H)
R_B0 = R_WHH1 + HIDDEN          # 112  (1, 4H)  bih0 + bhh0
R_B1 = R_B0 + 1                 # 113  (1, 4H)  bih1 + bhh1
R_MISC = 120                    # 32-row misc block (8-aligned)
C_WATTN = 0                     # (H, H)
C_BATTN = C_WATTN + HIDDEN      # 32   (H, SEQ) pre-broadcast attn bias
C_WLIN = C_BATTN + SEQ_LEN      # 40   (H, V)
C_BLIN = C_WLIN + VOCAB         # 44   (1, V) at row R_MISC
SLAB_ROWS = 152

# ----------------------- runtime slab layout (32 x 128) ---------------------
RT_ROWS = 32
C_EMB = 0       # (T, EMBED)  rows 0:T
C_ENC = 32      # (SEQ, H)    rows 0:SEQ
C_ENCT = 64     # (H, SEQ)    rows 0:H

# ----------------------- packed output layout (8 x 128) ---------------------
OUT_ROWS = 8
C_OUT_RNN = 0      # (T, V)   rows 0:T
C_OUT_ATTN = 8     # (1, SEQ) row 0
C_OUT_CTX = 32     # (1, H)   row 0


# ---------------------- fused kernel: LSTM + Linear + attention --------------
def fused_decoder_kernel(w_ref, rt_ref, out_ref):
    f32 = jnp.float32
    H, E, V, SL = HIDDEN, EMBED, VOCAB, SEQ_LEN

    # zero the padded output block once (unwritten pad lanes stay deterministic)
    out_ref[...] = jnp.zeros_like(out_ref)

    # ---- static-slab views (static slices, no per-tensor DMA) ----
    wih0T = w_ref[R_WIH0:R_WIH0 + E, :]                     # (E, 4H)
    whh0T = w_ref[R_WHH0:R_WHH0 + H, :]                     # (H, 4H)
    wih1T = w_ref[R_WIH1:R_WIH1 + H, :]                     # (H, 4H)
    whh1T = w_ref[R_WHH1:R_WHH1 + H, :]                     # (H, 4H)
    b0 = w_ref[R_B0:R_B0 + 1, :]                            # (1, 4H)
    b1 = w_ref[R_B1:R_B1 + 1, :]                            # (1, 4H)
    wattn = w_ref[R_MISC:R_MISC + H, C_WATTN:C_WATTN + H]   # (H, H)
    battn = w_ref[R_MISC:R_MISC + H, C_BATTN:C_BATTN + SL]  # (H, SEQ) pre-bcast
    wlinT = w_ref[R_MISC:R_MISC + H, C_WLIN:C_WLIN + V]     # (H, V)
    blin = w_ref[R_MISC:R_MISC + 1, C_BLIN:C_BLIN + V]      # (1, V)

    # ---- runtime-slab views ----
    emb = rt_ref[0:T, C_EMB:C_EMB + E]                      # (T, E)
    enc = rt_ref[0:SL, C_ENC:C_ENC + H]                     # (SEQ, H)
    encT = rt_ref[0:H, C_ENCT:C_ENCT + SL]                  # (H, SEQ)

    # Attention projection (independent of the recurrence, off the h/c chain):
    # sT[:, i] = W_attn @ enc_i + b_attn                    -> (H, SEQ)
    sT = jnp.dot(wattn, encT, preferred_element_type=f32) + battn

    # Hoisted non-recurrent layer-0 input projection (+ combined bias): (T, 4H)
    xproj = jnp.dot(emb, wih0T, preferred_element_type=f32) + b0

    def gates_to_hc(gates, c_prev):
        # PyTorch gate order i, f, g, o.  Two full-lane EUP ops, then slice.
        sa = jax.nn.sigmoid(gates)
        ta = jnp.tanh(gates)
        i = sa[:, 0 * H:1 * H]
        f = sa[:, 1 * H:2 * H]
        g = ta[:, 2 * H:3 * H]
        o = sa[:, 3 * H:4 * H]
        c_new = f * c_prev + i * g
        h_new = o * jnp.tanh(c_new)
        return h_new, c_new

    zeros = jnp.zeros((1, H), f32)
    h0, c0, h1, c1 = zeros, zeros, zeros, zeros
    scores = jnp.zeros((1, SL), f32)

    for t in range(T):          # static full unroll; state lives in vregs
        # layer-1 recurrent partial: depends only on h1(t-1), overlaps layer 0
        rec1 = jnp.dot(h1, whh1T, preferred_element_type=f32)
        # layer 0: only the recurrent matmul remains in the loop
        g0 = xproj[t:t + 1, :] + jnp.dot(h0, whh0T, preferred_element_type=f32)
        h0, c0 = gates_to_hc(g0, c0)
        # layer 1: split weights, no lane-concat on the serial chain
        g1 = jnp.dot(h0, wih1T, preferred_element_type=f32) + rec1 + b1
        h1, c1 = gates_to_hc(g1, c1)
        # per-row linear, stored straight into the packed output block
        row = jnp.dot(h1, wlinT, preferred_element_type=f32) + blin    # (1, V)
        out_ref[t:t + 1, C_OUT_RNN:C_OUT_RNN + V] = row
        # per-row attention-score contribution (off the h/c dependency chain):
        # scores[i] += row . (W_attn @ enc_i + b)[t*V:(t+1)*V]
        scores = scores + jnp.dot(row, sT[t * V:(t + 1) * V, :],
                                  preferred_element_type=f32)          # (1, SEQ)

    # stable softmax over the SEQ lanes (exact divide keeps 1e-5 fidelity)
    m = jnp.max(scores, axis=1, keepdims=True)
    e = jnp.exp(scores - m)
    wts = e / jnp.sum(e, axis=1, keepdims=True)                        # (1, SEQ)
    out_ref[0:1, C_OUT_ATTN:C_OUT_ATTN + SL] = wts
    # context = attn_weights.bmm(encoder_hiddens.transpose(0,1)).squeeze(1)
    out_ref[0:1, C_OUT_CTX:C_OUT_CTX + H] = jnp.dot(
        wts, enc, preferred_element_type=f32)                          # (1, H)


def run_fused_decoder(wslab, rt_slab):
    vmem = pl.BlockSpec(memory_space=pltpu.MemorySpace.VMEM)
    return pl.pallas_call(
        fused_decoder_kernel,
        in_specs=[vmem, vmem],
        out_specs=vmem,
        out_shape=jax.ShapeDtypeStruct((OUT_ROWS, LANES), jnp.float32),
    )(wslab, rt_slab)


# ----------------------------- module wrapper --------------------------------
def make_params():
    keys = iter(jax.random.split(jax.random.PRNGKey(42), 20))

    def u(shape, bound):
        return jax.random.uniform(next(keys), shape, jnp.float32, -bound, bound)

    k = 1.0 / (HIDDEN ** 0.5)
    p = {
        "embed_w": u((VOCAB, EMBED), 0.1),                 # embed.weight
        "lin_w": u((VOCAB, HIDDEN), 0.1),                  # linear.weight
        "lin_b": jnp.zeros((VOCAB,), jnp.float32),         # linear.bias
        "attn_w": u((HIDDEN, HIDDEN), k),                  # attn.weight
        "attn_b": u((HIDDEN,), k),                         # attn.bias
        "wih0": u((4 * HIDDEN, EMBED), k),
        "whh0": u((4 * HIDDEN, HIDDEN), k),
        "bih0": u((4 * HIDDEN,), k),
        "bhh0": u((4 * HIDDEN,), k),
        "wih1": u((4 * HIDDEN, HIDDEN), k),
        "whh1": u((4 * HIDDEN, HIDDEN), k),
        "bih1": u((4 * HIDDEN,), k),
        "bhh1": u((4 * HIDDEN,), k),
    }
    return p


def prepare_kernel_weights(params):
    """One-time weight prep: transpose/stack everything into ONE (152,128) slab."""
    slab = jnp.zeros((SLAB_ROWS, LANES), jnp.float32)
    slab = slab.at[R_WIH0:R_WIH0 + EMBED, :].set(params["wih0"].T)      # (E, 4H)
    slab = slab.at[R_WHH0:R_WHH0 + HIDDEN, :].set(params["whh0"].T)     # (H, 4H)
    slab = slab.at[R_WIH1:R_WIH1 + HIDDEN, :].set(params["wih1"].T)     # (H, 4H)
    slab = slab.at[R_WHH1:R_WHH1 + HIDDEN, :].set(params["whh1"].T)     # (H, 4H)
    slab = slab.at[R_B0, :].set(params["bih0"] + params["bhh0"])        # (4H,)
    slab = slab.at[R_B1, :].set(params["bih1"] + params["bhh1"])        # (4H,)
    slab = slab.at[R_MISC:R_MISC + HIDDEN,
                   C_WATTN:C_WATTN + HIDDEN].set(params["attn_w"])      # (H, H)
    slab = slab.at[R_MISC:R_MISC + HIDDEN,
                   C_BATTN:C_BATTN + SEQ_LEN].set(
        jnp.broadcast_to(params["attn_b"][:, None], (HIDDEN, SEQ_LEN)))  # pre-bcast
    slab = slab.at[R_MISC:R_MISC + HIDDEN,
                   C_WLIN:C_WLIN + VOCAB].set(params["lin_w"].T)        # (H, V)
    slab = slab.at[R_MISC, C_BLIN:C_BLIN + VOCAB].set(params["lin_b"])  # (V,)
    return slab


@jax.jit
def _forward_jit(embed_w, wslab, captions, last_hidden, encoder_hiddens):
    # Glue: embedding lookup + prepend last_hidden (torch.cat along seq dim).
    emb = embed_w[captions[0]]                                  # (S, E)
    emb_seq = jnp.concatenate([last_hidden, emb], axis=0)       # (T, E)
    enc = encoder_hiddens[:, 0, :]                              # (SEQ, H)
    encT = enc.T                                                # (H, SEQ)

    # Pack all runtime tensors into one (32, 128) slab -> a single input DMA.
    rt = jnp.zeros((RT_ROWS, LANES), jnp.float32)
    rt = rt.at[0:T, C_EMB:C_EMB + EMBED].set(emb_seq)
    rt = rt.at[0:SEQ_LEN, C_ENC:C_ENC + HIDDEN].set(enc)
    rt = rt.at[0:HIDDEN, C_ENCT:C_ENCT + SEQ_LEN].set(encT)

    packed = run_fused_decoder(wslab, rt)                       # (8, 128)

    rnn_output = packed[0:T, C_OUT_RNN:C_OUT_RNN + VOCAB]       # (T, V)
    attn_weights = packed[0:1, C_OUT_ATTN:C_OUT_ATTN + SEQ_LEN].reshape(
        1, 1, SEQ_LEN)                                          # .view(1, 1, -1)
    context = packed[0:1, C_OUT_CTX:C_OUT_CTX + HIDDEN]         # (1, H)

    # TODO(synk): self.out(torch.cat((rnn_output, context), 1)) skipped: self.out
    # is undefined in the module and the cat is shape-inconsistent for T > 1.
    return rnn_output, attn_weights, context


def attn_decoder_forward(params, wslab, captions, last_hidden, encoder_hiddens,
                         lengths):
    # pack_padded_sequence with batch=1 and lengths=[T] is the identity ordering.
    # (check kept outside jit so lengths never becomes a traced value)
    assert int(lengths[0]) == T
    return _forward_jit(params["embed_w"], wslab, captions, last_hidden,
                        encoder_hiddens)


# ----------------------------- pure-JAX reference ----------------------------
def reference_forward(params, captions, last_hidden, encoder_hiddens):
    H = HIDDEN
    emb_seq = jnp.concatenate([last_hidden, params["embed_w"][captions[0]]], 0)
    layers = [(params["wih0"], params["whh0"], params["bih0"], params["bhh0"]),
              (params["wih1"], params["whh1"], params["bih1"], params["bhh1"])]
    hs = [jnp.zeros((H,), jnp.float32) for _ in range(NUM_LAYERS)]
    cs = [jnp.zeros((H,), jnp.float32) for _ in range(NUM_LAYERS)]
    outs = []
    for t in range(T):
        x = emb_seq[t]
        for l, (wih, whh, bih, bhh) in enumerate(layers):
            gates = wih @ x + bih + whh @ hs[l] + bhh
            i = jax.nn.sigmoid(gates[0 * H:1 * H])
            f = jax.nn.sigmoid(gates[1 * H:2 * H])
            g = jnp.tanh(gates[2 * H:3 * H])
            o = jax.nn.sigmoid(gates[3 * H:4 * H])
            cs[l] = f * cs[l] + i * g
            hs[l] = o * jnp.tanh(cs[l])
            x = hs[l]
        outs.append(x)
    hiddens = jnp.stack(outs)                                        # (T, H)
    rnn_output = hiddens @ params["lin_w"].T + params["lin_b"]       # (T, V)
    hidden_flat = rnn_output.reshape(-1)                             # (H,)
    enc = encoder_hiddens[:, 0, :]                                   # (SEQ, H)
    scores = (enc @ params["attn_w"].T + params["attn_b"]) @ hidden_flat
    w = jax.nn.softmax(scores)
    context = (w @ enc).reshape(1, H)
    return rnn_output, w.reshape(1, 1, -1), context


# ------------------------------------ main ------------------------------------
if __name__ == "__main__":
    params = make_params()
    wslab = prepare_kernel_weights(params)          # one-time packed weight slab

    key = jax.random.PRNGKey(0)
    k1, k2, k3 = jax.random.split(key, 3)
    captions = jax.random.randint(k1, (1, S), 0, VOCAB, dtype=jnp.int32)
    last_hidden = jax.random.normal(k2, (1, EMBED), jnp.float32)
    encoder_hiddens = jax.random.normal(k3, (SEQ_LEN, 1, HIDDEN), jnp.float32)
    lengths = [T]

    rnn_out, attn_w, ctx = attn_decoder_forward(
        params, wslab, captions, last_hidden, encoder_hiddens, lengths)
    jax.block_until_ready((rnn_out, attn_w, ctx))

    rnn_ref, attn_ref, ctx_ref = reference_forward(
        params, captions, last_hidden, encoder_hiddens)

    assert jnp.allclose(rnn_out, rnn_ref, rtol=1e-5, atol=1e-5)
    assert jnp.allclose(attn_w, attn_ref, rtol=1e-5, atol=1e-5)
    assert jnp.allclose(ctx, ctx_ref, rtol=1e-5, atol=1e-5)

    print("KERNEL_OK")
</pallas_src>

<mosaic_0001>
module attributes {stable_mosaic.version = 11 : i64} {
  func.func @fused_decoder_kernel(%arg0: memref<152x128xf32, #tpu.memory_space<vmem>>, %arg1: memref<32x128xf32, #tpu.memory_space<vmem>>, %arg2: memref<8x128xf32, #tpu.memory_space<vmem>>) attributes {dimension_semantics = [], scalar_prefetch = 0 : i64, scratch_operands = 0 : i64, tpu.core_type = #tpu.core_type<tc>} {
    %cst = arith.constant 0.000000e+00 : f32
    %0 = vector.broadcast %cst : f32 to vector<8x128xf32>
    %c0 = arith.constant 0 : index
    %c0_0 = arith.constant 0 : index
    %1 = vector.load %arg2[%c0, %c0_0] : memref<8x128xf32, #tpu.memory_space<vmem>>, vector<8x128xf32>
    tpu.vector_store %arg2[%c0, %c0_0], %0 {strides = array<i32>} : memref<8x128xf32, #tpu.memory_space<vmem>>, vector<8x128xf32>,
    %c0_1 = arith.constant 0 : index
    %c0_2 = arith.constant 0 : index
    %2 = vector.load %arg0[%c0_1, %c0_2] : memref<152x128xf32, #tpu.memory_space<vmem>>, vector<16x128xf32>
    %c16 = arith.constant 16 : index
    %c0_3 = arith.constant 0 : index
    %3 = vector.load %arg0[%c16, %c0_3] : memref<152x128xf32, #tpu.memory_space<vmem>>, vector<32x128xf32>
    %c48 = arith.constant 48 : index
    %c0_4 = arith.constant 0 : index
    %4 = vector.load %arg0[%c48, %c0_4] : memref<152x128xf32, #tpu.memory_space<vmem>>, vector<32x128xf32>
    %c80 = arith.constant 80 : index
    %c0_5 = arith.constant 0 : index
    %5 = vector.load %arg0[%c80, %c0_5] : memref<152x128xf32, #tpu.memory_space<vmem>>, vector<32x128xf32>
    %c112 = arith.constant 112 : index
    %c0_6 = arith.constant 0 : index
    %6 = vector.load %arg0[%c112, %c0_6] : memref<152x128xf32, #tpu.memory_space<vmem>>, vector<1x128xf32>
    %c113 = arith.constant 113 : index
    %c0_7 = arith.constant 0 : index
    %7 = vector.load %arg0[%c113, %c0_7] : memref<152x128xf32, #tpu.memory_space<vmem>>, vector<1x128xf32>
    %c120 = arith.constant 120 : index
    %c0_8 = arith.constant 0 : index
    %8 = vector.load %arg0[%c120, %c0_8] : memref<152x128xf32, #tpu.memory_space<vmem>>, vector<32x32xf32>
    %c120_9 = arith.constant 120 : index
    %c32 = arith.constant 32 : index
    %9 = vector.load %arg0[%c120_9, %c32] : memref<152x128xf32, #tpu.memory_space<vmem>>, vector<32x8xf32>
    %c120_10 = arith.constant 120 : index
    %c40 = arith.constant 40 : index
    %10 = vector.load %arg0[%c120_10, %c40] : memref<152x128xf32, #tpu.memory_space<vmem>>, vector<32x4xf32>
    %c120_11 = arith.constant 120 : index
    %c44 = arith.constant 44 : index
    %11 = vector.load %arg0[%c120_11, %c44] : memref<152x128xf32, #tpu.memory_space<vmem>>, vector<1x4xf32>
    %c0_12 = arith.constant 0 : index
    %c0_13 = arith.constant 0 : index
    %12 = vector.load %arg1[%c0_12, %c0_13] : memref<32x128xf32, #tpu.memory_space<vmem>>, vector<8x16xf32>
    %c0_14 = arith.constant 0 : index
    %c32_15 = arith.constant 32 : index
    %13 = vector.load %arg1[%c0_14, %c32_15] : memref<32x128xf32, #tpu.memory_space<vmem>>, vector<8x32xf32>
    %c0_16 = arith.constant 0 : index
    %c64 = arith.constant 64 : index
    %14 = vector.load %arg1[%c0_16, %c64] : memref<32x128xf32, #tpu.memory_space<vmem>>, vector<32x8xf32>
    %cst_17 = arith.constant dense<0.000000e+00> : vector<32x8xf32>
    %15 = tpu.matmul %8, %14, %cst_17 {dimension_numbers = #tpu.dot_dimension_numbers<[1], [0], [0], [1], [0, 0, 1, 1], [], []>} : vector<32x32xf32>, vector<32x8xf32>, vector<32x8xf32> -> vector<32x8xf32>
    %16 = arith.addf %15, %9 : vector<32x8xf32>
    %cst_18 = arith.constant dense<0.000000e+00> : vector<8x128xf32>
    %17 = tpu.matmul %12, %2, %cst_18 {dimension_numbers = #tpu.dot_dimension_numbers<[1], [0], [0], [1], [0, 0, 1, 1], [], []>} : vector<8x16xf32>, vector<16x128xf32>, vector<8x128xf32> -> vector<8x128xf32>
    %18 = vector.broadcast %6 : vector<1x128xf32> to vector<8x128xf32>
    %19 = arith.addf %17, %18 : vector<8x128xf32>
    %cst_19 = arith.constant 0.000000e+00 : f32
    %20 = vector.broadcast %cst_19 : f32 to vector<1x32xf32>
    %cst_20 = arith.constant 0.000000e+00 : f32
    %21 = vector.broadcast %cst_20 : f32 to vector<1x8xf32>
    %cst_21 = arith.constant dense<0.000000e+00> : vector<1x128xf32>
    %22 = tpu.matmul %20, %5, %cst_21 {dimension_numbers = #tpu.dot_dimension_numbers<[1], [0], [0], [1], [0, 0, 1, 1], [], []>} : vector<1x32xf32>, vector<32x128xf32>, vector<1x128xf32> -> vector<1x128xf32>
    %23 = vector.extract_strided_slice %19 {offsets = [0, 0], sizes = [1, 128], strides = [1, 1]} : vector<8x128xf32> to vector<1x128xf32>
    %cst_22 = arith.constant dense<0.000000e+00> : vector<1x128xf32>
    %24 = tpu.matmul %20, %3, %cst_22 {dimension_numbers = #tpu.dot_dimension_numbers<[1], [0], [0], [1], [0, 0, 1, 1], [], []>} : vector<1x32xf32>, vector<32x128xf32>, vector<1x128xf32> -> vector<1x128xf32>
    %25 = arith.addf %23, %24 : vector<1x128xf32>
    %26 = arith.negf %25 : vector<1x128xf32>
    %27 = math.exp %26 : vector<1x128xf32>
    %cst_23 = arith.constant 1.000000e+00 : f32
    %28 = vector.broadcast %cst_23 : f32 to vector<1x128xf32>
    %29 = arith.addf %28, %27 : vector<1x128xf32>
    %30 = arith.divf %28, %29 : vector<1x128xf32>
    %31 = math.tanh %25 : vector<1x128xf32>
    %32 = vector.extract_strided_slice %30 {offsets = [0, 0], sizes = [1, 32], strides = [1, 1]} : vector<1x128xf32> to vector<1x32xf32>
    %33 = vector.extract_strided_slice %30 {offsets = [0, 32], sizes = [1, 32], strides = [1, 1]} : vector<1x128xf32> to vector<1x32xf32>
    %34 = vector.extract_strided_slice %31 {offsets = [0, 64], sizes = [1, 32], strides = [1, 1]} : vector<1x128xf32> to vector<1x32xf32>
    %35 = vector.extract_strided_slice %30 {offsets = [0, 96], sizes = [1, 32], strides = [1, 1]} : vector<1x128xf32> to vector<1x32xf32>
    %36 = arith.mulf %33, %20 : vector<1x32xf32>
    %37 = arith.mulf %32, %34 : vector<1x32xf32>
    %38 = arith.addf %36, %37 : vector<1x32xf32>
    %39 = math.tanh %38 : vector<1x32xf32>
    %40 = arith.mulf %35, %39 : vector<1x32xf32>
    %cst_24 = arith.constant dense<0.000000e+00> : vector<1x128xf32>
    %41 = tpu.matmul %40, %4, %cst_24 {dimension_numbers = #tpu.dot_dimension_numbers<[1], [0], [0], [1], [0, 0, 1, 1], [], []>} : vector<1x32xf32>, vector<32x128xf32>, vector<1x128xf32> -> vector<1x128xf32>
    %42 = arith.addf %41, %22 : vector<1x128xf32>
    %43 = arith.addf %42, %7 : vector<1x128xf32>
    %44 = arith.negf %43 : vector<1x128xf32>
    %45 = math.exp %44 : vector<1x128xf32>
    %cst_25 = arith.constant 1.000000e+00 : f32
    %46 = vector.broadcast %cst_25 : f32 to vector<1x128xf32>
    %47 = arith.addf %46, %45 : vector<1x128xf32>
    %48 = arith.divf %46, %47 : vector<1x128xf32>
    %49 = math.tanh %43 : vector<1x128xf32>
    %50 = vector.extract_strided_slice %48 {offsets = [0, 0], sizes = [1, 32], strides = [1, 1]} : vector<1x128xf32> to vector<1x32xf32>
    %51 = vector.extract_strided_slice %48 {offsets = [0, 32], sizes = [1, 32], strides = [1, 1]} : vector<1x128xf32> to vector<1x32xf32>
    %52 = vector.extract_strided_slice %49 {offsets = [0, 64], sizes = [1, 32], strides = [1, 1]} : vector<1x128xf32> to vector<1x32xf32>
    %53 = vector.extract_strided_slice %48 {offsets = [0, 96], sizes = [1, 32], strides = [1, 1]} : vector<1x128xf32> to vector<1x32xf32>
    %54 = arith.mulf %51, %20 : vector<1x32xf32>
    %55 = arith.mulf %50, %52 : vector<1x32xf32>
    %56 = arith.addf %54, %55 : vector<1x32xf32>
    %57 = math.tanh %56 : vector<1x32xf32>
    %58 = arith.mulf %53, %57 : vector<1x32xf32>
    %cst_26 = arith.constant dense<0.000000e+00> : vector<1x4xf32>
    %59 = tpu.matmul %58, %10, %cst_26 {dimension_numbers = #tpu.dot_dimension_numbers<[1], [0], [0], [1], [0, 0, 1, 1], [], []>} : vector<1x32xf32>, vector<32x4xf32>, vector<1x4xf32> -> vector<1x4xf32>
    %60 = arith.addf %59, %11 : vector<1x4xf32>
    %c0_27 = arith.constant 0 : index
    %c0_28 = arith.constant 0 : index
    %61 = vector.load %arg2[%c0_27, %c0_28] : memref<8x128xf32, #tpu.memory_space<vmem>>, vector<1x4xf32>
    tpu.vector_store %arg2[%c0_27, %c0_28], %60 {strides = array<i32>} : memref<8x128xf32, #tpu.memory_space<vmem>>, vector<1x4xf32>,
    %62 = vector.extract_strided_slice %16 {offsets = [0, 0], sizes = [4, 8], strides = [1, 1]} : vector<32x8xf32> to vector<4x8xf32>
    %cst_29 = arith.constant dense<0.000000e+00> : vector<1x8xf32>
    %63 = tpu.matmul %60, %62, %cst_29 {dimension_numbers = #tpu.dot_dimension_numbers<[1], [0], [0], [1], [0, 0, 1, 1], [], []>} : vector<1x4xf32>, vector<4x8xf32>, vector<1x8xf32> -> vector<1x8xf32>
    %64 = arith.addf %21, %63 : vector<1x8xf32>
    %cst_30 = arith.constant dense<0.000000e+00> : vector<1x128xf32>
    %65 = tpu.matmul %58, %5, %cst_30 {dimension_numbers = #tpu.dot_dimension_numbers<[1], [0], [0], [1], [0, 0, 1, 1], [], []>} : vector<1x32xf32>, vector<32x128xf32>, vector<1x128xf32> -> vector<1x128xf32>
    %66 = vector.extract_strided_slice %19 {offsets = [1, 0], sizes = [1, 128], strides = [1, 1]} : vector<8x128xf32> to vector<1x128xf32>
    %cst_31 = arith.constant dense<0.000000e+00> : vector<1x128xf32>
    %67 = tpu.matmul %40, %3, %cst_31 {dimension_numbers = #tpu.dot_dimension_numbers<[1], [0], [0], [1], [0, 0, 1, 1], [], []>} : vector<1x32xf32>, vector<32x128xf32>, vector<1x128xf32> -> vector<1x128xf32>
    %68 = arith.addf %66, %67 : vector<1x128xf32>
    %69 = arith.negf %68 : vector<1x128xf32>
    %70 = math.exp %69 : vector<1x128xf32>
    %cst_32 = arith.constant 1.000000e+00 : f32
    %71 = vector.broadcast %cst_32 : f32 to vector<1x128xf32>
    %72 = arith.addf %71, %70 : vector<1x128xf32>
    %73 = arith.divf %71, %72 : vector<1x128xf32>
    %74 = math.tanh %68 : vector<1x128xf32>
    %75 = vector.extract_strided_slice %73 {offsets = [0, 0], sizes = [1, 32], strides = [1, 1]} : vector<1x128xf32> to vector<1x32xf32>
    %76 = vector.extract_strided_slice %73 {offsets = [0, 32], sizes = [1, 32], strides = [1, 1]} : vector<1x128xf32> to vector<1x32xf32>
    %77 = vector.extract_strided_slice %74 {offsets = [0, 64], sizes = [1, 32], strides = [1, 1]} : vector<1x128xf32> to vector<1x32xf32>
    %78 = vector.extract_strided_slice %73 {offsets = [0, 96], sizes = [1, 32], strides = [1, 1]} : vector<1x128xf32> to vector<1x32xf32>
    %79 = arith.mulf %76, %38 : vector<1x32xf32>
    %80 = arith.mulf %75, %77 : vector<1x32xf32>
    %81 = arith.addf %79, %80 : vector<1x32xf32>
    %82 = math.tanh %81 : vector<1x32xf32>
    %83 = arith.mulf %78, %82 : vector<1x32xf32>
    %cst_33 = arith.constant dense<0.000000e+00> : vector<1x128xf32>
    %84 = tpu.matmul %83, %4, %cst_33 {dimension_numbers = #tpu.dot_dimension_numbers<[1], [0], [0], [1], [0, 0, 1, 1], [], []>} : vector<1x32xf32>, vector<32x128xf32>, vector<1x128xf32> -> vector<1x128xf32>
    %85 = arith.addf %84, %65 : vector<1x128xf32>
    %86 = arith.addf %85, %7 : vector<1x128xf32>
    %87 = arith.negf %86 : vector<1x128xf32>
    %88 = math.exp %87 : vector<1x128xf32>
    %cst_34 = arith.constant 1.000000e+00 : f32
    %89 = vector.broadcast %cst_34 : f32 to vector<1x128xf32>
    %90 = arith.addf %89, %88 : vector<1x128xf32>
    %91 = arith.divf %89, %90 : vector<1x128xf32>
    %92 = math.tanh %86 : vector<1x128xf32>
    %93 = vector.extract_strided_slice %91 {offsets = [0, 0], sizes = [1, 32], strides = [1, 1]} : vector<1x128xf32> to vector<1x32xf32>
    %94 = vector.extract_strided_slice %91 {offsets = [0, 32], sizes = [1, 32], strides = [1, 1]} : vector<1x128xf32> to vector<1x32xf32>
    %95 = vector.extract_strided_slice %92 {offsets = [0, 64], sizes = [1, 32], strides = [1, 1]} : vector<1x128xf32> to vector<1x32xf32>
    %96 = vector.extract_strided_slice %91 {offsets = [0, 96], sizes = [1, 32], strides = [1, 1]} : vector<1x128xf32> to vector<1x32xf32>
    %97 = arith.mulf %94, %56 : vector<1x32xf32>
    %98 = arith.mulf %93, %95 : vector<1x32xf32>
    %99 = arith.addf %97, %98 : vector<1x32xf32>
    %100 = math.tanh %99 : vector<1x32xf32>
    %101 = arith.mulf %96, %100 : vector<1x32xf32>
    %cst_35 = arith.constant dense<0.000000e+00> : vector<1x4xf32>
    %102 = tpu.matmul %101, %10, %cst_35 {dimension_numbers = #tpu.dot_dimension_numbers<[1], [0], [0], [1], [0, 0, 1, 1], [], []>} : vector<1x32xf32>, vector<32x4xf32>, vector<1x4xf32> -> vector<1x4xf32>
    %103 = arith.addf %102, %11 : vector<1x4xf32>
    %c1 = arith.constant 1 : index
    %c0_36 = arith.constant 0 : index
    %104 = vector.load %arg2[%c1, %c0_36] : memref<8x128xf32, #tpu.memory_space<vmem>>, vector<1x4xf32>
    tpu.vector_store %arg2[%c1, %c0_36], %103 {strides = array<i32>} : memref<8x128xf32, #tpu.memory_space<vmem>>, vector<1x4xf32>,
    %105 = vector.extract_strided_slice %16 {offsets = [4, 0], sizes = [4, 8], strides = [1, 1]} : vector<32x8xf32> to vector<4x8xf32>
    %cst_37 = arith.constant dense<0.000000e+00> : vector<1x8xf32>
    %106 = tpu.matmul %103, %105, %cst_37 {dimension_numbers = #tpu.dot_dimension_numbers<[1], [0], [0], [1], [0, 0, 1, 1], [], []>} : vector<1x4xf32>, vector<4x8xf32>, vector<1x8xf32> -> vector<1x8xf32>
    %107 = arith.addf %64, %106 : vector<1x8xf32>
    %cst_38 = arith.constant dense<0.000000e+00> : vector<1x128xf32>
    %108 = tpu.matmul %101, %5, %cst_38 {dimension_numbers = #tpu.dot_dimension_numbers<[1], [0], [0], [1], [0, 0, 1, 1], [], []>} : vector<1x32xf32>, vector<32x128xf32>, vector<1x128xf32> -> vector<1x128xf32>
    %109 = vector.extract_strided_slice %19 {offsets = [2, 0], sizes = [1, 128], strides = [1, 1]} : vector<8x128xf32> to vector<1x128xf32>
    %cst_39 = arith.constant dense<0.000000e+00> : vector<1x128xf32>
    %110 = tpu.matmul %83, %3, %cst_39 {dimension_numbers = #tpu.dot_dimension_numbers<[1], [0], [0], [1], [0, 0, 1, 1], [], []>} : vector<1x32xf32>, vector<32x128xf32>, vector<1x128xf32> -> vector<1x128xf32>
    %111 = arith.addf %109, %110 : vector<1x128xf32>
    %112 = arith.negf %111 : vector<1x128xf32>
    %113 = math.exp %112 : vector<1x128xf32>
    %cst_40 = arith.constant 1.000000e+00 : f32
    %114 = vector.broadcast %cst_40 : f32 to vector<1x128xf32>
    %115 = arith.addf %114, %113 : vector<1x128xf32>
    %116 = arith.divf %114, %115 : vector<1x128xf32>
    %117 = math.tanh %111 : vector<1x128xf32>
    %118 = vector.extract_strided_slice %116 {offsets = [0, 0], sizes = [1, 32], strides = [1, 1]} : vector<1x128xf32> to vector<1x32xf32>
    %119 = vector.extract_strided_slice %116 {offsets = [0, 32], sizes = [1, 32], strides = [1, 1]} : vector<1x128xf32> to vector<1x32xf32>
    %120 = vector.extract_strided_slice %117 {offsets = [0, 64], sizes = [1, 32], strides = [1, 1]} : vector<1x128xf32> to vector<1x32xf32>
    %121 = vector.extract_strided_slice %116 {offsets = [0, 96], sizes = [1, 32], strides = [1, 1]} : vector<1x128xf32> to vector<1x32xf32>
    %122 = arith.mulf %119, %81 : vector<1x32xf32>
    %123 = arith.mulf %118, %120 : vector<1x32xf32>
    %124 = arith.addf %122, %123 : vector<1x32xf32>
    %125 = math.tanh %124 : vector<1x32xf32>
    %126 = arith.mulf %121, %125 : vector<1x32xf32>
    %cst_41 = arith.constant dense<0.000000e+00> : vector<1x128xf32>
    %127 = tpu.matmul %126, %4, %cst_41 {dimension_numbers = #tpu.dot_dimension_numbers<[1], [0], [0], [1], [0, 0, 1, 1], [], []>} : vector<1x32xf32>, vector<32x128xf32>, vector<1x128xf32> -> vector<1x128xf32>
    %128 = arith.addf %127, %108 : vector<1x128xf32>
    %129 = arith.addf %128, %7 : vector<1x128xf32>
    %130 = arith.negf %129 : vector<1x128xf32>
    %131 = math.exp %130 : vector<1x128xf32>
    %cst_42 = arith.constant 1.000000e+00 : f32
    %132 = vector.broadcast %cst_42 : f32 to vector<1x128xf32>
    %133 = arith.addf %132, %131 : vector<1x128xf32>
    %134 = arith.divf %132, %133 : vector<1x128xf32>
    %135 = math.tanh %129 : vector<1x128xf32>
    %136 = vector.extract_strided_slice %134 {offsets = [0, 0], sizes = [1, 32], strides = [1, 1]} : vector<1x128xf32> to vector<1x32xf32>
    %137 = vector.extract_strided_slice %134 {offsets = [0, 32], sizes = [1, 32], strides = [1, 1]} : vector<1x128xf32> to vector<1x32xf32>
    %138 = vector.extract_strided_slice %135 {offsets = [0, 64], sizes = [1, 32], strides = [1, 1]} : vector<1x128xf32> to vector<1x32xf32>
    %139 = vector.extract_strided_slice %134 {offsets = [0, 96], sizes = [1, 32], strides = [1, 1]} : vector<1x128xf32> to vector<1x32xf32>
    %140 = arith.mulf %137, %99 : vector<1x32xf32>
    %141 = arith.mulf %136, %138 : vector<1x32xf32>
    %142 = arith.addf %140, %141 : vector<1x32xf32>
    %143 = math.tanh %142 : vector<1x32xf32>
    %144 = arith.mulf %139, %143 : vector<1x32xf32>
    %cst_43 = arith.constant dense<0.000000e+00> : vector<1x4xf32>
    %145 = tpu.matmul %144, %10, %cst_43 {dimension_numbers = #tpu.dot_dimension_numbers<[1], [0], [0], [1], [0, 0, 1, 1], [], []>} : vector<1x32xf32>, vector<32x4xf32>, vector<1x4xf32> -> vector<1x4xf32>
    %146 = arith.addf %145, %11 : vector<1x4xf32>
    %c2 = arith.constant 2 : index
    %c0_44 = arith.constant 0 : index
    %147 = vector.load %arg2[%c2, %c0_44] : memref<8x128xf32, #tpu.memory_space<vmem>>, vector<1x4xf32>
    tpu.vector_store %arg2[%c2, %c0_44], %146 {strides = array<i32>} : memref<8x128xf32, #tpu.memory_space<vmem>>, vector<1x4xf32>,
    %148 = vector.extract_strided_slice %16 {offsets = [8, 0], sizes = [4, 8], strides = [1, 1]} : vector<32x8xf32> to vector<4x8xf32>
    %cst_45 = arith.constant dense<0.000000e+00> : vector<1x8xf32>
    %149 = tpu.matmul %146, %148, %cst_45 {dimension_numbers = #tpu.dot_dimension_numbers<[1], [0], [0], [1], [0, 0, 1, 1], [], []>} : vector<1x4xf32>, vector<4x8xf32>, vector<1x8xf32> -> vector<1x8xf32>
    %150 = arith.addf %107, %149 : vector<1x8xf32>
    %cst_46 = arith.constant dense<0.000000e+00> : vector<1x128xf32>
    %151 = tpu.matmul %144, %5, %cst_46 {dimension_numbers = #tpu.dot_dimension_numbers<[1], [0], [0], [1], [0, 0, 1, 1], [], []>} : vector<1x32xf32>, vector<32x128xf32>, vector<1x128xf32> -> vector<1x128xf32>
    %152 = vector.extract_strided_slice %19 {offsets = [3, 0], sizes = [1, 128], strides = [1, 1]} : vector<8x128xf32> to vector<1x128xf32>
    %cst_47 = arith.constant dense<0.000000e+00> : vector<1x128xf32>
    %153 = tpu.matmul %126, %3, %cst_47 {dimension_numbers = #tpu.dot_dimension_numbers<[1], [0], [0], [1], [0, 0, 1, 1], [], []>} : vector<1x32xf32>, vector<32x128xf32>, vector<1x128xf32> -> vector<1x128xf32>
    %154 = arith.addf %152, %153 : vector<1x128xf32>
    %155 = arith.negf %154 : vector<1x128xf32>
    %156 = math.exp %155 : vector<1x128xf32>
    %cst_48 = arith.constant 1.000000e+00 : f32
    %157 = vector.broadcast %cst_48 : f32 to vector<1x128xf32>
    %158 = arith.addf %157, %156 : vector<1x128xf32>
    %159 = arith.divf %157, %158 : vector<1x128xf32>
    %160 = math.tanh %154 : vector<1x128xf32>
    %161 = vector.extract_strided_slice %159 {offsets = [0, 0], sizes = [1, 32], strides = [1, 1]} : vector<1x128xf32> to vector<1x32xf32>
    %162 = vector.extract_strided_slice %159 {offsets = [0, 32], sizes = [1, 32], strides = [1, 1]} : vector<1x128xf32> to vector<1x32xf32>
    %163 = vector.extract_strided_slice %160 {offsets = [0, 64], sizes = [1, 32], strides = [1, 1]} : vector<1x128xf32> to vector<1x32xf32>
    %164 = vector.extract_strided_slice %159 {offsets = [0, 96], sizes = [1, 32], strides = [1, 1]} : vector<1x128xf32> to vector<1x32xf32>
    %165 = arith.mulf %162, %124 : vector<1x32xf32>
    %166 = arith.mulf %161, %163 : vector<1x32xf32>
    %167 = arith.addf %165, %166 : vector<1x32xf32>
    %168 = math.tanh %167 : vector<1x32xf32>
    %169 = arith.mulf %164, %168 : vector<1x32xf32>
    %cst_49 = arith.constant dense<0.000000e+00> : vector<1x128xf32>
    %170 = tpu.matmul %169, %4, %cst_49 {dimension_numbers = #tpu.dot_dimension_numbers<[1], [0], [0], [1], [0, 0, 1, 1], [], []>} : vector<1x32xf32>, vector<32x128xf32>, vector<1x128xf32> -> vector<1x128xf32>
    %171 = arith.addf %170, %151 : vector<1x128xf32>
    %172 = arith.addf %171, %7 : vector<1x128xf32>
    %173 = arith.negf %172 : vector<1x128xf32>
    %174 = math.exp %173 : vector<1x128xf32>
    %cst_50 = arith.constant 1.000000e+00 : f32
    %175 = vector.broadcast %cst_50 : f32 to vector<1x128xf32>
    %176 = arith.addf %175, %174 : vector<1x128xf32>
    %177 = arith.divf %175, %176 : vector<1x128xf32>
    %178 = math.tanh %172 : vector<1x128xf32>
    %179 = vector.extract_strided_slice %177 {offsets = [0, 0], sizes = [1, 32], strides = [1, 1]} : vector<1x128xf32> to vector<1x32xf32>
    %180 = vector.extract_strided_slice %177 {offsets = [0, 32], sizes = [1, 32], strides = [1, 1]} : vector<1x128xf32> to vector<1x32xf32>
    %181 = vector.extract_strided_slice %178 {offsets = [0, 64], sizes = [1, 32], strides = [1, 1]} : vector<1x128xf32> to vector<1x32xf32>
    %182 = vector.extract_strided_slice %177 {offsets = [0, 96], sizes = [1, 32], strides = [1, 1]} : vector<1x128xf32> to vector<1x32xf32>
    %183 = arith.mulf %180, %142 : vector<1x32xf32>
    %184 = arith.mulf %179, %181 : vector<1x32xf32>
    %185 = arith.addf %183, %184 : vector<1x32xf32>
    %186 = math.tanh %185 : vector<1x32xf32>
    %187 = arith.mulf %182, %186 : vector<1x32xf32>
    %cst_51 = arith.constant dense<0.000000e+00> : vector<1x4xf32>
    %188 = tpu.matmul %187, %10, %cst_51 {dimension_numbers = #tpu.dot_dimension_numbers<[1], [0], [0], [1], [0, 0, 1, 1], [], []>} : vector<1x32xf32>, vector<32x4xf32>, vector<1x4xf32> -> vector<1x4xf32>
    %189 = arith.addf %188, %11 : vector<1x4xf32>
    %c3 = arith.constant 3 : index
    %c0_52 = arith.constant 0 : index
    %190 = vector.load %arg2[%c3, %c0_52] : memref<8x128xf32, #tpu.memory_space<vmem>>, vector<1x4xf32>
    tpu.vector_store %arg2[%c3, %c0_52], %189 {strides = array<i32>} : memref<8x128xf32, #tpu.memory_space<vmem>>, vector<1x4xf32>,
    %191 = vector.extract_strided_slice %16 {offsets = [12, 0], sizes = [4, 8], strides = [1, 1]} : vector<32x8xf32> to vector<4x8xf32>
    %cst_53 = arith.constant dense<0.000000e+00> : vector<1x8xf32>
    %192 = tpu.matmul %189, %191, %cst_53 {dimension_numbers = #tpu.dot_dimension_numbers<[1], [0], [0], [1], [0, 0, 1, 1], [], []>} : vector<1x4xf32>, vector<4x8xf32>, vector<1x8xf32> -> vector<1x8xf32>
    %193 = arith.addf %150, %192 : vector<1x8xf32>
    %cst_54 = arith.constant dense<0.000000e+00> : vector<1x128xf32>
    %194 = tpu.matmul %187, %5, %cst_54 {dimension_numbers = #tpu.dot_dimension_numbers<[1], [0], [0], [1], [0, 0, 1, 1], [], []>} : vector<1x32xf32>, vector<32x128xf32>, vector<1x128xf32> -> vector<1x128xf32>
    %195 = vector.extract_strided_slice %19 {offsets = [4, 0], sizes = [1, 128], strides = [1, 1]} : vector<8x128xf32> to vector<1x128xf32>
    %cst_55 = arith.constant dense<0.000000e+00> : vector<1x128xf32>
    %196 = tpu.matmul %169, %3, %cst_55 {dimension_numbers = #tpu.dot_dimension_numbers<[1], [0], [0], [1], [0, 0, 1, 1], [], []>} : vector<1x32xf32>, vector<32x128xf32>, vector<1x128xf32> -> vector<1x128xf32>
    %197 = arith.addf %195, %196 : vector<1x128xf32>
    %198 = arith.negf %197 : vector<1x128xf32>
    %199 = math.exp %198 : vector<1x128xf32>
    %cst_56 = arith.constant 1.000000e+00 : f32
    %200 = vector.broadcast %cst_56 : f32 to vector<1x128xf32>
    %201 = arith.addf %200, %199 : vector<1x128xf32>
    %202 = arith.divf %200, %201 : vector<1x128xf32>
    %203 = math.tanh %197 : vector<1x128xf32>
    %204 = vector.extract_strided_slice %202 {offsets = [0, 0], sizes = [1, 32], strides = [1, 1]} : vector<1x128xf32> to vector<1x32xf32>
    %205 = vector.extract_strided_slice %202 {offsets = [0, 32], sizes = [1, 32], strides = [1, 1]} : vector<1x128xf32> to vector<1x32xf32>
    %206 = vector.extract_strided_slice %203 {offsets = [0, 64], sizes = [1, 32], strides = [1, 1]} : vector<1x128xf32> to vector<1x32xf32>
    %207 = vector.extract_strided_slice %202 {offsets = [0, 96], sizes = [1, 32], strides = [1, 1]} : vector<1x128xf32> to vector<1x32xf32>
    %208 = arith.mulf %205, %167 : vector<1x32xf32>
    %209 = arith.mulf %204, %206 : vector<1x32xf32>
    %210 = arith.addf %208, %209 : vector<1x32xf32>
    %211 = math.tanh %210 : vector<1x32xf32>
    %212 = arith.mulf %207, %211 : vector<1x32xf32>
    %cst_57 = arith.constant dense<0.000000e+00> : vector<1x128xf32>
    %213 = tpu.matmul %212, %4, %cst_57 {dimension_numbers = #tpu.dot_dimension_numbers<[1], [0], [0], [1], [0, 0, 1, 1], [], []>} : vector<1x32xf32>, vector<32x128xf32>, vector<1x128xf32> -> vector<1x128xf32>
    %214 = arith.addf %213, %194 : vector<1x128xf32>
    %215 = arith.addf %214, %7 : vector<1x128xf32>
    %216 = arith.negf %215 : vector<1x128xf32>
    %217 = math.exp %216 : vector<1x128xf32>
    %cst_58 = arith.constant 1.000000e+00 : f32
    %218 = vector.broadcast %cst_58 : f32 to vector<1x128xf32>
    %219 = arith.addf %218, %217 : vector<1x128xf32>
    %220 = arith.divf %218, %219 : vector<1x128xf32>
    %221 = math.tanh %215 : vector<1x128xf32>
    %222 = vector.extract_strided_slice %220 {offsets = [0, 0], sizes = [1, 32], strides = [1, 1]} : vector<1x128xf32> to vector<1x32xf32>
    %223 = vector.extract_strided_slice %220 {offsets = [0, 32], sizes = [1, 32], strides = [1, 1]} : vector<1x128xf32> to vector<1x32xf32>
    %224 = vector.extract_strided_slice %221 {offsets = [0, 64], sizes = [1, 32], strides = [1, 1]} : vector<1x128xf32> to vector<1x32xf32>
    %225 = vector.extract_strided_slice %220 {offsets = [0, 96], sizes = [1, 32], strides = [1, 1]} : vector<1x128xf32> to vector<1x32xf32>
    %226 = arith.mulf %223, %185 : vector<1x32xf32>
    %227 = arith.mulf %222, %224 : vector<1x32xf32>
    %228 = arith.addf %226, %227 : vector<1x32xf32>
    %229 = math.tanh %228 : vector<1x32xf32>
    %230 = arith.mulf %225, %229 : vector<1x32xf32>
    %cst_59 = arith.constant dense<0.000000e+00> : vector<1x4xf32>
    %231 = tpu.matmul %230, %10, %cst_59 {dimension_numbers = #tpu.dot_dimension_numbers<[1], [0], [0], [1], [0, 0, 1, 1], [], []>} : vector<1x32xf32>, vector<32x4xf32>, vector<1x4xf32> -> vector<1x4xf32>
    %232 = arith.addf %231, %11 : vector<1x4xf32>
    %c4 = arith.constant 4 : index
    %c0_60 = arith.constant 0 : index
    %233 = vector.load %arg2[%c4, %c0_60] : memref<8x128xf32, #tpu.memory_space<vmem>>, vector<1x4xf32>
    tpu.vector_store %arg2[%c4, %c0_60], %232 {strides = array<i32>} : memref<8x128xf32, #tpu.memory_space<vmem>>, vector<1x4xf32>,
    %234 = vector.extract_strided_slice %16 {offsets = [16, 0], sizes = [4, 8], strides = [1, 1]} : vector<32x8xf32> to vector<4x8xf32>
    %cst_61 = arith.constant dense<0.000000e+00> : vector<1x8xf32>
    %235 = tpu.matmul %232, %234, %cst_61 {dimension_numbers = #tpu.dot_dimension_numbers<[1], [0], [0], [1], [0, 0, 1, 1], [], []>} : vector<1x4xf32>, vector<4x8xf32>, vector<1x8xf32> -> vector<1x8xf32>
    %236 = arith.addf %193, %235 : vector<1x8xf32>
    %cst_62 = arith.constant dense<0.000000e+00> : vector<1x128xf32>
    %237 = tpu.matmul %230, %5, %cst_62 {dimension_numbers = #tpu.dot_dimension_numbers<[1], [0], [0], [1], [0, 0, 1, 1], [], []>} : vector<1x32xf32>, vector<32x128xf32>, vector<1x128xf32> -> vector<1x128xf32>
    %238 = vector.extract_strided_slice %19 {offsets = [5, 0], sizes = [1, 128], strides = [1, 1]} : vector<8x128xf32> to vector<1x128xf32>
    %cst_63 = arith.constant dense<0.000000e+00> : vector<1x128xf32>
    %239 = tpu.matmul %212, %3, %cst_63 {dimension_numbers = #tpu.dot_dimension_numbers<[1], [0], [0], [1], [0, 0, 1, 1], [], []>} : vector<1x32xf32>, vector<32x128xf32>, vector<1x128xf32> -> vector<1x128xf32>
    %240 = arith.addf %238, %239 : vector<1x128xf32>
    %241 = arith.negf %240 : vector<1x128xf32>
    %242 = math.exp %241 : vector<1x128xf32>
    %cst_64 = arith.constant 1.000000e+00 : f32
    %243 = vector.broadcast %cst_64 : f32 to vector<1x128xf32>
    %244 = arith.addf %243, %242 : vector<1x128xf32>
    %245 = arith.divf %243, %244 : vector<1x128xf32>
    %246 = math.tanh %240 : vector<1x128xf32>
    %247 = vector.extract_strided_slice %245 {offsets = [0, 0], sizes = [1, 32], strides = [1, 1]} : vector<1x128xf32> to vector<1x32xf32>
    %248 = vector.extract_strided_slice %245 {offsets = [0, 32], sizes = [1, 32], strides = [1, 1]} : vector<1x128xf32> to vector<1x32xf32>
    %249 = vector.extract_strided_slice %246 {offsets = [0, 64], sizes = [1, 32], strides = [1, 1]} : vector<1x128xf32> to vector<1x32xf32>
    %250 = vector.extract_strided_slice %245 {offsets = [0, 96], sizes = [1, 32], strides = [1, 1]} : vector<1x128xf32> to vector<1x32xf32>
    %251 = arith.mulf %248, %210 : vector<1x32xf32>
    %252 = arith.mulf %247, %249 : vector<1x32xf32>
    %253 = arith.addf %251, %252 : vector<1x32xf32>
    %254 = math.tanh %253 : vector<1x32xf32>
    %255 = arith.mulf %250, %254 : vector<1x32xf32>
    %cst_65 = arith.constant dense<0.000000e+00> : vector<1x128xf32>
    %256 = tpu.matmul %255, %4, %cst_65 {dimension_numbers = #tpu.dot_dimension_numbers<[1], [0], [0], [1], [0, 0, 1, 1], [], []>} : vector<1x32xf32>, vector<32x128xf32>, vector<1x128xf32> -> vector<1x128xf32>
    %257 = arith.addf %256, %237 : vector<1x128xf32>
    %258 = arith.addf %257, %7 : vector<1x128xf32>
    %259 = arith.negf %258 : vector<1x128xf32>
    %260 = math.exp %259 : vector<1x128xf32>
    %cst_66 = arith.constant 1.000000e+00 : f32
    %261 = vector.broadcast %cst_66 : f32 to vector<1x128xf32>
    %262 = arith.addf %261, %260 : vector<1x128xf32>
    %263 = arith.divf %261, %262 : vector<1x128xf32>
    %264 = math.tanh %258 : vector<1x128xf32>
    %265 = vector.extract_strided_slice %263 {offsets = [0, 0], sizes = [1, 32], strides = [1, 1]} : vector<1x128xf32> to vector<1x32xf32>
    %266 = vector.extract_strided_slice %263 {offsets = [0, 32], sizes = [1, 32], strides = [1, 1]} : vector<1x128xf32> to vector<1x32xf32>
    %267 = vector.extract_strided_slice %264 {offsets = [0, 64], sizes = [1, 32], strides = [1, 1]} : vector<1x128xf32> to vector<1x32xf32>
    %268 = vector.extract_strided_slice %263 {offsets = [0, 96], sizes = [1, 32], strides = [1, 1]} : vector<1x128xf32> to vector<1x32xf32>
    %269 = arith.mulf %266, %228 : vector<1x32xf32>
    %270 = arith.mulf %265, %267 : vector<1x32xf32>
    %271 = arith.addf %269, %270 : vector<1x32xf32>
    %272 = math.tanh %271 : vector<1x32xf32>
    %273 = arith.mulf %268, %272 : vector<1x32xf32>
    %cst_67 = arith.constant dense<0.000000e+00> : vector<1x4xf32>
    %274 = tpu.matmul %273, %10, %cst_67 {dimension_numbers = #tpu.dot_dimension_numbers<[1], [0], [0], [1], [0, 0, 1, 1], [], []>} : vector<1x32xf32>, vector<32x4xf32>, vector<1x4xf32> -> vector<1x4xf32>
    %275 = arith.addf %274, %11 : vector<1x4xf32>
    %c5 = arith.constant 5 : index
    %c0_68 = arith.constant 0 : index
    %276 = vector.load %arg2[%c5, %c0_68] : memref<8x128xf32, #tpu.memory_space<vmem>>, vector<1x4xf32>
    tpu.vector_store %arg2[%c5, %c0_68], %275 {strides = array<i32>} : memref<8x128xf32, #tpu.memory_space<vmem>>, vector<1x4xf32>,
    %277 = vector.extract_strided_slice %16 {offsets = [20, 0], sizes = [4, 8], strides = [1, 1]} : vector<32x8xf32> to vector<4x8xf32>
    %cst_69 = arith.constant dense<0.000000e+00> : vector<1x8xf32>
    %278 = tpu.matmul %275, %277, %cst_69 {dimension_numbers = #tpu.dot_dimension_numbers<[1], [0], [0], [1], [0, 0, 1, 1], [], []>} : vector<1x4xf32>, vector<4x8xf32>, vector<1x8xf32> -> vector<1x8xf32>
    %279 = arith.addf %236, %278 : vector<1x8xf32>
    %cst_70 = arith.constant dense<0.000000e+00> : vector<1x128xf32>
    %280 = tpu.matmul %273, %5, %cst_70 {dimension_numbers = #tpu.dot_dimension_numbers<[1], [0], [0], [1], [0, 0, 1, 1], [], []>} : vector<1x32xf32>, vector<32x128xf32>, vector<1x128xf32> -> vector<1x128xf32>
    %281 = vector.extract_strided_slice %19 {offsets = [6, 0], sizes = [1, 128], strides = [1, 1]} : vector<8x128xf32> to vector<1x128xf32>
    %cst_71 = arith.constant dense<0.000000e+00> : vector<1x128xf32>
    %282 = tpu.matmul %255, %3, %cst_71 {dimension_numbers = #tpu.dot_dimension_numbers<[1], [0], [0], [1], [0, 0, 1, 1], [], []>} : vector<1x32xf32>, vector<32x128xf32>, vector<1x128xf32> -> vector<1x128xf32>
    %283 = arith.addf %281, %282 : vector<1x128xf32>
    %284 = arith.negf %283 : vector<1x128xf32>
    %285 = math.exp %284 : vector<1x128xf32>
    %cst_72 = arith.constant 1.000000e+00 : f32
    %286 = vector.broadcast %cst_72 : f32 to vector<1x128xf32>
    %287 = arith.addf %286, %285 : vector<1x128xf32>
    %288 = arith.divf %286, %287 : vector<1x128xf32>
    %289 = math.tanh %283 : vector<1x128xf32>
    %290 = vector.extract_strided_slice %288 {offsets = [0, 0], sizes = [1, 32], strides = [1, 1]} : vector<1x128xf32> to vector<1x32xf32>
    %291 = vector.extract_strided_slice %288 {offsets = [0, 32], sizes = [1, 32], strides = [1, 1]} : vector<1x128xf32> to vector<1x32xf32>
    %292 = vector.extract_strided_slice %289 {offsets = [0, 64], sizes = [1, 32], strides = [1, 1]} : vector<1x128xf32> to vector<1x32xf32>
    %293 = vector.extract_strided_slice %288 {offsets = [0, 96], sizes = [1, 32], strides = [1, 1]} : vector<1x128xf32> to vector<1x32xf32>
    %294 = arith.mulf %291, %253 : vector<1x32xf32>
    %295 = arith.mulf %290, %292 : vector<1x32xf32>
    %296 = arith.addf %294, %295 : vector<1x32xf32>
    %297 = math.tanh %296 : vector<1x32xf32>
    %298 = arith.mulf %293, %297 : vector<1x32xf32>
    %cst_73 = arith.constant dense<0.000000e+00> : vector<1x128xf32>
    %299 = tpu.matmul %298, %4, %cst_73 {dimension_numbers = #tpu.dot_dimension_numbers<[1], [0], [0], [1], [0, 0, 1, 1], [], []>} : vector<1x32xf32>, vector<32x128xf32>, vector<1x128xf32> -> vector<1x128xf32>
    %300 = arith.addf %299, %280 : vector<1x128xf32>
    %301 = arith.addf %300, %7 : vector<1x128xf32>
    %302 = arith.negf %301 : vector<1x128xf32>
    %303 = math.exp %302 : vector<1x128xf32>
    %cst_74 = arith.constant 1.000000e+00 : f32
    %304 = vector.broadcast %cst_74 : f32 to vector<1x128xf32>
    %305 = arith.addf %304, %303 : vector<1x128xf32>
    %306 = arith.divf %304, %305 : vector<1x128xf32>
    %307 = math.tanh %301 : vector<1x128xf32>
    %308 = vector.extract_strided_slice %306 {offsets = [0, 0], sizes = [1, 32], strides = [1, 1]} : vector<1x128xf32> to vector<1x32xf32>
    %309 = vector.extract_strided_slice %306 {offsets = [0, 32], sizes = [1, 32], strides = [1, 1]} : vector<1x128xf32> to vector<1x32xf32>
    %310 = vector.extract_strided_slice %307 {offsets = [0, 64], sizes = [1, 32], strides = [1, 1]} : vector<1x128xf32> to vector<1x32xf32>
    %311 = vector.extract_strided_slice %306 {offsets = [0, 96], sizes = [1, 32], strides = [1, 1]} : vector<1x128xf32> to vector<1x32xf32>
    %312 = arith.mulf %309, %271 : vector<1x32xf32>
    %313 = arith.mulf %308, %310 : vector<1x32xf32>
    %314 = arith.addf %312, %313 : vector<1x32xf32>
    %315 = math.tanh %314 : vector<1x32xf32>
    %316 = arith.mulf %311, %315 : vector<1x32xf32>
    %cst_75 = arith.constant dense<0.000000e+00> : vector<1x4xf32>
    %317 = tpu.matmul %316, %10, %cst_75 {dimension_numbers = #tpu.dot_dimension_numbers<[1], [0], [0], [1], [0, 0, 1, 1], [], []>} : vector<1x32xf32>, vector<32x4xf32>, vector<1x4xf32> -> vector<1x4xf32>
    %318 = arith.addf %317, %11 : vector<1x4xf32>
    %c6 = arith.constant 6 : index
    %c0_76 = arith.constant 0 : index
    %319 = vector.load %arg2[%c6, %c0_76] : memref<8x128xf32, #tpu.memory_space<vmem>>, vector<1x4xf32>
    tpu.vector_store %arg2[%c6, %c0_76], %318 {strides = array<i32>} : memref<8x128xf32, #tpu.memory_space<vmem>>, vector<1x4xf32>,
    %320 = vector.extract_strided_slice %16 {offsets = [24, 0], sizes = [4, 8], strides = [1, 1]} : vector<32x8xf32> to vector<4x8xf32>
    %cst_77 = arith.constant dense<0.000000e+00> : vector<1x8xf32>
    %321 = tpu.matmul %318, %320, %cst_77 {dimension_numbers = #tpu.dot_dimension_numbers<[1], [0], [0], [1], [0, 0, 1, 1], [], []>} : vector<1x4xf32>, vector<4x8xf32>, vector<1x8xf32> -> vector<1x8xf32>
    %322 = arith.addf %279, %321 : vector<1x8xf32>
    %cst_78 = arith.constant dense<0.000000e+00> : vector<1x128xf32>
    %323 = tpu.matmul %316, %5, %cst_78 {dimension_numbers = #tpu.dot_dimension_numbers<[1], [0], [0], [1], [0, 0, 1, 1], [], []>} : vector<1x32xf32>, vector<32x128xf32>, vector<1x128xf32> -> vector<1x128xf32>
    %324 = vector.extract_strided_slice %19 {offsets = [7, 0], sizes = [1, 128], strides = [1, 1]} : vector<8x128xf32> to vector<1x128xf32>
    %cst_79 = arith.constant dense<0.000000e+00> : vector<1x128xf32>
    %325 = tpu.matmul %298, %3, %cst_79 {dimension_numbers = #tpu.dot_dimension_numbers<[1], [0], [0], [1], [0, 0, 1, 1], [], []>} : vector<1x32xf32>, vector<32x128xf32>, vector<1x128xf32> -> vector<1x128xf32>
    %326 = arith.addf %324, %325 : vector<1x128xf32>
    %327 = arith.negf %326 : vector<1x128xf32>
    %328 = math.exp %327 : vector<1x128xf32>
    %cst_80 = arith.constant 1.000000e+00 : f32
    %329 = vector.broadcast %cst_80 : f32 to vector<1x128xf32>
    %330 = arith.addf %329, %328 : vector<1x128xf32>
    %331 = arith.divf %329, %330 : vector<1x128xf32>
    %332 = math.tanh %326 : vector<1x128xf32>
    %333 = vector.extract_strided_slice %331 {offsets = [0, 0], sizes = [1, 32], strides = [1, 1]} : vector<1x128xf32> to vector<1x32xf32>
    %334 = vector.extract_strided_slice %331 {offsets = [0, 32], sizes = [1, 32], strides = [1, 1]} : vector<1x128xf32> to vector<1x32xf32>
    %335 = vector.extract_strided_slice %332 {offsets = [0, 64], sizes = [1, 32], strides = [1, 1]} : vector<1x128xf32> to vector<1x32xf32>
    %336 = vector.extract_strided_slice %331 {offsets = [0, 96], sizes = [1, 32], strides = [1, 1]} : vector<1x128xf32> to vector<1x32xf32>
    %337 = arith.mulf %334, %296 : vector<1x32xf32>
    %338 = arith.mulf %333, %335 : vector<1x32xf32>
    %339 = arith.addf %337, %338 : vector<1x32xf32>
    %340 = math.tanh %339 : vector<1x32xf32>
    %341 = arith.mulf %336, %340 : vector<1x32xf32>
    %cst_81 = arith.constant dense<0.000000e+00> : vector<1x128xf32>
    %342 = tpu.matmul %341, %4, %cst_81 {dimension_numbers = #tpu.dot_dimension_numbers<[1], [0], [0], [1], [0, 0, 1, 1], [], []>} : vector<1x32xf32>, vector<32x128xf32>, vector<1x128xf32> -> vector<1x128xf32>
    %343 = arith.addf %342, %323 : vector<1x128xf32>
    %344 = arith.addf %343, %7 : vector<1x128xf32>
    %345 = arith.negf %344 : vector<1x128xf32>
    %346 = math.exp %345 : vector<1x128xf32>
    %cst_82 = arith.constant 1.000000e+00 : f32
    %347 = vector.broadcast %cst_82 : f32 to vector<1x128xf32>
    %348 = arith.addf %347, %346 : vector<1x128xf32>
    %349 = arith.divf %347, %348 : vector<1x128xf32>
    %350 = math.tanh %344 : vector<1x128xf32>
    %351 = vector.extract_strided_slice %349 {offsets = [0, 0], sizes = [1, 32], strides = [1, 1]} : vector<1x128xf32> to vector<1x32xf32>
    %352 = vector.extract_strided_slice %349 {offsets = [0, 32], sizes = [1, 32], strides = [1, 1]} : vector<1x128xf32> to vector<1x32xf32>
    %353 = vector.extract_strided_slice %350 {offsets = [0, 64], sizes = [1, 32], strides = [1, 1]} : vector<1x128xf32> to vector<1x32xf32>
    %354 = vector.extract_strided_slice %349 {offsets = [0, 96], sizes = [1, 32], strides = [1, 1]} : vector<1x128xf32> to vector<1x32xf32>
    %355 = arith.mulf %352, %314 : vector<1x32xf32>
    %356 = arith.mulf %351, %353 : vector<1x32xf32>
    %357 = arith.addf %355, %356 : vector<1x32xf32>
    %358 = math.tanh %357 : vector<1x32xf32>
    %359 = arith.mulf %354, %358 : vector<1x32xf32>
    %cst_83 = arith.constant dense<0.000000e+00> : vector<1x4xf32>
    %360 = tpu.matmul %359, %10, %cst_83 {dimension_numbers = #tpu.dot_dimension_numbers<[1], [0], [0], [1], [0, 0, 1, 1], [], []>} : vector<1x32xf32>, vector<32x4xf32>, vector<1x4xf32> -> vector<1x4xf32>
    %361 = arith.addf %360, %11 : vector<1x4xf32>
    %c7 = arith.constant 7 : index
    %c0_84 = arith.constant 0 : index
    %362 = vector.load %arg2[%c7, %c0_84] : memref<8x128xf32, #tpu.memory_space<vmem>>, vector<1x4xf32>
    tpu.vector_store %arg2[%c7, %c0_84], %361 {strides = array<i32>} : memref<8x128xf32, #tpu.memory_space<vmem>>, vector<1x4xf32>,
    %363 = vector.extract_strided_slice %16 {offsets = [28, 0], sizes = [4, 8], strides = [1, 1]} : vector<32x8xf32> to vector<4x8xf32>
    %cst_85 = arith.constant dense<0.000000e+00> : vector<1x8xf32>
    %364 = tpu.matmul %361, %363, %cst_85 {dimension_numbers = #tpu.dot_dimension_numbers<[1], [0], [0], [1], [0, 0, 1, 1], [], []>} : vector<1x4xf32>, vector<4x8xf32>, vector<1x8xf32> -> vector<1x8xf32>
    %365 = arith.addf %322, %364 : vector<1x8xf32>
    %cst_86 = arith.constant dense<0xFF800000> : vector<1xf32>
    %366 = vector.multi_reduction <maximumf>, %365, %cst_86 [1] : vector<1x8xf32> to vector<1xf32>
    %367 = vector.shape_cast %366 : vector<1xf32> to vector<1x1xf32>
    %368 = vector.broadcast %367 : vector<1x1xf32> to vector<1x8xf32>
    %369 = arith.subf %365, %368 : vector<1x8xf32>
    %370 = math.exp %369 : vector<1x8xf32>
    %cst_87 = arith.constant dense<0.000000e+00> : vector<1xf32>
    %371 = vector.multi_reduction <add>, %370, %cst_87 [1] : vector<1x8xf32> to vector<1xf32>
    %372 = vector.shape_cast %371 : vector<1xf32> to vector<1x1xf32>
    %373 = vector.broadcast %372 : vector<1x1xf32> to vector<1x8xf32>
    %374 = arith.divf %370, %373 : vector<1x8xf32>
    %c0_88 = arith.constant 0 : index
    %c8 = arith.constant 8 : index
    %375 = vector.load %arg2[%c0_88, %c8] : memref<8x128xf32, #tpu.memory_space<vmem>>, vector<1x8xf32>
    tpu.vector_store %arg2[%c0_88, %c8], %374 {strides = array<i32>} : memref<8x128xf32, #tpu.memory_space<vmem>>, vector<1x8xf32>,
    %cst_89 = arith.constant dense<0.000000e+00> : vector<1x32xf32>
    %376 = tpu.matmul %374, %13, %cst_89 {dimension_numbers = #tpu.dot_dimension_numbers<[1], [0], [0], [1], [0, 0, 1, 1], [], []>} : vector<1x8xf32>, vector<8x32xf32>, vector<1x32xf32> -> vector<1x32xf32>
    %c0_90 = arith.constant 0 : index
    %c32_91 = arith.constant 32 : index
    %377 = vector.load %arg2[%c0_90, %c32_91] : memref<8x128xf32, #tpu.memory_space<vmem>>, vector<1x32xf32>
    tpu.vector_store %arg2[%c0_90, %c32_91], %376 {strides = array<i32>} : memref<8x128xf32, #tpu.memory_space<vmem>>, vector<1x32xf32>,
    return
  }
}

</mosaic_0001>

<llo_original>
// kernel: _forward_jit.1
$region0: #{_forward_jit.1}
  #allocation0 [shape = 'u32[]', space=smem, size = 0x4, offset = 0x4, fixed_abs, tag = 'smem constant byte address 0x4 - core index']
  #allocation1 [shape = 'u32[144,128]{1,0:T(1,128)}', space=vmem, size = 0x12000, scoped, tag = 'internal scratch']
  %s0 = inlined_call_operand.vmem [shape: f32[152,128], index: 0, kind: input, shape index: {}]
  %s1 = inlined_call_operand.vmem [shape: f32[32,128], index: 1, kind: input, shape index: {}]
  %s2 = inlined_call_operand.vmem [shape: f32[8,128], index: 2, kind: output, shape index: {}]
  %s3 = sld [smem:[#allocation0]]
  $region18: #{_forward_jit.1} parent=0
    _
  %s5 = ssub.s32 1, %s3
  %s6 = scalar_select 0, %s5, %s3
  // Predicated region
  $region2: #{_forward_jit.1} parent=0 // pred_check
    _
  $region3: #{_forward_jit.1} parent=0 // pred_check_branch
    %8 = sbr.rel (0) target = $region5
  $region4: #{_forward_jit.1} parent=0 // pred_region
    _
  $region5: #{_forward_jit.1} parent=0 // pred_fallthru
    _
  // Predicated region
  $region6: #{_forward_jit.1} parent=0 // pred_check
    _
  $region7: #{_forward_jit.1} parent=0 // pred_check_branch
    %10 = sbr.rel (0) target = $region9
  $region8: #{_forward_jit.1} parent=0 // pred_region
    _
  $region9: #{_forward_jit.1} parent=0 // pred_fallthru
    _
  %11 = vst [vmem:[%s2] sm:$0xff] 0.0
  %v12 = vld [vmem:[%s0] sm:$0xff]
  %v13 = vld [vmem:[%s0 + $0x8] sm:$0xff]
  %v14 = vld [vmem:[%s0 + $0x10] sm:$0xff]
  %v15 = vld [vmem:[%s0 + $0x18] sm:$0xff]
  %v16 = vld [vmem:[%s0 + $0x20] sm:$0xff]
  %v17 = vld [vmem:[%s0 + $0x28] sm:$0xff]
  %v18 = vld [vmem:[%s0 + $0x30] sm:$0xff]
  %v19 = vld [vmem:[%s0 + $0x38] sm:$0xff]
  %v20 = vld [vmem:[%s0 + $0x40] sm:$0xff]
  %v21 = vld [vmem:[%s0 + $0x48] sm:$0xff]
  %v22 = vld [vmem:[%s0 + $0x50] sm:$0xff]
  %v23 = vld [vmem:[%s0 + $0x58] sm:$0xff]
  %v24 = vld [vmem:[%s0 + $0x60] sm:$0xff]
  %v25 = vld [vmem:[%s0 + $0x68] sm:$0xff]
  %v26 = vld [vmem:[%s0 + $0x70] sm:$0x1]
  %v27 = vld [vmem:[%s0 + $0x71] sm:$0x1]
  %v28 = vld [vmem:[%s0 + $0x78] sm:$0xff]
  %v29 = vld [vmem:[%s0 + $0x80] sm:$0xff]
  %v30 = vld [vmem:[%s0 + $0x88] sm:$0xff]
  %v31 = vld [vmem:[%s0 + $0x90] sm:$0xff]
  %v32 = vld [vmem:[%s0 + $0x78] sm:$0x1]
  %v33 = vld [vmem:[%s1] sm:$0xff]
  %v34 = vld [vmem:[%s1] sm:$0xff]
  %v35 = vld [vmem:[%s1 + $0x8] sm:$0xff]
  %v36 = vld [vmem:[%s1 + $0x10] sm:$0xff]
  %v37 = vld [vmem:[%s1 + $0x18] sm:$0xff]
  %42 = vrot.lane.b32.xlu0 %v34, 64
  %v43 = vpop.permute.xlu0 %42
  %44 = vrot.lane.b32.xlu0 %v35, 64
  %v45 = vpop.permute.xlu0 %44
  %46 = vrot.lane.b32.xlu0 %v36, 64
  %v47 = vpop.permute.xlu0 %46
  %48 = vrot.lane.b32.xlu0 %v37, 64
  %v49 = vpop.permute.xlu0 %48
  %58 = vrot.lane.b32.xlu0 %v28, 96
  %v59 = vpop.permute.xlu0 %58
  %60 = vrot.lane.b32.xlu0 %v29, 96
  %v61 = vpop.permute.xlu0 %60
  %62 = vrot.lane.b32.xlu0 %v30, 96
  %v63 = vpop.permute.xlu0 %62
  %64 = vrot.lane.b32.xlu0 %v31, 96
  %v65 = vpop.permute.xlu0 %64
  %vm70 = vcmask 261120
  %v71 = vsel %vm70, %v28, 0
  %v73 = vsel %vm70, %v29, 0
  %v75 = vsel %vm70, %v30, 0
  %v77 = vsel %vm70, %v31, 0
  %79 = vmatprep.subr.mxu0 0.0
  %80 = vmatpush1.msra.mxu0 %v43
  %81 = vmatprep.subr.mxu0 0.0
  %82 = vmatpush1.msra.mxu0 %v45
  %83 = vmatprep.subr.mxu0 0.0
  %84 = vmatpush1.msra.mxu0 %v47
  %85 = vmatprep.subr.mxu0 0.0
  %86 = vmatpush1.msra.mxu0 %v49
  %87 = vmatprep.subr.mxu0 0.0
  %88 = vmatpush1.msra.mxu0 0.0
  %89 = vmatprep.subr.mxu0 0.0
  %90 = vmatpush1.msra.mxu0 0.0
  %91 = vmatprep.subr.mxu0 0.0
  %92 = vmatpush1.msra.mxu0 0.0
  %93 = vmatprep.subr.mxu0 0.0
  %94 = vmatpush1.msra.mxu0 0.0
  %95 = vmatprep.subr.mxu0 0.0
  %96 = vmatpush1.msra.mxu0 0.0
  %97 = vmatprep.subr.mxu0 0.0
  %98 = vmatpush1.msra.mxu0 0.0
  %99 = vmatprep.subr.mxu0 0.0
  %100 = vmatpush1.msra.mxu0 0.0
  %101 = vmatprep.subr.mxu0 0.0
  %102 = vmatpush1.msra.mxu0 0.0
  %103 = vmatprep.subr.mxu0 0.0
  %104 = vmatpush1.msra.mxu0 0.0
  %105 = vmatprep.subr.mxu0 0.0
  %106 = vmatpush1.msra.mxu0 0.0
  %107 = vmatprep.subr.mxu0 0.0
  %108 = vmatpush1.msra.mxu0 0.0
  %109 = vmatprep.subr.mxu0 0.0
  %110 = vmatpush1.msra.mxu0 0.0
  %111 = vmatprep.subr.mxu0 0.0
  %112 = vmatpush1.msra.mxu0 0.0
  %113 = vmatprep.subr.mxu0 0.0
  %114 = vmatpush1.msra.mxu0 0.0
  %115 = vmatprep.subr.mxu0 0.0
  %116 = vmatpush1.msra.mxu0 0.0
  %117 = vmatprep.subr.mxu0 0.0
  %118 = vmatpush1.msra.mxu0 0.0
  %119 = vmatprep.subr.mxu0 0.0
  %120 = vmatpush1.msra.mxu0 0.0
  %121 = vmatprep.subr.mxu0 0.0
  %122 = vmatpush1.msra.mxu0 0.0
  %123 = vmatprep.subr.mxu0 0.0
  %124 = vmatpush1.msra.mxu0 0.0
  %125 = vmatprep.subr.mxu0 0.0
  %126 = vmatpush1.msra.mxu0 0.0
  %127 = vmatprep.subr.mxu0 0.0
  %128 = vmatpush1.msra.mxu0 0.0
  %129 = vmatprep.subr.mxu0 0.0
  %130 = vmatpush1.msra.mxu0 0.0
  %131 = vmatprep.subr.mxu0 0.0
  %132 = vmatpush1.msra.mxu0 0.0
  %133 = vmatprep.subr.mxu0 0.0
  %134 = vmatpush1.msra.mxu0 0.0
  %135 = vmatprep.subr.mxu0 0.0
  %136 = vmatpush1.msra.mxu0 0.0
  %137 = vmatprep.subr.mxu0 0.0
  %138 = vmatpush1.msra.mxu0 0.0
  %139 = vmatprep.subr.mxu0 0.0
  %140 = vmatpush1.msra.mxu0 0.0
  %141 = vmatprep.subr.mxu0 0.0
  %142 = vmatpush1.msra.mxu0 0.0
  %143 = vmatprep.mubr.f32.mxu0 0.0
  %144 = vmatmul.mubr.f32.gmra.mrb[0].mxu0 %v71
  %v145 = vpop.f32.mrb[0].mxu0
  %v146 = vadd.f32 %v59, %v145
  %v147 = vpop.f32.mrb[0].mxu0
  %148 = vmatprep.mubr.f32.mxu0 0.0
  %149 = vmatmul.mubr.f32.gmra.mrb[0].mxu0 %v73
  %v150 = vpop.f32.mrb[0].mxu0
  %v151 = vadd.f32 %v61, %v150
  %v152 = vpop.f32.mrb[0].mxu0
  %153 = vmatprep.mubr.f32.mxu0 0.0
  %154 = vmatmul.mubr.f32.gmra.mrb[0].mxu0 %v75
  %v155 = vpop.f32.mrb[0].mxu0
  %v156 = vadd.f32 %v63, %v155
  %v157 = vpop.f32.mrb[0].mxu0
  %158 = vmatprep.mubr.f32.mxu0 0.0
  %159 = vmatmul.mubr.f32.gmra.mrb[0].mxu0 %v77
  %v160 = vpop.f32.mrb[0].mxu0
  %v161 = vadd.f32 %v65, %v160
  %v162 = vpop.f32.mrb[0].mxu0
  %163 = vdwg.mxu0
  %v164 = vlaneseq
  %v165 = vshrl.u32 %v164, 7
  %v166 = vsub.s32 0, %v165
  %v167 = vrot.slane %v26, %v166
  %vm168 = vcmask 130048
  %v170 = vsel %vm168, %v33, 0
  %172 = vmatprep.subr.mxu0 0.0
  %173 = vmatpush1.msra.mxu0 %v12
  %174 = vmatprep.subr.mxu0 0.0
  %175 = vmatpush1.msra.mxu0 %v13
  %176 = vmatprep.subr.mxu0 0.0
  %177 = vmatpush1.msra.mxu0 0.0
  %178 = vmatprep.subr.mxu0 0.0
  %179 = vmatpush1.msra.mxu0 0.0
  %180 = vmatprep.subr.mxu0 0.0
  %181 = vmatpush1.msra.mxu0 0.0
  %182 = vmatprep.subr.mxu0 0.0
  %183 = vmatpush1.msra.mxu0 0.0
  %184 = vmatprep.subr.mxu0 0.0
  %185 = vmatpush1.msra.mxu0 0.0
  %186 = vmatprep.subr.mxu0 0.0
  %187 = vmatpush1.msra.mxu0 0.0
  %188 = vmatprep.subr.mxu0 0.0
  %189 = vmatpush1.msra.mxu0 0.0
  %190 = vmatprep.subr.mxu0 0.0
  %191 = vmatpush1.msra.mxu0 0.0
  %192 = vmatprep.subr.mxu0 0.0
  %193 = vmatpush1.msra.mxu0 0.0
  %194 = vmatprep.subr.mxu0 0.0
  %195 = vmatpush1.msra.mxu0 0.0
  %196 = vmatprep.subr.mxu0 0.0
  %197 = vmatpush1.msra.mxu0 0.0
  %198 = vmatprep.subr.mxu0 0.0
  %199 = vmatpush1.msra.mxu0 0.0
  %200 = vmatprep.subr.mxu0 0.0
  %201 = vmatpush1.msra.mxu0 0.0
  %202 = vmatprep.subr.mxu0 0.0
  %203 = vmatpush1.msra.mxu0 0.0
  %204 = vmatprep.subr.mxu0 0.0
  %205 = vmatpush1.msra.mxu0 0.0
  %206 = vmatprep.subr.mxu0 0.0
  %207 = vmatpush1.msra.mxu0 0.0
  %208 = vmatprep.subr.mxu0 0.0
  %209 = vmatpush1.msra.mxu0 0.0
  %210 = vmatprep.subr.mxu0 0.0
  %211 = vmatpush1.msra.mxu0 0.0
  %212 = vmatprep.subr.mxu0 0.0
  %213 = vmatpush1.msra.mxu0 0.0
  %214 = vmatprep.subr.mxu0 0.0
  %215 = vmatpush1.msra.mxu0 0.0
  %216 = vmatprep.subr.mxu0 0.0
  %217 = vmatpush1.msra.mxu0 0.0
  %218 = vmatprep.subr.mxu0 0.0
  %219 = vmatpush1.msra.mxu0 0.0
  %220 = vmatprep.subr.mxu0 0.0
  %221 = vmatpush1.msra.mxu0 0.0
  %222 = vmatprep.subr.mxu0 0.0
  %223 = vmatpush1.msra.mxu0 0.0
  %224 = vmatprep.subr.mxu0 0.0
  %225 = vmatpush1.msra.mxu0 0.0
  %226 = vmatprep.subr.mxu0 0.0
  %227 = vmatpush1.msra.mxu0 0.0
  %228 = vmatprep.subr.mxu0 0.0
  %229 = vmatpush1.msra.mxu0 0.0
  %230 = vmatprep.subr.mxu0 0.0
  %231 = vmatpush1.msra.mxu0 0.0
  %232 = vmatprep.subr.mxu0 0.0
  %233 = vmatpush1.msra.mxu0 0.0
  %234 = vmatprep.subr.mxu0 0.0
  %235 = vmatpush1.msra.mxu0 0.0
  %236 = vmatprep.mubr.f32.mxu0 0.0
  %237 = vmatmul.mubr.f32.gmra.mrb[0].mxu0 %v170
  %v238 = vpop.f32.mrb[0].mxu0
  %v239 = vadd.f32 %v167, %v238
  %v240 = vpop.f32.mrb[0].mxu0
  %241 = vdwg.mxu0
  %v243 = vsel %vm70, 0.0, 0
  %245 = vmatprep.subr.mxu0 0.0
  %246 = vmatpush1.msra.mxu0 %v22
  %247 = vmatprep.subr.mxu0 0.0
  %248 = vmatpush1.msra.mxu0 %v23
  %249 = vmatprep.subr.mxu0 0.0
  %250 = vmatpush1.msra.mxu0 %v24
  %251 = vmatprep.subr.mxu0 0.0
  %252 = vmatpush1.msra.mxu0 %v25
  %253 = vmatprep.subr.mxu0 0.0
  %254 = vmatpush1.msra.mxu0 0.0
  %255 = vmatprep.subr.mxu0 0.0
  %256 = vmatpush1.msra.mxu0 0.0
  %257 = vmatprep.subr.mxu0 0.0
  %258 = vmatpush1.msra.mxu0 0.0
  %259 = vmatprep.subr.mxu0 0.0
  %260 = vmatpush1.msra.mxu0 0.0
  %261 = vmatprep.subr.mxu0 0.0
  %262 = vmatpush1.msra.mxu0 0.0
  %263 = vmatprep.subr.mxu0 0.0
  %264 = vmatpush1.msra.mxu0 0.0
  %265 = vmatprep.subr.mxu0 0.0
  %266 = vmatpush1.msra.mxu0 0.0
  %267 = vmatprep.subr.mxu0 0.0
  %268 = vmatpush1.msra.mxu0 0.0
  %269 = vmatprep.subr.mxu0 0.0
  %270 = vmatpush1.msra.mxu0 0.0
  %271 = vmatprep.subr.mxu0 0.0
  %272 = vmatpush1.msra.mxu0 0.0
  %273 = vmatprep.subr.mxu0 0.0
  %274 = vmatpush1.msra.mxu0 0.0
  %275 = vmatprep.subr.mxu0 0.0
  %276 = vmatpush1.msra.mxu0 0.0
  %277 = vmatprep.subr.mxu0 0.0
  %278 = vmatpush1.msra.mxu0 0.0
  %279 = vmatprep.subr.mxu0 0.0
  %280 = vmatpush1.msra.mxu0 0.0
  %281 = vmatprep.subr.mxu0 0.0
  %282 = vmatpush1.msra.mxu0 0.0
  %283 = vmatprep.subr.mxu0 0.0
  %284 = vmatpush1.msra.mxu0 0.0
  %285 = vmatprep.subr.mxu0 0.0
  %286 = vmatpush1.msra.mxu0 0.0
  %287 = vmatprep.subr.mxu0 0.0
  %288 = vmatpush1.msra.mxu0 0.0
  %289 = vmatprep.subr.mxu0 0.0
  %290 = vmatpush1.msra.mxu0 0.0
  %291 = vmatprep.subr.mxu0 0.0
  %292 = vmatpush1.msra.mxu0 0.0
  %293 = vmatprep.subr.mxu0 0.0
  %294 = vmatpush1.msra.mxu0 0.0
  %295 = vmatprep.subr.mxu0 0.0
  %296 = vmatpush1.msra.mxu0 0.0
  %297 = vmatprep.subr.mxu0 0.0
  %298 = vmatpush1.msra.mxu0 0.0
  %299 = vmatprep.subr.mxu0 0.0
  %300 = vmatpush1.msra.mxu0 0.0
  %301 = vmatprep.subr.mxu0 0.0
  %302 = vmatpush1.msra.mxu0 0.0
  %303 = vmatprep.subr.mxu0 0.0
  %304 = vmatpush1.msra.mxu0 0.0
  %305 = vmatprep.subr.mxu0 0.0
  %306 = vmatpush1.msra.mxu0 0.0
  %307 = vmatprep.subr.mxu0 0.0
  %308 = vmatpush1.msra.mxu0 0.0
  %309 = vmatprep.mubr.f32.mxu0 0.0
  %310 = vmatmul.mubr.f32.gmra.mrb[0].mxu0 %v243
  %v311 = vpop.f32.mrb[0].mxu0
  %v312 = vadd.f32 0.0, %v311
  %v313 = vpop.f32.mrb[0].mxu0
  %314 = vdwg.mxu0
  %315 = vmatprep.subr.mxu0 0.0
  %316 = vmatpush1.msra.mxu0 %v14
  %317 = vmatprep.subr.mxu0 0.0
  %318 = vmatpush1.msra.mxu0 %v15
  %319 = vmatprep.subr.mxu0 0.0
  %320 = vmatpush1.msra.mxu0 %v16
  %321 = vmatprep.subr.mxu0 0.0
  %322 = vmatpush1.msra.mxu0 %v17
  %323 = vmatprep.subr.mxu0 0.0
  %324 = vmatpush1.msra.mxu0 0.0
  %325 = vmatprep.subr.mxu0 0.0
  %326 = vmatpush1.msra.mxu0 0.0
  %327 = vmatprep.subr.mxu0 0.0
  %328 = vmatpush1.msra.mxu0 0.0
  %329 = vmatprep.subr.mxu0 0.0
  %330 = vmatpush1.msra.mxu0 0.0
  %331 = vmatprep.subr.mxu0 0.0
  %332 = vmatpush1.msra.mxu0 0.0
  %333 = vmatprep.subr.mxu0 0.0
  %334 = vmatpush1.msra.mxu0 0.0
  %335 = vmatprep.subr.mxu0 0.0
  %336 = vmatpush1.msra.mxu0 0.0
  %337 = vmatprep.subr.mxu0 0.0
  %338 = vmatpush1.msra.mxu0 0.0
  %339 = vmatprep.subr.mxu0 0.0
  %340 = vmatpush1.msra.mxu0 0.0
  %341 = vmatprep.subr.mxu0 0.0
  %342 = vmatpush1.msra.mxu0 0.0
  %343 = vmatprep.subr.mxu0 0.0
  %344 = vmatpush1.msra.mxu0 0.0
  %345 = vmatprep.subr.mxu0 0.0
  %346 = vmatpush1.msra.mxu0 0.0
  %347 = vmatprep.subr.mxu0 0.0
  %348 = vmatpush1.msra.mxu0 0.0
  %349 = vmatprep.subr.mxu0 0.0
  %350 = vmatpush1.msra.mxu0 0.0
  %351 = vmatprep.subr.mxu0 0.0
  %352 = vmatpush1.msra.mxu0 0.0
  %353 = vmatprep.subr.mxu0 0.0
  %354 = vmatpush1.msra.mxu0 0.0
  %355 = vmatprep.subr.mxu0 0.0
  %356 = vmatpush1.msra.mxu0 0.0
  %357 = vmatprep.subr.mxu0 0.0
  %358 = vmatpush1.msra.mxu0 0.0
  %359 = vmatprep.subr.mxu0 0.0
  %360 = vmatpush1.msra.mxu0 0.0
  %361 = vmatprep.subr.mxu0 0.0
  %362 = vmatpush1.msra.mxu0 0.0
  %363 = vmatprep.subr.mxu0 0.0
  %364 = vmatpush1.msra.mxu0 0.0
  %365 = vmatprep.subr.mxu0 0.0
  %366 = vmatpush1.msra.mxu0 0.0
  %367 = vmatprep.subr.mxu0 0.0
  %368 = vmatpush1.msra.mxu0 0.0
  %369 = vmatprep.subr.mxu0 0.0
  %370 = vmatpush1.msra.mxu0 0.0
  %371 = vmatprep.subr.mxu0 0.0
  %372 = vmatpush1.msra.mxu0 0.0
  %373 = vmatprep.subr.mxu0 0.0
  %374 = vmatpush1.msra.mxu0 0.0
  %375 = vmatprep.subr.mxu0 0.0
  %376 = vmatpush1.msra.mxu0 0.0
  %377 = vmatprep.subr.mxu0 0.0
  %378 = vmatpush1.msra.mxu0 0.0
  %379 = vmatprep.mubr.f32.mxu0 0.0
  %380 = vmatmul.mubr.f32.gmra.mrb[0].mxu0 %v243
  %v381 = vpop.f32.mrb[0].mxu0
  %v382 = vadd.f32 0.0, %v381
  %v383 = vpop.f32.mrb[0].mxu0
  %384 = vdwg.mxu0
  %v385 = vadd.f32 %v239, %v382
  %v386 = vxor.u32 %v385, 2147483648
  %v387 = vmul.f32 %v386, 1.442695
  %v388 = vpow.pop %v387
  %v389 = vadd.f32 %v388, 1.0
  %v390 = vrcp.pop %v389
  %v391 = vmul.f32 1.0, %v390
  %v392 = vtanh.pop %v385
  %v393 = vmul.f32 %v391, 0.0
  %395 = vrot.lane.b32.xlu0 %v392, 64
  %v396 = vpop.permute.xlu0 %395
  %v398 = vmul.f32 %v391, %v396
  %400 = vrot.lane.b32.xlu0 %v398, 32
  %v401 = vpop.permute.xlu0 %400
  %v403 = vadd.f32 %v393, %v401
  %v404 = vtanh.pop %v403
  %406 = vrot.lane.b32.xlu0 %v404, 64
  %v407 = vpop.permute.xlu0 %406
  %v409 = vmul.f32 %v391, %v407
  %411 = vrot.lane.b32.xlu0 %v409, 32
  %v412 = vpop.permute.xlu0 %411
  %v413 = vsel %vm70, %v412, 0
  %415 = vmatprep.subr.mxu0 0.0
  %416 = vmatpush1.msra.mxu0 %v18
  %417 = vmatprep.subr.mxu0 0.0
  %418 = vmatpush1.msra.mxu0 %v19
  %419 = vmatprep.subr.mxu0 0.0
  %420 = vmatpush1.msra.mxu0 %v20
  %421 = vmatprep.subr.mxu0 0.0
  %422 = vmatpush1.msra.mxu0 %v21
  %423 = vmatprep.subr.mxu0 0.0
  %424 = vmatpush1.msra.mxu0 0.0
  %425 = vmatprep.subr.mxu0 0.0
  %426 = vmatpush1.msra.mxu0 0.0
  %427 = vmatprep.subr.mxu0 0.0
  %428 = vmatpush1.msra.mxu0 0.0
  %429 = vmatprep.subr.mxu0 0.0
  %430 = vmatpush1.msra.mxu0 0.0
  %431 = vmatprep.subr.mxu0 0.0
  %432 = vmatpush1.msra.mxu0 0.0
  %433 = vmatprep.subr.mxu0 0.0
  %434 = vmatpush1.msra.mxu0 0.0
  %435 = vmatprep.subr.mxu0 0.0
  %436 = vmatpush1.msra.mxu0 0.0
  %437 = vmatprep.subr.mxu0 0.0
  %438 = vmatpush1.msra.mxu0 0.0
  %439 = vmatprep.subr.mxu0 0.0
  %440 = vmatpush1.msra.mxu0 0.0
  %441 = vmatprep.subr.mxu0 0.0
  %442 = vmatpush1.msra.mxu0 0.0
  %443 = vmatprep.subr.mxu0 0.0
  %444 = vmatpush1.msra.mxu0 0.0
  %445 = vmatprep.subr.mxu0 0.0
  %446 = vmatpush1.msra.mxu0 0.0
  %447 = vmatprep.subr.mxu0 0.0
  %448 = vmatpush1.msra.mxu0 0.0
  %449 = vmatprep.subr.mxu0 0.0
  %450 = vmatpush1.msra.mxu0 0.0
  %451 = vmatprep.subr.mxu0 0.0
  %452 = vmatpush1.msra.mxu0 0.0
  %453 = vmatprep.subr.mxu0 0.0
  %454 = vmatpush1.msra.mxu0 0.0
  %455 = vmatprep.subr.mxu0 0.0
  %456 = vmatpush1.msra.mxu0 0.0
  %457 = vmatprep.subr.mxu0 0.0
  %458 = vmatpush1.msra.mxu0 0.0
  %459 = vmatprep.subr.mxu0 0.0
  %460 = vmatpush1.msra.mxu0 0.0
  %461 = vmatprep.subr.mxu0 0.0
  %462 = vmatpush1.msra.mxu0 0.0
  %463 = vmatprep.subr.mxu0 0.0
  %464 = vmatpush1.msra.mxu0 0.0
  %465 = vmatprep.subr.mxu0 0.0
  %466 = vmatpush1.msra.mxu0 0.0
  %467 = vmatprep.subr.mxu0 0.0
  %468 = vmatpush1.msra.mxu0 0.0
  %469 = vmatprep.subr.mxu0 0.0
  %470 = vmatpush1.msra.mxu0 0.0
  %471 = vmatprep.subr.mxu0 0.0
  %472 = vmatpush1.msra.mxu0 0.0
  %473 = vmatprep.subr.mxu0 0.0
  %474 = vmatpush1.msra.mxu0 0.0
  %475 = vmatprep.subr.mxu0 0.0
  %476 = vmatpush1.msra.mxu0 0.0
  %477 = vmatprep.subr.mxu0 0.0
  %478 = vmatpush1.msra.mxu0 0.0
  %479 = vmatprep.mubr.f32.mxu0 0.0
  %480 = vmatmul.mubr.f32.gmra.mrb[0].mxu0 %v413
  %v481 = vpop.f32.mrb[0].mxu0
  %v482 = vadd.f32 %v312, %v481
  %v483 = vpop.f32.mrb[0].mxu0
  %484 = vdwg.mxu0
  %v485 = vadd.f32 %v482, %v27
  %v486 = vxor.u32 %v485, 2147483648
  %v487 = vmul.f32 %v486, 1.442695
  %v488 = vpow.pop %v487
  %v489 = vadd.f32 %v488, 1.0
  %v490 = vrcp.pop %v489
  %v491 = vmul.f32 1.0, %v490
  %v492 = vtanh.pop %v485
  %v493 = vmul.f32 %v491, 0.0
  %495 = vrot.lane.b32.xlu0 %v492, 64
  %v496 = vpop.permute.xlu0 %495
  %v498 = vmul.f32 %v491, %v496
  %500 = vrot.lane.b32.xlu0 %v498, 32
  %v501 = vpop.permute.xlu0 %500
  %v503 = vadd.f32 %v493, %v501
  %v504 = vtanh.pop %v503
  %506 = vrot.lane.b32.xlu0 %v504, 64
  %v507 = vpop.permute.xlu0 %506
  %v509 = vmul.f32 %v491, %v507
  %511 = vrot.lane.b32.xlu0 %v509, 32
  %v512 = vpop.permute.xlu0 %511
  %513 = vrot.lane.b32.xlu0 %v28, 88
  %v514 = vpop.permute.xlu0 %513
  %515 = vrot.lane.b32.xlu0 %v29, 88
  %v516 = vpop.permute.xlu0 %515
  %517 = vrot.lane.b32.xlu0 %v30, 88
  %v518 = vpop.permute.xlu0 %517
  %519 = vrot.lane.b32.xlu0 %v31, 88
  %v520 = vpop.permute.xlu0 %519
  %526 = vrot.lane.b32.xlu0 %v32, 84
  %v527 = vpop.permute.xlu0 %526
  %v529 = vsel %vm70, %v512, 0
  %531 = vmatprep.subr.mxu0 0.0
  %532 = vmatpush1.msra.mxu0 %v514
  %533 = vmatprep.subr.mxu0 0.0
  %534 = vmatpush1.msra.mxu0 %v516
  %535 = vmatprep.subr.mxu0 0.0
  %536 = vmatpush1.msra.mxu0 %v518
  %537 = vmatprep.subr.mxu0 0.0
  %538 = vmatpush1.msra.mxu0 %v520
  %539 = vmatprep.subr.mxu0 0.0
  %540 = vmatpush1.msra.mxu0 0.0
  %541 = vmatprep.subr.mxu0 0.0
  %542 = vmatpush1.msra.mxu0 0.0
  %543 = vmatprep.subr.mxu0 0.0
  %544 = vmatpush1.msra.mxu0 0.0
  %545 = vmatprep.subr.mxu0 0.0
  %546 = vmatpush1.msra.mxu0 0.0
  %547 = vmatprep.subr.mxu0 0.0
  %548 = vmatpush1.msra.mxu0 0.0
  %549 = vmatprep.subr.mxu0 0.0
  %550 = vmatpush1.msra.mxu0 0.0
  %551 = vmatprep.subr.mxu0 0.0
  %552 = vmatpush1.msra.mxu0 0.0
  %553 = vmatprep.subr.mxu0 0.0
  %554 = vmatpush1.msra.mxu0 0.0
  %555 = vmatprep.subr.mxu0 0.0
  %556 = vmatpush1.msra.mxu0 0.0
  %557 = vmatprep.subr.mxu0 0.0
  %558 = vmatpush1.msra.mxu0 0.0
  %559 = vmatprep.subr.mxu0 0.0
  %560 = vmatpush1.msra.mxu0 0.0
  %561 = vmatprep.subr.mxu0 0.0
  %562 = vmatpush1.msra.mxu0 0.0
  %563 = vmatprep.subr.mxu0 0.0
  %564 = vmatpush1.msra.mxu0 0.0
  %565 = vmatprep.subr.mxu0 0.0
  %566 = vmatpush1.msra.mxu0 0.0
  %567 = vmatprep.subr.mxu0 0.0
  %568 = vmatpush1.msra.mxu0 0.0
  %569 = vmatprep.subr.mxu0 0.0
  %570 = vmatpush1.msra.mxu0 0.0
  %571 = vmatprep.subr.mxu0 0.0
  %572 = vmatpush1.msra.mxu0 0.0
  %573 = vmatprep.subr.mxu0 0.0
  %574 = vmatpush1.msra.mxu0 0.0
  %575 = vmatprep.subr.mxu0 0.0
  %576 = vmatpush1.msra.mxu0 0.0
  %577 = vmatprep.subr.mxu0 0.0
  %578 = vmatpush1.msra.mxu0 0.0
  %579 = vmatprep.subr.mxu0 0.0
  %580 = vmatpush1.msra.mxu0 0.0
  %581 = vmatprep.subr.mxu0 0.0
  %582 = vmatpush1.msra.mxu0 0.0
  %583 = vmatprep.subr.mxu0 0.0
  %584 = vmatpush1.msra.mxu0 0.0
  %585 = vmatprep.subr.mxu0 0.0
  %586 = vmatpush1.msra.mxu0 0.0
  %587 = vmatprep.subr.mxu0 0.0
  %588 = vmatpush1.msra.mxu0 0.0
  %589 = vmatprep.subr.mxu0 0.0
  %590 = vmatpush1.msra.mxu0 0.0
  %591 = vmatprep.subr.mxu0 0.0
  %592 = vmatpush1.msra.mxu0 0.0
  %593 = vmatprep.subr.mxu0 0.0
  %594 = vmatpush1.msra.mxu0 0.0
  %595 = vmatprep.mubr.f32.mxu0 0.0
  %596 = vmatmul.mubr.f32.gmra.mrb[0].mxu0 %v529
  %v597 = vpop.f32.mrb[0].mxu0
  %v598 = vadd.f32 %v527, %v597
  %v599 = vpop.f32.mrb[0].mxu0
  %600 = vdwg.mxu0
  %vm601 = vcmask 24576
  %602 = vst.msk [vmem:[%s2] sm:$0x1] %vm601, %v598
  %603 = vmatprep.subr.mxu0 0.0
  %604 = vmatpush1.msra.mxu0 %v22
  %605 = vmatprep.subr.mxu0 0.0
  %606 = vmatpush1.msra.mxu0 %v23
  %607 = vmatprep.subr.mxu0 0.0
  %608 = vmatpush1.msra.mxu0 %v24
  %609 = vmatprep.subr.mxu0 0.0
  %610 = vmatpush1.msra.mxu0 %v25
  %611 = vmatprep.subr.mxu0 0.0
  %612 = vmatpush1.msra.mxu0 0.0
  %613 = vmatprep.subr.mxu0 0.0
  %614 = vmatpush1.msra.mxu0 0.0
  %615 = vmatprep.subr.mxu0 0.0
  %616 = vmatpush1.msra.mxu0 0.0
  %617 = vmatprep.subr.mxu0 0.0
  %618 = vmatpush1.msra.mxu0 0.0
  %619 = vmatprep.subr.mxu0 0.0
  %620 = vmatpush1.msra.mxu0 0.0
  %621 = vmatprep.subr.mxu0 0.0
  %622 = vmatpush1.msra.mxu0 0.0
  %623 = vmatprep.subr.mxu0 0.0
  %624 = vmatpush1.msra.mxu0 0.0
  %625 = vmatprep.subr.mxu0 0.0
  %626 = vmatpush1.msra.mxu0 0.0
  %627 = vmatprep.subr.mxu0 0.0
  %628 = vmatpush1.msra.mxu0 0.0
  %629 = vmatprep.subr.mxu0 0.0
  %630 = vmatpush1.msra.mxu0 0.0
  %631 = vmatprep.subr.mxu0 0.0
  %632 = vmatpush1.msra.mxu0 0.0
  %633 = vmatprep.subr.mxu0 0.0
  %634 = vmatpush1.msra.mxu0 0.0
  %635 = vmatprep.subr.mxu0 0.0
  %636 = vmatpush1.msra.mxu0 0.0
  %637 = vmatprep.subr.mxu0 0.0
  %638 = vmatpush1.msra.mxu0 0.0
  %639 = vmatprep.subr.mxu0 0.0
  %640 = vmatpush1.msra.mxu0 0.0
  %641 = vmatprep.subr.mxu0 0.0
  %642 = vmatpush1.msra.mxu0 0.0
  %643 = vmatprep.subr.mxu0 0.0
  %644 = vmatpush1.msra.mxu0 0.0
  %645 = vmatprep.subr.mxu0 0.0
  %646 = vmatpush1.msra.mxu0 0.0
  %647 = vmatprep.subr.mxu0 0.0
  %648 = vmatpush1.msra.mxu0 0.0
  %649 = vmatprep.subr.mxu0 0.0
  %650 = vmatpush1.msra.mxu0 0.0
  %651 = vmatprep.subr.mxu0 0.0
  %652 = vmatpush1.msra.mxu0 0.0
  %653 = vmatprep.subr.mxu0 0.0
  %654 = vmatpush1.msra.mxu0 0.0
  %655 = vmatprep.subr.mxu0 0.0
  %656 = vmatpush1.msra.mxu0 0.0
  %657 = vmatprep.subr.mxu0 0.0
  %658 = vmatpush1.msra.mxu0 0.0
  %659 = vmatprep.subr.mxu0 0.0
  %660 = vmatpush1.msra.mxu0 0.0
  %661 = vmatprep.subr.mxu0 0.0
  %662 = vmatpush1.msra.mxu0 0.0
  %663 = vmatprep.subr.mxu0 0.0
  %664 = vmatpush1.msra.mxu0 0.0
  %665 = vmatprep.subr.mxu0 0.0
  %666 = vmatpush1.msra.mxu0 0.0
  %667 = vmatprep.mubr.f32.mxu0 0.0
  %668 = vmatmul.mubr.f32.gmra.mrb[0].mxu0 %v529
  %v669 = vpop.f32.mrb[0].mxu0
  %v670 = vadd.f32 0.0, %v669
  %v671 = vpop.f32.mrb[0].mxu0
  %672 = vdwg.mxu0
  %673 = vmatprep.subr.mxu0 0.0
  %674 = vmatpush1.msra.mxu0 %v14
  %675 = vmatprep.subr.mxu0 0.0
  %676 = vmatpush1.msra.mxu0 %v15
  %677 = vmatprep.subr.mxu0 0.0
  %678 = vmatpush1.msra.mxu0 %v16
  %679 = vmatprep.subr.mxu0 0.0
  %680 = vmatpush1.msra.mxu0 %v17
  %681 = vmatprep.subr.mxu0 0.0
  %682 = vmatpush1.msra.mxu0 0.0
  %683 = vmatprep.subr.mxu0 0.0
  %684 = vmatpush1.msra.mxu0 0.0
  %685 = vmatprep.subr.mxu0 0.0
  %686 = vmatpush1.msra.mxu0 0.0
  %687 = vmatprep.subr.mxu0 0.0
  %688 = vmatpush1.msra.mxu0 0.0
  %689 = vmatprep.subr.mxu0 0.0
  %690 = vmatpush1.msra.mxu0 0.0
  %691 = vmatprep.subr.mxu0 0.0
  %692 = vmatpush1.msra.mxu0 0.0
  %693 = vmatprep.subr.mxu0 0.0
  %694 = vmatpush1.msra.mxu0 0.0
  %695 = vmatprep.subr.mxu0 0.0
  %696 = vmatpush1.msra.mxu0 0.0
  %697 = vmatprep.subr.mxu0 0.0
  %698 = vmatpush1.msra.mxu0 0.0
  %699 = vmatprep.subr.mxu0 0.0
  %700 = vmatpush1.msra.mxu0 0.0
  %701 = vmatprep.subr.mxu0 0.0
  %702 = vmatpush1.msra.mxu0 0.0
  %703 = vmatprep.subr.mxu0 0.0
  %704 = vmatpush1.msra.mxu0 0.0
  %705 = vmatprep.subr.mxu0 0.0
  %706 = vmatpush1.msra.mxu0 0.0
  %707 = vmatprep.subr.mxu0 0.0
  %708 = vmatpush1.msra.mxu0 0.0
  %709 = vmatprep.subr.mxu0 0.0
  %710 = vmatpush1.msra.mxu0 0.0
  %711 = vmatprep.subr.mxu0 0.0
  %712 = vmatpush1.msra.mxu0 0.0
  %713 = vmatprep.subr.mxu0 0.0
  %714 = vmatpush1.msra.mxu0 0.0
  %715 = vmatprep.subr.mxu0 0.0
  %716 = vmatpush1.msra.mxu0 0.0
  %717 = vmatprep.subr.mxu0 0.0
  %718 = vmatpush1.msra.mxu0 0.0
  %719 = vmatprep.subr.mxu0 0.0
  %720 = vmatpush1.msra.mxu0 0.0
  %721 = vmatprep.subr.mxu0 0.0
  %722 = vmatpush1.msra.mxu0 0.0
  %723 = vmatprep.subr.mxu0 0.0
  %724 = vmatpush1.msra.mxu0 0.0
  %725 = vmatprep.subr.mxu0 0.0
  %726 = vmatpush1.msra.mxu0 0.0
  %727 = vmatprep.subr.mxu0 0.0
  %728 = vmatpush1.msra.mxu0 0.0
  %729 = vmatprep.subr.mxu0 0.0
  %730 = vmatpush1.msra.mxu0 0.0
  %731 = vmatprep.subr.mxu0 0.0
  %732 = vmatpush1.msra.mxu0 0.0
  %733 = vmatprep.subr.mxu0 0.0
  %734 = vmatpush1.msra.mxu0 0.0
  %735 = vmatprep.subr.mxu0 0.0
  %736 = vmatpush1.msra.mxu0 0.0
  %737 = vmatprep.mubr.f32.mxu0 0.0
  %738 = vmatmul.mubr.f32.gmra.mrb[0].mxu0 %v413
  %v739 = vpop.f32.mrb[0].mxu0
  %v740 = vadd.f32 0.0, %v739
  %v741 = vpop.f32.mrb[0].mxu0
  %742 = vdwg.mxu0
  %v744 = vrot.slane %v740, 7
  %v746 = vadd.f32 %v239, %v744
  %v747 = vxor.u32 %v746, 2147483648
  %v748 = vmul.f32 %v747, 1.442695
  %v749 = vpow.pop %v748
  %v750 = vadd.f32 %v749, 1.0
  %v751 = vrcp.pop %v750
  %v752 = vmul.f32 1.0, %v751
  %v753 = vtanh.pop %v746
  %v755 = vrot.slane %v403, 7
  %v757 = vmul.f32 %v752, %v755
  %759 = vrot.lane.b32.xlu0 %v753, 64
  %v760 = vpop.permute.xlu0 %759
  %v762 = vmul.f32 %v752, %v760
  %764 = vrot.lane.b32.xlu0 %v762, 32
  %v765 = vpop.permute.xlu0 %764
  %v767 = vadd.f32 %v757, %v765
  %v768 = vtanh.pop %v767
  %770 = vrot.lane.b32.xlu0 %v768, 64
  %v771 = vpop.permute.xlu0 %770
  %v773 = vmul.f32 %v752, %v771
  %v775 = vrot.slane %v773, 1
  %776 = vrot.lane.b32.xlu0 %v775, 32
  %v777 = vpop.permute.xlu0 %776
  %v778 = vsel %vm70, %v777, 0
  %780 = vmatprep.subr.mxu0 0.0
  %781 = vmatpush1.msra.mxu0 %v18
  %782 = vmatprep.subr.mxu0 0.0
  %783 = vmatpush1.msra.mxu0 %v19
  %784 = vmatprep.subr.mxu0 0.0
  %785 = vmatpush1.msra.mxu0 %v20
  %786 = vmatprep.subr.mxu0 0.0
  %787 = vmatpush1.msra.mxu0 %v21
  %788 = vmatprep.subr.mxu0 0.0
  %789 = vmatpush1.msra.mxu0 0.0
  %790 = vmatprep.subr.mxu0 0.0
  %791 = vmatpush1.msra.mxu0 0.0
  %792 = vmatprep.subr.mxu0 0.0
  %793 = vmatpush1.msra.mxu0 0.0
  %794 = vmatprep.subr.mxu0 0.0
  %795 = vmatpush1.msra.mxu0 0.0
  %796 = vmatprep.subr.mxu0 0.0
  %797 = vmatpush1.msra.mxu0 0.0
  %798 = vmatprep.subr.mxu0 0.0
  %799 = vmatpush1.msra.mxu0 0.0
  %800 = vmatprep.subr.mxu0 0.0
  %801 = vmatpush1.msra.mxu0 0.0
  %802 = vmatprep.subr.mxu0 0.0
  %803 = vmatpush1.msra.mxu0 0.0
  %804 = vmatprep.subr.mxu0 0.0
  %805 = vmatpush1.msra.mxu0 0.0
  %806 = vmatprep.subr.mxu0 0.0
  %807 = vmatpush1.msra.mxu0 0.0
  %808 = vmatprep.subr.mxu0 0.0
  %809 = vmatpush1.msra.mxu0 0.0
  %810 = vmatprep.subr.mxu0 0.0
  %811 = vmatpush1.msra.mxu0 0.0
  %812 = vmatprep.subr.mxu0 0.0
  %813 = vmatpush1.msra.mxu0 0.0
  %814 = vmatprep.subr.mxu0 0.0
  %815 = vmatpush1.msra.mxu0 0.0
  %816 = vmatprep.subr.mxu0 0.0
  %817 = vmatpush1.msra.mxu0 0.0
  %818 = vmatprep.subr.mxu0 0.0
  %819 = vmatpush1.msra.mxu0 0.0
  %820 = vmatprep.subr.mxu0 0.0
  %821 = vmatpush1.msra.mxu0 0.0
  %822 = vmatprep.subr.mxu0 0.0
  %823 = vmatpush1.msra.mxu0 0.0
  %824 = vmatprep.subr.mxu0 0.0
  %825 = vmatpush1.msra.mxu0 0.0
  %826 = vmatprep.subr.mxu0 0.0
  %827 = vmatpush1.msra.mxu0 0.0
  %828 = vmatprep.subr.mxu0 0.0
  %829 = vmatpush1.msra.mxu0 0.0
  %830 = vmatprep.subr.mxu0 0.0
  %831 = vmatpush1.msra.mxu0 0.0
  %832 = vmatprep.subr.mxu0 0.0
  %833 = vmatpush1.msra.mxu0 0.0
  %834 = vmatprep.subr.mxu0 0.0
  %835 = vmatpush1.msra.mxu0 0.0
  %836 = vmatprep.subr.mxu0 0.0
  %837 = vmatpush1.msra.mxu0 0.0
  %838 = vmatprep.subr.mxu0 0.0
  %839 = vmatpush1.msra.mxu0 0.0
  %840 = vmatprep.subr.mxu0 0.0
  %841 = vmatpush1.msra.mxu0 0.0
  %842 = vmatprep.subr.mxu0 0.0
  %843 = vmatpush1.msra.mxu0 0.0
  %844 = vmatprep.mubr.f32.mxu0 0.0
  %845 = vmatmul.mubr.f32.gmra.mrb[0].mxu0 %v778
  %v846 = vpop.f32.mrb[0].mxu0
  %v847 = vadd.f32 %v670, %v846
  %v848 = vpop.f32.mrb[0].mxu0
  %849 = vdwg.mxu0
  %v850 = vadd.f32 %v847, %v27
  %v851 = vxor.u32 %v850, 2147483648
  %v852 = vmul.f32 %v851, 1.442695
  %v853 = vpow.pop %v852
  %v854 = vadd.f32 %v853, 1.0
  %v855 = vrcp.pop %v854
  %v856 = vmul.f32 1.0, %v855
  %v857 = vtanh.pop %v850
  %v858 = vmul.f32 %v856, %v503
  %860 = vrot.lane.b32.xlu0 %v857, 64
  %v861 = vpop.permute.xlu0 %860
  %v863 = vmul.f32 %v856, %v861
  %865 = vrot.lane.b32.xlu0 %v863, 32
  %v866 = vpop.permute.xlu0 %865
  %v868 = vadd.f32 %v858, %v866
  %v869 = vtanh.pop %v868
  %871 = vrot.lane.b32.xlu0 %v869, 64
  %v872 = vpop.permute.xlu0 %871
  %v874 = vmul.f32 %v856, %v872
  %876 = vrot.lane.b32.xlu0 %v874, 32
  %v877 = vpop.permute.xlu0 %876
  %v878 = vsel %vm70, %v877, 0
  %880 = vmatprep.subr.mxu0 0.0
  %881 = vmatpush1.msra.mxu0 %v514
  %882 = vmatprep.subr.mxu0 0.0
  %883 = vmatpush1.msra.mxu0 %v516
  %884 = vmatprep.subr.mxu0 0.0
  %885 = vmatpush1.msra.mxu0 %v518
  %886 = vmatprep.subr.mxu0 0.0
  %887 = vmatpush1.msra.mxu0 %v520
  %888 = vmatprep.subr.mxu0 0.0
  %889 = vmatpush1.msra.mxu0 0.0
  %890 = vmatprep.subr.mxu0 0.0
  %891 = vmatpush1.msra.mxu0 0.0
  %892 = vmatprep.subr.mxu0 0.0
  %893 = vmatpush1.msra.mxu0 0.0
  %894 = vmatprep.subr.mxu0 0.0
  %895 = vmatpush1.msra.mxu0 0.0
  %896 = vmatprep.subr.mxu0 0.0
  %897 = vmatpush1.msra.mxu0 0.0
  %898 = vmatprep.subr.mxu0 0.0
  %899 = vmatpush1.msra.mxu0 0.0
  %900 = vmatprep.subr.mxu0 0.0
  %901 = vmatpush1.msra.mxu0 0.0
  %902 = vmatprep.subr.mxu0 0.0
  %903 = vmatpush1.msra.mxu0 0.0
  %904 = vmatprep.subr.mxu0 0.0
  %905 = vmatpush1.msra.mxu0 0.0
  %906 = vmatprep.subr.mxu0 0.0
  %907 = vmatpush1.msra.mxu0 0.0
  %908 = vmatprep.subr.mxu0 0.0
  %909 = vmatpush1.msra.mxu0 0.0
  %910 = vmatprep.subr.mxu0 0.0
  %911 = vmatpush1.msra.mxu0 0.0
  %912 = vmatprep.subr.mxu0 0.0
  %913 = vmatpush1.msra.mxu0 0.0
  %914 = vmatprep.subr.mxu0 0.0
  %915 = vmatpush1.msra.mxu0 0.0
  %916 = vmatprep.subr.mxu0 0.0
  %917 = vmatpush1.msra.mxu0 0.0
  %918 = vmatprep.subr.mxu0 0.0
  %919 = vmatpush1.msra.mxu0 0.0
  %920 = vmatprep.subr.mxu0 0.0
  %921 = vmatpush1.msra.mxu0 0.0
  %922 = vmatprep.subr.mxu0 0.0
  %923 = vmatpush1.msra.mxu0 0.0
  %924 = vmatprep.subr.mxu0 0.0
  %925 = vmatpush1.msra.mxu0 0.0
  %926 = vmatprep.subr.mxu0 0.0
  %927 = vmatpush1.msra.mxu0 0.0
  %928 = vmatprep.subr.mxu0 0.0
  %929 = vmatpush1.msra.mxu0 0.0
  %930 = vmatprep.subr.mxu0 0.0
  %931 = vmatpush1.msra.mxu0 0.0
  %932 = vmatprep.subr.mxu0 0.0
  %933 = vmatpush1.msra.mxu0 0.0
  %934 = vmatprep.subr.mxu0 0.0
  %935 = vmatpush1.msra.mxu0 0.0
  %936 = vmatprep.subr.mxu0 0.0
  %937 = vmatpush1.msra.mxu0 0.0
  %938 = vmatprep.subr.mxu0 0.0
  %939 = vmatpush1.msra.mxu0 0.0
  %940 = vmatprep.subr.mxu0 0.0
  %941 = vmatpush1.msra.mxu0 0.0
  %942 = vmatprep.subr.mxu0 0.0
  %943 = vmatpush1.msra.mxu0 0.0
  %944 = vmatprep.mubr.f32.mxu0 0.0
  %945 = vmatmul.mubr.f32.gmra.mrb[0].mxu0 %v878
  %v946 = vpop.f32.mrb[0].mxu0
  %v947 = vadd.f32 %v527, %v946
  %v948 = vpop.f32.mrb[0].mxu0
  %949 = vdwg.mxu0
  %950 = vst.msk [vmem:[%s2 + $0x1] sm:$0x1] %vm601, %v947
  %v952 = vrot.slane %v146, 4
  %vm953 = vcmask 31744
  %v955 = vsel %vm953, %v947, 0
  %vm957 = vcmask 1043456
  %v958 = vsel %vm957, %v952, 0
  %960 = vmatprep.subr.mxu0 0.0
  %961 = vmatpush1.msra.mxu0 %v958
  %962 = vmatprep.subr.mxu0 0.0
  %963 = vmatpush1.msra.mxu0 0.0
  %964 = vmatprep.subr.mxu0 0.0
  %965 = vmatpush1.msra.mxu0 0.0
  %966 = vmatprep.subr.mxu0 0.0
  %967 = vmatpush1.msra.mxu0 0.0
  %968 = vmatprep.subr.mxu0 0.0
  %969 = vmatpush1.msra.mxu0 0.0
  %970 = vmatprep.subr.mxu0 0.0
  %971 = vmatpush1.msra.mxu0 0.0
  %972 = vmatprep.subr.mxu0 0.0
  %973 = vmatpush1.msra.mxu0 0.0
  %974 = vmatprep.subr.mxu0 0.0
  %975 = vmatpush1.msra.mxu0 0.0
  %976 = vmatprep.subr.mxu0 0.0
  %977 = vmatpush1.msra.mxu0 0.0
  %978 = vmatprep.subr.mxu0 0.0
  %979 = vmatpush1.msra.mxu0 0.0
  %980 = vmatprep.subr.mxu0 0.0
  %981 = vmatpush1.msra.mxu0 0.0
  %982 = vmatprep.subr.mxu0 0.0
  %983 = vmatpush1.msra.mxu0 0.0
  %984 = vmatprep.subr.mxu0 0.0
  %985 = vmatpush1.msra.mxu0 0.0
  %986 = vmatprep.subr.mxu0 0.0
  %987 = vmatpush1.msra.mxu0 0.0
  %988 = vmatprep.subr.mxu0 0.0
  %989 = vmatpush1.msra.mxu0 0.0
  %990 = vmatprep.subr.mxu0 0.0
  %991 = vmatpush1.msra.mxu0 0.0
  %992 = vmatprep.subr.mxu0 0.0
  %993 = vmatpush1.msra.mxu0 0.0
  %994 = vmatprep.subr.mxu0 0.0
  %995 = vmatpush1.msra.mxu0 0.0
  %996 = vmatprep.subr.mxu0 0.0
  %997 = vmatpush1.msra.mxu0 0.0
  %998 = vmatprep.subr.mxu0 0.0
  %999 = vmatpush1.msra.mxu0 0.0
  %1000 = vmatprep.subr.mxu0 0.0
  %1001 = vmatpush1.msra.mxu0 0.0
  %1002 = vmatprep.subr.mxu0 0.0
  %1003 = vmatpush1.msra.mxu0 0.0
  %1004 = vmatprep.subr.mxu0 0.0
  %1005 = vmatpush1.msra.mxu0 0.0
  %1006 = vmatprep.subr.mxu0 0.0
  %1007 = vmatpush1.msra.mxu0 0.0
  %1008 = vmatprep.subr.mxu0 0.0
  %1009 = vmatpush1.msra.mxu0 0.0
  %1010 = vmatprep.subr.mxu0 0.0
  %1011 = vmatpush1.msra.mxu0 0.0
  %1012 = vmatprep.subr.mxu0 0.0
  %1013 = vmatpush1.msra.mxu0 0.0
  %1014 = vmatprep.subr.mxu0 0.0
  %1015 = vmatpush1.msra.mxu0 0.0
  %1016 = vmatprep.subr.mxu0 0.0
  %1017 = vmatpush1.msra.mxu0 0.0
  %1018 = vmatprep.subr.mxu0 0.0
  %1019 = vmatpush1.msra.mxu0 0.0
  %1020 = vmatprep.subr.mxu0 0.0
  %1021 = vmatpush1.msra.mxu0 0.0
  %1022 = vmatprep.subr.mxu0 0.0
  %1023 = vmatpush1.msra.mxu0 0.0
  %1024 = vmatprep.mubr.f32.mxu0 0.0
  %1025 = vmatmul.mubr.f32.gmra.mrb[0].mxu0 %v955
  %v1026 = vpop.f32.mrb[0].mxu0
  %v1027 = vadd.f32 0.0, %v1026
  %v1028 = vpop.f32.mrb[0].mxu0
  %1029 = vdwg.mxu0
  %v1031 = vsel %vm953, %v598, 0
  %v1033 = vsel %vm957, %v146, 0
  %1035 = vmatprep.subr.mxu0 0.0
  %1036 = vmatpush1.msra.mxu0 %v1033
  %1037 = vmatprep.subr.mxu0 0.0
  %1038 = vmatpush1.msra.mxu0 0.0
  %1039 = vmatprep.subr.mxu0 0.0
  %1040 = vmatpush1.msra.mxu0 0.0
  %1041 = vmatprep.subr.mxu0 0.0
  %1042 = vmatpush1.msra.mxu0 0.0
  %1043 = vmatprep.subr.mxu0 0.0
  %1044 = vmatpush1.msra.mxu0 0.0
  %1045 = vmatprep.subr.mxu0 0.0
  %1046 = vmatpush1.msra.mxu0 0.0
  %1047 = vmatprep.subr.mxu0 0.0
  %1048 = vmatpush1.msra.mxu0 0.0
  %1049 = vmatprep.subr.mxu0 0.0
  %1050 = vmatpush1.msra.mxu0 0.0
  %1051 = vmatprep.subr.mxu0 0.0
  %1052 = vmatpush1.msra.mxu0 0.0
  %1053 = vmatprep.subr.mxu0 0.0
  %1054 = vmatpush1.msra.mxu0 0.0
  %1055 = vmatprep.subr.mxu0 0.0
  %1056 = vmatpush1.msra.mxu0 0.0
  %1057 = vmatprep.subr.mxu0 0.0
  %1058 = vmatpush1.msra.mxu0 0.0
  %1059 = vmatprep.subr.mxu0 0.0
  %1060 = vmatpush1.msra.mxu0 0.0
  %1061 = vmatprep.subr.mxu0 0.0
  %1062 = vmatpush1.msra.mxu0 0.0
  %1063 = vmatprep.subr.mxu0 0.0
  %1064 = vmatpush1.msra.mxu0 0.0
  %1065 = vmatprep.subr.mxu0 0.0
  %1066 = vmatpush1.msra.mxu0 0.0
  %1067 = vmatprep.subr.mxu0 0.0
  %1068 = vmatpush1.msra.mxu0 0.0
  %1069 = vmatprep.subr.mxu0 0.0
  %1070 = vmatpush1.msra.mxu0 0.0
  %1071 = vmatprep.subr.mxu0 0.0
  %1072 = vmatpush1.msra.mxu0 0.0
  %1073 = vmatprep.subr.mxu0 0.0
  %1074 = vmatpush1.msra.mxu0 0.0
  %1075 = vmatprep.subr.mxu0 0.0
  %1076 = vmatpush1.msra.mxu0 0.0
  %1077 = vmatprep.subr.mxu0 0.0
  %1078 = vmatpush1.msra.mxu0 0.0
  %1079 = vmatprep.subr.mxu0 0.0
  %1080 = vmatpush1.msra.mxu0 0.0
  %1081 = vmatprep.subr.mxu0 0.0
  %1082 = vmatpush1.msra.mxu0 0.0
  %1083 = vmatprep.subr.mxu0 0.0
  %1084 = vmatpush1.msra.mxu0 0.0
  %1085 = vmatprep.subr.mxu0 0.0
  %1086 = vmatpush1.msra.mxu0 0.0
  %1087 = vmatprep.subr.mxu0 0.0
  %1088 = vmatpush1.msra.mxu0 0.0
  %1089 = vmatprep.subr.mxu0 0.0
  %1090 = vmatpush1.msra.mxu0 0.0
  %1091 = vmatprep.subr.mxu0 0.0
  %1092 = vmatpush1.msra.mxu0 0.0
  %1093 = vmatprep.subr.mxu0 0.0
  %1094 = vmatpush1.msra.mxu0 0.0
  %1095 = vmatprep.subr.mxu0 0.0
  %1096 = vmatpush1.msra.mxu0 0.0
  %1097 = vmatprep.subr.mxu0 0.0
  %1098 = vmatpush1.msra.mxu0 0.0
  %1099 = vmatprep.mubr.f32.mxu0 0.0
  %1100 = vmatmul.mubr.f32.gmra.mrb[0].mxu0 %v1031
  %v1101 = vpop.f32.mrb[0].mxu0
  %v1102 = vadd.f32 %v1027, %v1101
  %v1103 = vpop.f32.mrb[0].mxu0
  %1104 = vdwg.mxu0
  %1105 = vmatprep.subr.mxu0 0.0
  %1106 = vmatpush1.msra.mxu0 %v22
  %1107 = vmatprep.subr.mxu0 0.0
  %1108 = vmatpush1.msra.mxu0 %v23
  %1109 = vmatprep.subr.mxu0 0.0
  %1110 = vmatpush1.msra.mxu0 %v24
  %1111 = vmatprep.subr.mxu0 0.0
  %1112 = vmatpush1.msra.mxu0 %v25
  %1113 = vmatprep.subr.mxu0 0.0
  %1114 = vmatpush1.msra.mxu0 0.0
  %1115 = vmatprep.subr.mxu0 0.0
  %1116 = vmatpush1.msra.mxu0 0.0
  %1117 = vmatprep.subr.mxu0 0.0
  %1118 = vmatpush1.msra.mxu0 0.0
  %1119 = vmatprep.subr.mxu0 0.0
  %1120 = vmatpush1.msra.mxu0 0.0
  %1121 = vmatprep.subr.mxu0 0.0
  %1122 = vmatpush1.msra.mxu0 0.0
  %1123 = vmatprep.subr.mxu0 0.0
  %1124 = vmatpush1.msra.mxu0 0.0
  %1125 = vmatprep.subr.mxu0 0.0
  %1126 = vmatpush1.msra.mxu0 0.0
  %1127 = vmatprep.subr.mxu0 0.0
  %1128 = vmatpush1.msra.mxu0 0.0
  %1129 = vmatprep.subr.mxu0 0.0
  %1130 = vmatpush1.msra.mxu0 0.0
  %1131 = vmatprep.subr.mxu0 0.0
  %1132 = vmatpush1.msra.mxu0 0.0
  %1133 = vmatprep.subr.mxu0 0.0
  %1134 = vmatpush1.msra.mxu0 0.0
  %1135 = vmatprep.subr.mxu0 0.0
  %1136 = vmatpush1.msra.mxu0 0.0
  %1137 = vmatprep.subr.mxu0 0.0
  %1138 = vmatpush1.msra.mxu0 0.0
  %1139 = vmatprep.subr.mxu0 0.0
  %1140 = vmatpush1.msra.mxu0 0.0
  %1141 = vmatprep.subr.mxu0 0.0
  %1142 = vmatpush1.msra.mxu0 0.0
  %1143 = vmatprep.subr.mxu0 0.0
  %1144 = vmatpush1.msra.mxu0 0.0
  %1145 = vmatprep.subr.mxu0 0.0
  %1146 = vmatpush1.msra.mxu0 0.0
  %1147 = vmatprep.subr.mxu0 0.0
  %1148 = vmatpush1.msra.mxu0 0.0
  %1149 = vmatprep.subr.mxu0 0.0
  %1150 = vmatpush1.msra.mxu0 0.0
  %1151 = vmatprep.subr.mxu0 0.0
  %1152 = vmatpush1.msra.mxu0 0.0
  %1153 = vmatprep.subr.mxu0 0.0
  %1154 = vmatpush1.msra.mxu0 0.0
  %1155 = vmatprep.subr.mxu0 0.0
  %1156 = vmatpush1.msra.mxu0 0.0
  %1157 = vmatprep.subr.mxu0 0.0
  %1158 = vmatpush1.msra.mxu0 0.0
  %1159 = vmatprep.subr.mxu0 0.0
  %1160 = vmatpush1.msra.mxu0 0.0
  %1161 = vmatprep.subr.mxu0 0.0
  %1162 = vmatpush1.msra.mxu0 0.0
  %1163 = vmatprep.subr.mxu0 0.0
  %1164 = vmatpush1.msra.mxu0 0.0
  %1165 = vmatprep.subr.mxu0 0.0
  %1166 = vmatpush1.msra.mxu0 0.0
  %1167 = vmatprep.subr.mxu0 0.0
  %1168 = vmatpush1.msra.mxu0 0.0
  %1169 = vmatprep.mubr.f32.mxu0 0.0
  %1170 = vmatmul.mubr.f32.gmra.mrb[0].mxu0 %v878
  %v1171 = vpop.f32.mrb[0].mxu0
  %v1172 = vadd.f32 0.0, %v1171
  %v1173 = vpop.f32.mrb[0].mxu0
  %1174 = vdwg.mxu0
  %1175 = vmatprep.subr.mxu0 0.0
  %1176 = vmatpush1.msra.mxu0 %v14
  %1177 = vmatprep.subr.mxu0 0.0
  %1178 = vmatpush1.msra.mxu0 %v15
  %1179 = vmatprep.subr.mxu0 0.0
  %1180 = vmatpush1.msra.mxu0 %v16
  %1181 = vmatprep.subr.mxu0 0.0
  %1182 = vmatpush1.msra.mxu0 %v17
  %1183 = vmatprep.subr.mxu0 0.0
  %1184 = vmatpush1.msra.mxu0 0.0
  %1185 = vmatprep.subr.mxu0 0.0
  %1186 = vmatpush1.msra.mxu0 0.0
  %1187 = vmatprep.subr.mxu0 0.0
  %1188 = vmatpush1.msra.mxu0 0.0
  %1189 = vmatprep.subr.mxu0 0.0
  %1190 = vmatpush1.msra.mxu0 0.0
  %1191 = vmatprep.subr.mxu0 0.0
  %1192 = vmatpush1.msra.mxu0 0.0
  %1193 = vmatprep.subr.mxu0 0.0
  %1194 = vmatpush1.msra.mxu0 0.0
  %1195 = vmatprep.subr.mxu0 0.0
  %1196 = vmatpush1.msra.mxu0 0.0
  %1197 = vmatprep.subr.mxu0 0.0
  %1198 = vmatpush1.msra.mxu0 0.0
  %1199 = vmatprep.subr.mxu0 0.0
  %1200 = vmatpush1.msra.mxu0 0.0
  %1201 = vmatprep.subr.mxu0 0.0
  %1202 = vmatpush1.msra.mxu0 0.0
  %1203 = vmatprep.subr.mxu0 0.0
  %1204 = vmatpush1.msra.mxu0 0.0
  %1205 = vmatprep.subr.mxu0 0.0
  %1206 = vmatpush1.msra.mxu0 0.0
  %1207 = vmatprep.subr.mxu0 0.0
  %1208 = vmatpush1.msra.mxu0 0.0
  %1209 = vmatprep.subr.mxu0 0.0
  %1210 = vmatpush1.msra.mxu0 0.0
  %1211 = vmatprep.subr.mxu0 0.0
  %1212 = vmatpush1.msra.mxu0 0.0
  %1213 = vmatprep.subr.mxu0 0.0
  %1214 = vmatpush1.msra.mxu0 0.0
  %1215 = vmatprep.subr.mxu0 0.0
  %1216 = vmatpush1.msra.mxu0 0.0
  %1217 = vmatprep.subr.mxu0 0.0
  %1218 = vmatpush1.msra.mxu0 0.0
  %1219 = vmatprep.subr.mxu0 0.0
  %1220 = vmatpush1.msra.mxu0 0.0
  %1221 = vmatprep.subr.mxu0 0.0
  %1222 = vmatpush1.msra.mxu0 0.0
  %1223 = vmatprep.subr.mxu0 0.0
  %1224 = vmatpush1.msra.mxu0 0.0
  %1225 = vmatprep.subr.mxu0 0.0
  %1226 = vmatpush1.msra.mxu0 0.0
  %1227 = vmatprep.subr.mxu0 0.0
  %1228 = vmatpush1.msra.mxu0 0.0
  %1229 = vmatprep.subr.mxu0 0.0
  %1230 = vmatpush1.msra.mxu0 0.0
  %1231 = vmatprep.subr.mxu0 0.0
  %1232 = vmatpush1.msra.mxu0 0.0
  %1233 = vmatprep.subr.mxu0 0.0
  %1234 = vmatpush1.msra.mxu0 0.0
  %1235 = vmatprep.subr.mxu0 0.0
  %1236 = vmatpush1.msra.mxu0 0.0
  %1237 = vmatprep.subr.mxu0 0.0
  %1238 = vmatpush1.msra.mxu0 0.0
  %1239 = vmatprep.mubr.f32.mxu0 0.0
  %1240 = vmatmul.mubr.f32.gmra.mrb[0].mxu0 %v778
  %v1241 = vpop.f32.mrb[0].mxu0
  %v1242 = vadd.f32 0.0, %v1241
  %v1243 = vpop.f32.mrb[0].mxu0
  %1244 = vdwg.mxu0
  %v1246 = vrot.slane %v1242, 6
  %v1248 = vadd.f32 %v239, %v1246
  %v1249 = vxor.u32 %v1248, 2147483648
  %v1250 = vmul.f32 %v1249, 1.442695
  %v1251 = vpow.pop %v1250
  %v1252 = vadd.f32 %v1251, 1.0
  %v1253 = vrcp.pop %v1252
  %v1254 = vmul.f32 1.0, %v1253
  %v1255 = vtanh.pop %v1248
  %v1257 = vrot.slane %v767, 7
  %v1259 = vmul.f32 %v1254, %v1257
  %1261 = vrot.lane.b32.xlu0 %v1255, 64
  %v1262 = vpop.permute.xlu0 %1261
  %v1264 = vmul.f32 %v1254, %v1262
  %1266 = vrot.lane.b32.xlu0 %v1264, 32
  %v1267 = vpop.permute.xlu0 %1266
  %v1269 = vadd.f32 %v1259, %v1267
  %v1270 = vtanh.pop %v1269
  %1272 = vrot.lane.b32.xlu0 %v1270, 64
  %v1273 = vpop.permute.xlu0 %1272
  %v1275 = vmul.f32 %v1254, %v1273
  %v1277 = vrot.slane %v1275, 2
  %1278 = vrot.lane.b32.xlu0 %v1277, 32
  %v1279 = vpop.permute.xlu0 %1278
  %v1280 = vsel %vm70, %v1279, 0
  %1282 = vmatprep.subr.mxu0 0.0
  %1283 = vmatpush1.msra.mxu0 %v18
  %1284 = vmatprep.subr.mxu0 0.0
  %1285 = vmatpush1.msra.mxu0 %v19
  %1286 = vmatprep.subr.mxu0 0.0
  %1287 = vmatpush1.msra.mxu0 %v20
  %1288 = vmatprep.subr.mxu0 0.0
  %1289 = vmatpush1.msra.mxu0 %v21
  %1290 = vmatprep.subr.mxu0 0.0
  %1291 = vmatpush1.msra.mxu0 0.0
  %1292 = vmatprep.subr.mxu0 0.0
  %1293 = vmatpush1.msra.mxu0 0.0
  %1294 = vmatprep.subr.mxu0 0.0
  %1295 = vmatpush1.msra.mxu0 0.0
  %1296 = vmatprep.subr.mxu0 0.0
  %1297 = vmatpush1.msra.mxu0 0.0
  %1298 = vmatprep.subr.mxu0 0.0
  %1299 = vmatpush1.msra.mxu0 0.0
  %1300 = vmatprep.subr.mxu0 0.0
  %1301 = vmatpush1.msra.mxu0 0.0
  %1302 = vmatprep.subr.mxu0 0.0
  %1303 = vmatpush1.msra.mxu0 0.0
  %1304 = vmatprep.subr.mxu0 0.0
  %1305 = vmatpush1.msra.mxu0 0.0
  %1306 = vmatprep.subr.mxu0 0.0
  %1307 = vmatpush1.msra.mxu0 0.0
  %1308 = vmatprep.subr.mxu0 0.0
  %1309 = vmatpush1.msra.mxu0 0.0
  %1310 = vmatprep.subr.mxu0 0.0
  %1311 = vmatpush1.msra.mxu0 0.0
  %1312 = vmatprep.subr.mxu0 0.0
  %1313 = vmatpush1.msra.mxu0 0.0
  %1314 = vmatprep.subr.mxu0 0.0
  %1315 = vmatpush1.msra.mxu0 0.0
  %1316 = vmatprep.subr.mxu0 0.0
  %1317 = vmatpush1.msra.mxu0 0.0
  %1318 = vmatprep.subr.mxu0 0.0
  %1319 = vmatpush1.msra.mxu0 0.0
  %1320 = vmatprep.subr.mxu0 0.0
  %1321 = vmatpush1.msra.mxu0 0.0
  %1322 = vmatprep.subr.mxu0 0.0
  %1323 = vmatpush1.msra.mxu0 0.0
  %1324 = vmatprep.subr.mxu0 0.0
  %1325 = vmatpush1.msra.mxu0 0.0
  %1326 = vmatprep.subr.mxu0 0.0
  %1327 = vmatpush1.msra.mxu0 0.0
  %1328 = vmatprep.subr.mxu0 0.0
  %1329 = vmatpush1.msra.mxu0 0.0
  %1330 = vmatprep.subr.mxu0 0.0
  %1331 = vmatpush1.msra.mxu0 0.0
  %1332 = vmatprep.subr.mxu0 0.0
  %1333 = vmatpush1.msra.mxu0 0.0
  %1334 = vmatprep.subr.mxu0 0.0
  %1335 = vmatpush1.msra.mxu0 0.0
  %1336 = vmatprep.subr.mxu0 0.0
  %1337 = vmatpush1.msra.mxu0 0.0
  %1338 = vmatprep.subr.mxu0 0.0
  %1339 = vmatpush1.msra.mxu0 0.0
  %1340 = vmatprep.subr.mxu0 0.0
  %1341 = vmatpush1.msra.mxu0 0.0
  %1342 = vmatprep.subr.mxu0 0.0
  %1343 = vmatpush1.msra.mxu0 0.0
  %1344 = vmatprep.subr.mxu0 0.0
  %1345 = vmatpush1.msra.mxu0 0.0
  %1346 = vmatprep.mubr.f32.mxu0 0.0
  %1347 = vmatmul.mubr.f32.gmra.mrb[0].mxu0 %v1280
  %v1348 = vpop.f32.mrb[0].mxu0
  %v1349 = vadd.f32 %v1172, %v1348
  %v1350 = vpop.f32.mrb[0].mxu0
  %1351 = vdwg.mxu0
  %v1352 = vadd.f32 %v1349, %v27
  %v1353 = vxor.u32 %v1352, 2147483648
  %v1354 = vmul.f32 %v1353, 1.442695
  %v1355 = vpow.pop %v1354
  %v1356 = vadd.f32 %v1355, 1.0
  %v1357 = vrcp.pop %v1356
  %v1358 = vmul.f32 1.0, %v1357
  %v1359 = vtanh.pop %v1352
  %v1360 = vmul.f32 %v1358, %v868
  %1362 = vrot.lane.b32.xlu0 %v1359, 64
  %v1363 = vpop.permute.xlu0 %1362
  %v1365 = vmul.f32 %v1358, %v1363
  %1367 = vrot.lane.b32.xlu0 %v1365, 32
  %v1368 = vpop.permute.xlu0 %1367
  %v1370 = vadd.f32 %v1360, %v1368
  %v1371 = vtanh.pop %v1370
  %1373 = vrot.lane.b32.xlu0 %v1371, 64
  %v1374 = vpop.permute.xlu0 %1373
  %v1376 = vmul.f32 %v1358, %v1374
  %1378 = vrot.lane.b32.xlu0 %v1376, 32
  %v1379 = vpop.permute.xlu0 %1378
  %v1380 = vsel %vm70, %v1379, 0
  %1382 = vmatprep.subr.mxu0 0.0
  %1383 = vmatpush1.msra.mxu0 %v514
  %1384 = vmatprep.subr.mxu0 0.0
  %1385 = vmatpush1.msra.mxu0 %v516
  %1386 = vmatprep.subr.mxu0 0.0
  %1387 = vmatpush1.msra.mxu0 %v518
  %1388 = vmatprep.subr.mxu0 0.0
  %1389 = vmatpush1.msra.mxu0 %v520
  %1390 = vmatprep.subr.mxu0 0.0
  %1391 = vmatpush1.msra.mxu0 0.0
  %1392 = vmatprep.subr.mxu0 0.0
  %1393 = vmatpush1.msra.mxu0 0.0
  %1394 = vmatprep.subr.mxu0 0.0
  %1395 = vmatpush1.msra.mxu0 0.0
  %1396 = vmatprep.subr.mxu0 0.0
  %1397 = vmatpush1.msra.mxu0 0.0
  %1398 = vmatprep.subr.mxu0 0.0
  %1399 = vmatpush1.msra.mxu0 0.0
  %1400 = vmatprep.subr.mxu0 0.0
  %1401 = vmatpush1.msra.mxu0 0.0
  %1402 = vmatprep.subr.mxu0 0.0
  %1403 = vmatpush1.msra.mxu0 0.0
  %1404 = vmatprep.subr.mxu0 0.0
  %1405 = vmatpush1.msra.mxu0 0.0
  %1406 = vmatprep.subr.mxu0 0.0
  %1407 = vmatpush1.msra.mxu0 0.0
  %1408 = vmatprep.subr.mxu0 0.0
  %1409 = vmatpush1.msra.mxu0 0.0
  %1410 = vmatprep.subr.mxu0 0.0
  %1411 = vmatpush1.msra.mxu0 0.0
  %1412 = vmatprep.subr.mxu0 0.0
  %1413 = vmatpush1.msra.mxu0 0.0
  %1414 = vmatprep.subr.mxu0 0.0
  %1415 = vmatpush1.msra.mxu0 0.0
  %1416 = vmatprep.subr.mxu0 0.0
  %1417 = vmatpush1.msra.mxu0 0.0
  %1418 = vmatprep.subr.mxu0 0.0
  %1419 = vmatpush1.msra.mxu0 0.0
  %1420 = vmatprep.subr.mxu0 0.0
  %1421 = vmatpush1.msra.mxu0 0.0
  %1422 = vmatprep.subr.mxu0 0.0
  %1423 = vmatpush1.msra.mxu0 0.0
  %1424 = vmatprep.subr.mxu0 0.0
  %1425 = vmatpush1.msra.mxu0 0.0
  %1426 = vmatprep.subr.mxu0 0.0
  %1427 = vmatpush1.msra.mxu0 0.0
  %1428 = vmatprep.subr.mxu0 0.0
  %1429 = vmatpush1.msra.mxu0 0.0
  %1430 = vmatprep.subr.mxu0 0.0
  %1431 = vmatpush1.msra.mxu0 0.0
  %1432 = vmatprep.subr.mxu0 0.0
  %1433 = vmatpush1.msra.mxu0 0.0
  %1434 = vmatprep.subr.mxu0 0.0
  %1435 = vmatpush1.msra.mxu0 0.0
  %1436 = vmatprep.subr.mxu0 0.0
  %1437 = vmatpush1.msra.mxu0 0.0
  %1438 = vmatprep.subr.mxu0 0.0
  %1439 = vmatpush1.msra.mxu0 0.0
  %1440 = vmatprep.subr.mxu0 0.0
  %1441 = vmatpush1.msra.mxu0 0.0
  %1442 = vmatprep.subr.mxu0 0.0
  %1443 = vmatpush1.msra.mxu0 0.0
  %1444 = vmatprep.subr.mxu0 0.0
  %1445 = vmatpush1.msra.mxu0 0.0
  %1446 = vmatprep.mubr.f32.mxu0 0.0
  %1447 = vmatmul.mubr.f32.gmra.mrb[0].mxu0 %v1380
  %v1448 = vpop.f32.mrb[0].mxu0
  %v1449 = vadd.f32 %v527, %v1448
  %v1450 = vpop.f32.mrb[0].mxu0
  %1451 = vdwg.mxu0
  %1452 = vst.msk [vmem:[%s2 + $0x2] sm:$0x1] %vm601, %v1449
  %v1454 = vsel %vm953, %v1449, 0
  %v1457 = vsel %vm957, %v151, 0
  %1459 = vmatprep.subr.mxu0 0.0
  %1460 = vmatpush1.msra.mxu0 %v1457
  %1461 = vmatprep.subr.mxu0 0.0
  %1462 = vmatpush1.msra.mxu0 0.0
  %1463 = vmatprep.subr.mxu0 0.0
  %1464 = vmatpush1.msra.mxu0 0.0
  %1465 = vmatprep.subr.mxu0 0.0
  %1466 = vmatpush1.msra.mxu0 0.0
  %1467 = vmatprep.subr.mxu0 0.0
  %1468 = vmatpush1.msra.mxu0 0.0
  %1469 = vmatprep.subr.mxu0 0.0
  %1470 = vmatpush1.msra.mxu0 0.0
  %1471 = vmatprep.subr.mxu0 0.0
  %1472 = vmatpush1.msra.mxu0 0.0
  %1473 = vmatprep.subr.mxu0 0.0
  %1474 = vmatpush1.msra.mxu0 0.0
  %1475 = vmatprep.subr.mxu0 0.0
  %1476 = vmatpush1.msra.mxu0 0.0
  %1477 = vmatprep.subr.mxu0 0.0
  %1478 = vmatpush1.msra.mxu0 0.0
  %1479 = vmatprep.subr.mxu0 0.0
  %1480 = vmatpush1.msra.mxu0 0.0
  %1481 = vmatprep.subr.mxu0 0.0
  %1482 = vmatpush1.msra.mxu0 0.0
  %1483 = vmatprep.subr.mxu0 0.0
  %1484 = vmatpush1.msra.mxu0 0.0
  %1485 = vmatprep.subr.mxu0 0.0
  %1486 = vmatpush1.msra.mxu0 0.0
  %1487 = vmatprep.subr.mxu0 0.0
  %1488 = vmatpush1.msra.mxu0 0.0
  %1489 = vmatprep.subr.mxu0 0.0
  %1490 = vmatpush1.msra.mxu0 0.0
  %1491 = vmatprep.subr.mxu0 0.0
  %1492 = vmatpush1.msra.mxu0 0.0
  %1493 = vmatprep.subr.mxu0 0.0
  %1494 = vmatpush1.msra.mxu0 0.0
  %1495 = vmatprep.subr.mxu0 0.0
  %1496 = vmatpush1.msra.mxu0 0.0
  %1497 = vmatprep.subr.mxu0 0.0
  %1498 = vmatpush1.msra.mxu0 0.0
  %1499 = vmatprep.subr.mxu0 0.0
  %1500 = vmatpush1.msra.mxu0 0.0
  %1501 = vmatprep.subr.mxu0 0.0
  %1502 = vmatpush1.msra.mxu0 0.0
  %1503 = vmatprep.subr.mxu0 0.0
  %1504 = vmatpush1.msra.mxu0 0.0
  %1505 = vmatprep.subr.mxu0 0.0
  %1506 = vmatpush1.msra.mxu0 0.0
  %1507 = vmatprep.subr.mxu0 0.0
  %1508 = vmatpush1.msra.mxu0 0.0
  %1509 = vmatprep.subr.mxu0 0.0
  %1510 = vmatpush1.msra.mxu0 0.0
  %1511 = vmatprep.subr.mxu0 0.0
  %1512 = vmatpush1.msra.mxu0 0.0
  %1513 = vmatprep.subr.mxu0 0.0
  %1514 = vmatpush1.msra.mxu0 0.0
  %1515 = vmatprep.subr.mxu0 0.0
  %1516 = vmatpush1.msra.mxu0 0.0
  %1517 = vmatprep.subr.mxu0 0.0
  %1518 = vmatpush1.msra.mxu0 0.0
  %1519 = vmatprep.subr.mxu0 0.0
  %1520 = vmatpush1.msra.mxu0 0.0
  %1521 = vmatprep.subr.mxu0 0.0
  %1522 = vmatpush1.msra.mxu0 0.0
  %1523 = vmatprep.mubr.f32.mxu0 0.0
  %1524 = vmatmul.mubr.f32.gmra.mrb[0].mxu0 %v1454
  %v1525 = vpop.f32.mrb[0].mxu0
  %v1526 = vadd.f32 0.0, %v1525
  %v1527 = vpop.f32.mrb[0].mxu0
  %1528 = vdwg.mxu0
  %v1529 = vadd.f32 %v1102, %v1526
  %1530 = vmatprep.subr.mxu0 0.0
  %1531 = vmatpush1.msra.mxu0 %v22
  %1532 = vmatprep.subr.mxu0 0.0
  %1533 = vmatpush1.msra.mxu0 %v23
  %1534 = vmatprep.subr.mxu0 0.0
  %1535 = vmatpush1.msra.mxu0 %v24
  %1536 = vmatprep.subr.mxu0 0.0
  %1537 = vmatpush1.msra.mxu0 %v25
  %1538 = vmatprep.subr.mxu0 0.0
  %1539 = vmatpush1.msra.mxu0 0.0
  %1540 = vmatprep.subr.mxu0 0.0
  %1541 = vmatpush1.msra.mxu0 0.0
  %1542 = vmatprep.subr.mxu0 0.0
  %1543 = vmatpush1.msra.mxu0 0.0
  %1544 = vmatprep.subr.mxu0 0.0
  %1545 = vmatpush1.msra.mxu0 0.0
  %1546 = vmatprep.subr.mxu0 0.0
  %1547 = vmatpush1.msra.mxu0 0.0
  %1548 = vmatprep.subr.mxu0 0.0
  %1549 = vmatpush1.msra.mxu0 0.0
  %1550 = vmatprep.subr.mxu0 0.0
  %1551 = vmatpush1.msra.mxu0 0.0
  %1552 = vmatprep.subr.mxu0 0.0
  %1553 = vmatpush1.msra.mxu0 0.0
  %1554 = vmatprep.subr.mxu0 0.0
  %1555 = vmatpush1.msra.mxu0 0.0
  %1556 = vmatprep.subr.mxu0 0.0
  %1557 = vmatpush1.msra.mxu0 0.0
  %1558 = vmatprep.subr.mxu0 0.0
  %1559 = vmatpush1.msra.mxu0 0.0
  %1560 = vmatprep.subr.mxu0 0.0
  %1561 = vmatpush1.msra.mxu0 0.0
  %1562 = vmatprep.subr.mxu0 0.0
  %1563 = vmatpush1.msra.mxu0 0.0
  %1564 = vmatprep.subr.mxu0 0.0
  %1565 = vmatpush1.msra.mxu0 0.0
  %1566 = vmatprep.subr.mxu0 0.0
  %1567 = vmatpush1.msra.mxu0 0.0
  %1568 = vmatprep.subr.mxu0 0.0
  %1569 = vmatpush1.msra.mxu0 0.0
  %1570 = vmatprep.subr.mxu0 0.0
  %1571 = vmatpush1.msra.mxu0 0.0
  %1572 = vmatprep.subr.mxu0 0.0
  %1573 = vmatpush1.msra.mxu0 0.0
  %1574 = vmatprep.subr.mxu0 0.0
  %1575 = vmatpush1.msra.mxu0 0.0
  %1576 = vmatprep.subr.mxu0 0.0
  %1577 = vmatpush1.msra.mxu0 0.0
  %1578 = vmatprep.subr.mxu0 0.0
  %1579 = vmatpush1.msra.mxu0 0.0
  %1580 = vmatprep.subr.mxu0 0.0
  %1581 = vmatpush1.msra.mxu0 0.0
  %1582 = vmatprep.subr.mxu0 0.0
  %1583 = vmatpush1.msra.mxu0 0.0
  %1584 = vmatprep.subr.mxu0 0.0
  %1585 = vmatpush1.msra.mxu0 0.0
  %1586 = vmatprep.subr.mxu0 0.0
  %1587 = vmatpush1.msra.mxu0 0.0
  %1588 = vmatprep.subr.mxu0 0.0
  %1589 = vmatpush1.msra.mxu0 0.0
  %1590 = vmatprep.subr.mxu0 0.0
  %1591 = vmatpush1.msra.mxu0 0.0
  %1592 = vmatprep.subr.mxu0 0.0
  %1593 = vmatpush1.msra.mxu0 0.0
  %1594 = vmatprep.mubr.f32.mxu0 0.0
  %1595 = vmatmul.mubr.f32.gmra.mrb[0].mxu0 %v1380
  %v1596 = vpop.f32.mrb[0].mxu0
  %v1597 = vadd.f32 0.0, %v1596
  %v1598 = vpop.f32.mrb[0].mxu0
  %1599 = vdwg.mxu0
  %1600 = vmatprep.subr.mxu0 0.0
  %1601 = vmatpush1.msra.mxu0 %v14
  %1602 = vmatprep.subr.mxu0 0.0
  %1603 = vmatpush1.msra.mxu0 %v15
  %1604 = vmatprep.subr.mxu0 0.0
  %1605 = vmatpush1.msra.mxu0 %v16
  %1606 = vmatprep.subr.mxu0 0.0
  %1607 = vmatpush1.msra.mxu0 %v17
  %1608 = vmatprep.subr.mxu0 0.0
  %1609 = vmatpush1.msra.mxu0 0.0
  %1610 = vmatprep.subr.mxu0 0.0
  %1611 = vmatpush1.msra.mxu0 0.0
  %1612 = vmatprep.subr.mxu0 0.0
  %1613 = vmatpush1.msra.mxu0 0.0
  %1614 = vmatprep.subr.mxu0 0.0
  %1615 = vmatpush1.msra.mxu0 0.0
  %1616 = vmatprep.subr.mxu0 0.0
  %1617 = vmatpush1.msra.mxu0 0.0
  %1618 = vmatprep.subr.mxu0 0.0
  %1619 = vmatpush1.msra.mxu0 0.0
  %1620 = vmatprep.subr.mxu0 0.0
  %1621 = vmatpush1.msra.mxu0 0.0
  %1622 = vmatprep.subr.mxu0 0.0
  %1623 = vmatpush1.msra.mxu0 0.0
  %1624 = vmatprep.subr.mxu0 0.0
  %1625 = vmatpush1.msra.mxu0 0.0
  %1626 = vmatprep.subr.mxu0 0.0
  %1627 = vmatpush1.msra.mxu0 0.0
  %1628 = vmatprep.subr.mxu0 0.0
  %1629 = vmatpush1.msra.mxu0 0.0
  %1630 = vmatprep.subr.mxu0 0.0
  %1631 = vmatpush1.msra.mxu0 0.0
  %1632 = vmatprep.subr.mxu0 0.0
  %1633 = vmatpush1.msra.mxu0 0.0
  %1634 = vmatprep.subr.mxu0 0.0
  %1635 = vmatpush1.msra.mxu0 0.0
  %1636 = vmatprep.subr.mxu0 0.0
  %1637 = vmatpush1.msra.mxu0 0.0
  %1638 = vmatprep.subr.mxu0 0.0
  %1639 = vmatpush1.msra.mxu0 0.0
  %1640 = vmatprep.subr.mxu0 0.0
  %1641 = vmatpush1.msra.mxu0 0.0
  %1642 = vmatprep.subr.mxu0 0.0
  %1643 = vmatpush1.msra.mxu0 0.0
  %1644 = vmatprep.subr.mxu0 0.0
  %1645 = vmatpush1.msra.mxu0 0.0
  %1646 = vmatprep.subr.mxu0 0.0
  %1647 = vmatpush1.msra.mxu0 0.0
  %1648 = vmatprep.subr.mxu0 0.0
  %1649 = vmatpush1.msra.mxu0 0.0
  %1650 = vmatprep.subr.mxu0 0.0
  %1651 = vmatpush1.msra.mxu0 0.0
  %1652 = vmatprep.subr.mxu0 0.0
  %1653 = vmatpush1.msra.mxu0 0.0
  %1654 = vmatprep.subr.mxu0 0.0
  %1655 = vmatpush1.msra.mxu0 0.0
  %1656 = vmatprep.subr.mxu0 0.0
  %1657 = vmatpush1.msra.mxu0 0.0
  %1658 = vmatprep.subr.mxu0 0.0
  %1659 = vmatpush1.msra.mxu0 0.0
  %1660 = vmatprep.subr.mxu0 0.0
  %1661 = vmatpush1.msra.mxu0 0.0
  %1662 = vmatprep.subr.mxu0 0.0
  %1663 = vmatpush1.msra.mxu0 0.0
  %1664 = vmatprep.mubr.f32.mxu0 0.0
  %1665 = vmatmul.mubr.f32.gmra.mrb[0].mxu0 %v1280
  %v1666 = vpop.f32.mrb[0].mxu0
  %v1667 = vadd.f32 0.0, %v1666
  %v1668 = vpop.f32.mrb[0].mxu0
  %1669 = vdwg.mxu0
  %v1671 = vrot.slane %v1667, 5
  %v1673 = vadd.f32 %v239, %v1671
  %v1674 = vxor.u32 %v1673, 2147483648
  %v1675 = vmul.f32 %v1674, 1.442695
  %v1676 = vpow.pop %v1675
  %v1677 = vadd.f32 %v1676, 1.0
  %v1678 = vrcp.pop %v1677
  %v1679 = vmul.f32 1.0, %v1678
  %v1680 = vtanh.pop %v1673
  %v1682 = vrot.slane %v1269, 7
  %v1684 = vmul.f32 %v1679, %v1682
  %1686 = vrot.lane.b32.xlu0 %v1680, 64
  %v1687 = vpop.permute.xlu0 %1686
  %v1689 = vmul.f32 %v1679, %v1687
  %1691 = vrot.lane.b32.xlu0 %v1689, 32
  %v1692 = vpop.permute.xlu0 %1691
  %v1694 = vadd.f32 %v1684, %v1692
  %v1695 = vtanh.pop %v1694
  %1697 = vrot.lane.b32.xlu0 %v1695, 64
  %v1698 = vpop.permute.xlu0 %1697
  %v1700 = vmul.f32 %v1679, %v1698
  %v1702 = vrot.slane %v1700, 3
  %1703 = vrot.lane.b32.xlu0 %v1702, 32
  %v1704 = vpop.permute.xlu0 %1703
  %v1705 = vsel %vm70, %v1704, 0
  %1707 = vmatprep.subr.mxu0 0.0
  %1708 = vmatpush1.msra.mxu0 %v18
  %1709 = vmatprep.subr.mxu0 0.0
  %1710 = vmatpush1.msra.mxu0 %v19
  %1711 = vmatprep.subr.mxu0 0.0
  %1712 = vmatpush1.msra.mxu0 %v20
  %1713 = vmatprep.subr.mxu0 0.0
  %1714 = vmatpush1.msra.mxu0 %v21
  %1715 = vmatprep.subr.mxu0 0.0
  %1716 = vmatpush1.msra.mxu0 0.0
  %1717 = vmatprep.subr.mxu0 0.0
  %1718 = vmatpush1.msra.mxu0 0.0
  %1719 = vmatprep.subr.mxu0 0.0
  %1720 = vmatpush1.msra.mxu0 0.0
  %1721 = vmatprep.subr.mxu0 0.0
  %1722 = vmatpush1.msra.mxu0 0.0
  %1723 = vmatprep.subr.mxu0 0.0
  %1724 = vmatpush1.msra.mxu0 0.0
  %1725 = vmatprep.subr.mxu0 0.0
  %1726 = vmatpush1.msra.mxu0 0.0
  %1727 = vmatprep.subr.mxu0 0.0
  %1728 = vmatpush1.msra.mxu0 0.0
  %1729 = vmatprep.subr.mxu0 0.0
  %1730 = vmatpush1.msra.mxu0 0.0
  %1731 = vmatprep.subr.mxu0 0.0
  %1732 = vmatpush1.msra.mxu0 0.0
  %1733 = vmatprep.subr.mxu0 0.0
  %1734 = vmatpush1.msra.mxu0 0.0
  %1735 = vmatprep.subr.mxu0 0.0
  %1736 = vmatpush1.msra.mxu0 0.0
  %1737 = vmatprep.subr.mxu0 0.0
  %1738 = vmatpush1.msra.mxu0 0.0
  %1739 = vmatprep.subr.mxu0 0.0
  %1740 = vmatpush1.msra.mxu0 0.0
  %1741 = vmatprep.subr.mxu0 0.0
  %1742 = vmatpush1.msra.mxu0 0.0
  %1743 = vmatprep.subr.mxu0 0.0
  %1744 = vmatpush1.msra.mxu0 0.0
  %1745 = vmatprep.subr.mxu0 0.0
  %1746 = vmatpush1.msra.mxu0 0.0
  %1747 = vmatprep.subr.mxu0 0.0
  %1748 = vmatpush1.msra.mxu0 0.0
  %1749 = vmatprep.subr.mxu0 0.0
  %1750 = vmatpush1.msra.mxu0 0.0
  %1751 = vmatprep.subr.mxu0 0.0
  %1752 = vmatpush1.msra.mxu0 0.0
  %1753 = vmatprep.subr.mxu0 0.0
  %1754 = vmatpush1.msra.mxu0 0.0
  %1755 = vmatprep.subr.mxu0 0.0
  %1756 = vmatpush1.msra.mxu0 0.0
  %1757 = vmatprep.subr.mxu0 0.0
  %1758 = vmatpush1.msra.mxu0 0.0
  %1759 = vmatprep.subr.mxu0 0.0
  %1760 = vmatpush1.msra.mxu0 0.0
  %1761 = vmatprep.subr.mxu0 0.0
  %1762 = vmatpush1.msra.mxu0 0.0
  %1763 = vmatprep.subr.mxu0 0.0
  %1764 = vmatpush1.msra.mxu0 0.0
  %1765 = vmatprep.subr.mxu0 0.0
  %1766 = vmatpush1.msra.mxu0 0.0
  %1767 = vmatprep.subr.mxu0 0.0
  %1768 = vmatpush1.msra.mxu0 0.0
  %1769 = vmatprep.subr.mxu0 0.0
  %1770 = vmatpush1.msra.mxu0 0.0
  %1771 = vmatprep.mubr.f32.mxu0 0.0
  %1772 = vmatmul.mubr.f32.gmra.mrb[0].mxu0 %v1705
  %v1773 = vpop.f32.mrb[0].mxu0
  %v1774 = vadd.f32 %v1597, %v1773
  %v1775 = vpop.f32.mrb[0].mxu0
  %1776 = vdwg.mxu0
  %v1777 = vadd.f32 %v1774, %v27
  %v1778 = vxor.u32 %v1777, 2147483648
  %v1779 = vmul.f32 %v1778, 1.442695
  %v1780 = vpow.pop %v1779
  %v1781 = vadd.f32 %v1780, 1.0
  %v1782 = vrcp.pop %v1781
  %v1783 = vmul.f32 1.0, %v1782
  %v1784 = vtanh.pop %v1777
  %v1785 = vmul.f32 %v1783, %v1370
  %1787 = vrot.lane.b32.xlu0 %v1784, 64
  %v1788 = vpop.permute.xlu0 %1787
  %v1790 = vmul.f32 %v1783, %v1788
  %1792 = vrot.lane.b32.xlu0 %v1790, 32
  %v1793 = vpop.permute.xlu0 %1792
  %v1795 = vadd.f32 %v1785, %v1793
  %v1796 = vtanh.pop %v1795
  %1798 = vrot.lane.b32.xlu0 %v1796, 64
  %v1799 = vpop.permute.xlu0 %1798
  %v1801 = vmul.f32 %v1783, %v1799
  %1803 = vrot.lane.b32.xlu0 %v1801, 32
  %v1804 = vpop.permute.xlu0 %1803
  %v1805 = vsel %vm70, %v1804, 0
  %1807 = vmatprep.subr.mxu0 0.0
  %1808 = vmatpush1.msra.mxu0 %v514
  %1809 = vmatprep.subr.mxu0 0.0
  %1810 = vmatpush1.msra.mxu0 %v516
  %1811 = vmatprep.subr.mxu0 0.0
  %1812 = vmatpush1.msra.mxu0 %v518
  %1813 = vmatprep.subr.mxu0 0.0
  %1814 = vmatpush1.msra.mxu0 %v520
  %1815 = vmatprep.subr.mxu0 0.0
  %1816 = vmatpush1.msra.mxu0 0.0
  %1817 = vmatprep.subr.mxu0 0.0
  %1818 = vmatpush1.msra.mxu0 0.0
  %1819 = vmatprep.subr.mxu0 0.0
  %1820 = vmatpush1.msra.mxu0 0.0
  %1821 = vmatprep.subr.mxu0 0.0
  %1822 = vmatpush1.msra.mxu0 0.0
  %1823 = vmatprep.subr.mxu0 0.0
  %1824 = vmatpush1.msra.mxu0 0.0
  %1825 = vmatprep.subr.mxu0 0.0
  %1826 = vmatpush1.msra.mxu0 0.0
  %1827 = vmatprep.subr.mxu0 0.0
  %1828 = vmatpush1.msra.mxu0 0.0
  %1829 = vmatprep.subr.mxu0 0.0
  %1830 = vmatpush1.msra.mxu0 0.0
  %1831 = vmatprep.subr.mxu0 0.0
  %1832 = vmatpush1.msra.mxu0 0.0
  %1833 = vmatprep.subr.mxu0 0.0
  %1834 = vmatpush1.msra.mxu0 0.0
  %1835 = vmatprep.subr.mxu0 0.0
  %1836 = vmatpush1.msra.mxu0 0.0
  %1837 = vmatprep.subr.mxu0 0.0
  %1838 = vmatpush1.msra.mxu0 0.0
  %1839 = vmatprep.subr.mxu0 0.0
  %1840 = vmatpush1.msra.mxu0 0.0
  %1841 = vmatprep.subr.mxu0 0.0
  %1842 = vmatpush1.msra.mxu0 0.0
  %1843 = vmatprep.subr.mxu0 0.0
  %1844 = vmatpush1.msra.mxu0 0.0
  %1845 = vmatprep.subr.mxu0 0.0
  %1846 = vmatpush1.msra.mxu0 0.0
  %1847 = vmatprep.subr.mxu0 0.0
  %1848 = vmatpush1.msra.mxu0 0.0
  %1849 = vmatprep.subr.mxu0 0.0
  %1850 = vmatpush1.msra.mxu0 0.0
  %1851 = vmatprep.subr.mxu0 0.0
  %1852 = vmatpush1.msra.mxu0 0.0
  %1853 = vmatprep.subr.mxu0 0.0
  %1854 = vmatpush1.msra.mxu0 0.0
  %1855 = vmatprep.subr.mxu0 0.0
  %1856 = vmatpush1.msra.mxu0 0.0
  %1857 = vmatprep.subr.mxu0 0.0
  %1858 = vmatpush1.msra.mxu0 0.0
  %1859 = vmatprep.subr.mxu0 0.0
  %1860 = vmatpush1.msra.mxu0 0.0
  %1861 = vmatprep.subr.mxu0 0.0
  %1862 = vmatpush1.msra.mxu0 0.0
  %1863 = vmatprep.subr.mxu0 0.0
  %1864 = vmatpush1.msra.mxu0 0.0
  %1865 = vmatprep.subr.mxu0 0.0
  %1866 = vmatpush1.msra.mxu0 0.0
  %1867 = vmatprep.subr.mxu0 0.0
  %1868 = vmatpush1.msra.mxu0 0.0
  %1869 = vmatprep.subr.mxu0 0.0
  %1870 = vmatpush1.msra.mxu0 0.0
  %1871 = vmatprep.mubr.f32.mxu0 0.0
  %1872 = vmatmul.mubr.f32.gmra.mrb[0].mxu0 %v1805
  %v1873 = vpop.f32.mrb[0].mxu0
  %v1874 = vadd.f32 %v527, %v1873
  %v1875 = vpop.f32.mrb[0].mxu0
  %1876 = vdwg.mxu0
  %1877 = vst.msk [vmem:[%s2 + $0x3] sm:$0x1] %vm601, %v1874
  %v1878 = vrot.slane %v151, 4
  %v1880 = vsel %vm953, %v1874, 0
  %v1882 = vsel %vm957, %v1878, 0
  %1884 = vmatprep.subr.mxu0 0.0
  %1885 = vmatpush1.msra.mxu0 %v1882
  %1886 = vmatprep.subr.mxu0 0.0
  %1887 = vmatpush1.msra.mxu0 0.0
  %1888 = vmatprep.subr.mxu0 0.0
  %1889 = vmatpush1.msra.mxu0 0.0
  %1890 = vmatprep.subr.mxu0 0.0
  %1891 = vmatpush1.msra.mxu0 0.0
  %1892 = vmatprep.subr.mxu0 0.0
  %1893 = vmatpush1.msra.mxu0 0.0
  %1894 = vmatprep.subr.mxu0 0.0
  %1895 = vmatpush1.msra.mxu0 0.0
  %1896 = vmatprep.subr.mxu0 0.0
  %1897 = vmatpush1.msra.mxu0 0.0
  %1898 = vmatprep.subr.mxu0 0.0
  %1899 = vmatpush1.msra.mxu0 0.0
  %1900 = vmatprep.subr.mxu0 0.0
  %1901 = vmatpush1.msra.mxu0 0.0
  %1902 = vmatprep.subr.mxu0 0.0
  %1903 = vmatpush1.msra.mxu0 0.0
  %1904 = vmatprep.subr.mxu0 0.0
  %1905 = vmatpush1.msra.mxu0 0.0
  %1906 = vmatprep.subr.mxu0 0.0
  %1907 = vmatpush1.msra.mxu0 0.0
  %1908 = vmatprep.subr.mxu0 0.0
  %1909 = vmatpush1.msra.mxu0 0.0
  %1910 = vmatprep.subr.mxu0 0.0
  %1911 = vmatpush1.msra.mxu0 0.0
  %1912 = vmatprep.subr.mxu0 0.0
  %1913 = vmatpush1.msra.mxu0 0.0
  %1914 = vmatprep.subr.mxu0 0.0
  %1915 = vmatpush1.msra.mxu0 0.0
  %1916 = vmatprep.subr.mxu0 0.0
  %1917 = vmatpush1.msra.mxu0 0.0
  %1918 = vmatprep.subr.mxu0 0.0
  %1919 = vmatpush1.msra.mxu0 0.0
  %1920 = vmatprep.subr.mxu0 0.0
  %1921 = vmatpush1.msra.mxu0 0.0
  %1922 = vmatprep.subr.mxu0 0.0
  %1923 = vmatpush1.msra.mxu0 0.0
  %1924 = vmatprep.subr.mxu0 0.0
  %1925 = vmatpush1.msra.mxu0 0.0
  %1926 = vmatprep.subr.mxu0 0.0
  %1927 = vmatpush1.msra.mxu0 0.0
  %1928 = vmatprep.subr.mxu0 0.0
  %1929 = vmatpush1.msra.mxu0 0.0
  %1930 = vmatprep.subr.mxu0 0.0
  %1931 = vmatpush1.msra.mxu0 0.0
  %1932 = vmatprep.subr.mxu0 0.0
  %1933 = vmatpush1.msra.mxu0 0.0
  %1934 = vmatprep.subr.mxu0 0.0
  %1935 = vmatpush1.msra.mxu0 0.0
  %1936 = vmatprep.subr.mxu0 0.0
  %1937 = vmatpush1.msra.mxu0 0.0
  %1938 = vmatprep.subr.mxu0 0.0
  %1939 = vmatpush1.msra.mxu0 0.0
  %1940 = vmatprep.subr.mxu0 0.0
  %1941 = vmatpush1.msra.mxu0 0.0
  %1942 = vmatprep.subr.mxu0 0.0
  %1943 = vmatpush1.msra.mxu0 0.0
  %1944 = vmatprep.subr.mxu0 0.0
  %1945 = vmatpush1.msra.mxu0 0.0
  %1946 = vmatprep.subr.mxu0 0.0
  %1947 = vmatpush1.msra.mxu0 0.0
  %1948 = vmatprep.mubr.f32.mxu0 0.0
  %1949 = vmatmul.mubr.f32.gmra.mrb[0].mxu0 %v1880
  %v1950 = vpop.f32.mrb[0].mxu0
  %v1951 = vadd.f32 0.0, %v1950
  %v1952 = vpop.f32.mrb[0].mxu0
  %1953 = vdwg.mxu0
  %v1954 = vadd.f32 %v1529, %v1951
  %1955 = vmatprep.subr.mxu0 0.0
  %1956 = vmatpush1.msra.mxu0 %v22
  %1957 = vmatprep.subr.mxu0 0.0
  %1958 = vmatpush1.msra.mxu0 %v23
  %1959 = vmatprep.subr.mxu0 0.0
  %1960 = vmatpush1.msra.mxu0 %v24
  %1961 = vmatprep.subr.mxu0 0.0
  %1962 = vmatpush1.msra.mxu0 %v25
  %1963 = vmatprep.subr.mxu0 0.0
  %1964 = vmatpush1.msra.mxu0 0.0
  %1965 = vmatprep.subr.mxu0 0.0
  %1966 = vmatpush1.msra.mxu0 0.0
  %1967 = vmatprep.subr.mxu0 0.0
  %1968 = vmatpush1.msra.mxu0 0.0
  %1969 = vmatprep.subr.mxu0 0.0
  %1970 = vmatpush1.msra.mxu0 0.0
  %1971 = vmatprep.subr.mxu0 0.0
  %1972 = vmatpush1.msra.mxu0 0.0
  %1973 = vmatprep.subr.mxu0 0.0
  %1974 = vmatpush1.msra.mxu0 0.0
  %1975 = vmatprep.subr.mxu0 0.0
  %1976 = vmatpush1.msra.mxu0 0.0
  %1977 = vmatprep.subr.mxu0 0.0
  %1978 = vmatpush1.msra.mxu0 0.0
  %1979 = vmatprep.subr.mxu0 0.0
  %1980 = vmatpush1.msra.mxu0 0.0
  %1981 = vmatprep.subr.mxu0 0.0
  %1982 = vmatpush1.msra.mxu0 0.0
  %1983 = vmatprep.subr.mxu0 0.0
  %1984 = vmatpush1.msra.mxu0 0.0
  %1985 = vmatprep.subr.mxu0 0.0
  %1986 = vmatpush1.msra.mxu0 0.0
  %1987 = vmatprep.subr.mxu0 0.0
  %1988 = vmatpush1.msra.mxu0 0.0
  %1989 = vmatprep.subr.mxu0 0.0
  %1990 = vmatpush1.msra.mxu0 0.0
  %1991 = vmatprep.subr.mxu0 0.0
  %1992 = vmatpush1.msra.mxu0 0.0
  %1993 = vmatprep.subr.mxu0 0.0
  %1994 = vmatpush1.msra.mxu0 0.0
  %1995 = vmatprep.subr.mxu0 0.0
  %1996 = vmatpush1.msra.mxu0 0.0
  %1997 = vmatprep.subr.mxu0 0.0
  %1998 = vmatpush1.msra.mxu0 0.0
  %1999 = vmatprep.subr.mxu0 0.0
  %2000 = vmatpush1.msra.mxu0 0.0
  %2001 = vmatprep.subr.mxu0 0.0
  %2002 = vmatpush1.msra.mxu0 0.0
  %2003 = vmatprep.subr.mxu0 0.0
  %2004 = vmatpush1.msra.mxu0 0.0
  %2005 = vmatprep.subr.mxu0 0.0
  %2006 = vmatpush1.msra.mxu0 0.0
  %2007 = vmatprep.subr.mxu0 0.0
  %2008 = vmatpush1.msra.mxu0 0.0
  %2009 = vmatprep.subr.mxu0 0.0
  %2010 = vmatpush1.msra.mxu0 0.0
  %2011 = vmatprep.subr.mxu0 0.0
  %2012 = vmatpush1.msra.mxu0 0.0
  %2013 = vmatprep.subr.mxu0 0.0
  %2014 = vmatpush1.msra.mxu0 0.0
  %2015 = vmatprep.subr.mxu0 0.0
  %2016 = vmatpush1.msra.mxu0 0.0
  %2017 = vmatprep.subr.mxu0 0.0
  %2018 = vmatpush1.msra.mxu0 0.0
  %2019 = vmatprep.mubr.f32.mxu0 0.0
  %2020 = vmatmul.mubr.f32.gmra.mrb[0].mxu0 %v1805
  %v2021 = vpop.f32.mrb[0].mxu0
  %v2022 = vadd.f32 0.0, %v2021
  %v2023 = vpop.f32.mrb[0].mxu0
  %2024 = vdwg.mxu0
  %2025 = vmatprep.subr.mxu0 0.0
  %2026 = vmatpush1.msra.mxu0 %v14
  %2027 = vmatprep.subr.mxu0 0.0
  %2028 = vmatpush1.msra.mxu0 %v15
  %2029 = vmatprep.subr.mxu0 0.0
  %2030 = vmatpush1.msra.mxu0 %v16
  %2031 = vmatprep.subr.mxu0 0.0
  %2032 = vmatpush1.msra.mxu0 %v17
  %2033 = vmatprep.subr.mxu0 0.0
  %2034 = vmatpush1.msra.mxu0 0.0
  %2035 = vmatprep.subr.mxu0 0.0
  %2036 = vmatpush1.msra.mxu0 0.0
  %2037 = vmatprep.subr.mxu0 0.0
  %2038 = vmatpush1.msra.mxu0 0.0
  %2039 = vmatprep.subr.mxu0 0.0
  %2040 = vmatpush1.msra.mxu0 0.0
  %2041 = vmatprep.subr.mxu0 0.0
  %2042 = vmatpush1.msra.mxu0 0.0
  %2043 = vmatprep.subr.mxu0 0.0
  %2044 = vmatpush1.msra.mxu0 0.0
  %2045 = vmatprep.subr.mxu0 0.0
  %2046 = vmatpush1.msra.mxu0 0.0
  %2047 = vmatprep.subr.mxu0 0.0
  %2048 = vmatpush1.msra.mxu0 0.0
  %2049 = vmatprep.subr.mxu0 0.0
  %2050 = vmatpush1.msra.mxu0 0.0
  %2051 = vmatprep.subr.mxu0 0.0
  %2052 = vmatpush1.msra.mxu0 0.0
  %2053 = vmatprep.subr.mxu0 0.0
  %2054 = vmatpush1.msra.mxu0 0.0
  %2055 = vmatprep.subr.mxu0 0.0
  %2056 = vmatpush1.msra.mxu0 0.0
  %2057 = vmatprep.subr.mxu0 0.0
  %2058 = vmatpush1.msra.mxu0 0.0
  %2059 = vmatprep.subr.mxu0 0.0
  %2060 = vmatpush1.msra.mxu0 0.0
  %2061 = vmatprep.subr.mxu0 0.0
  %2062 = vmatpush1.msra.mxu0 0.0
  %2063 = vmatprep.subr.mxu0 0.0
  %2064 = vmatpush1.msra.mxu0 0.0
  %2065 = vmatprep.subr.mxu0 0.0
  %2066 = vmatpush1.msra.mxu0 0.0
  %2067 = vmatprep.subr.mxu0 0.0
  %2068 = vmatpush1.msra.mxu0 0.0
  %2069 = vmatprep.subr.mxu0 0.0
  %2070 = vmatpush1.msra.mxu0 0.0
  %2071 = vmatprep.subr.mxu0 0.0
  %2072 = vmatpush1.msra.mxu0 0.0
  %2073 = vmatprep.subr.mxu0 0.0
  %2074 = vmatpush1.msra.mxu0 0.0
  %2075 = vmatprep.subr.mxu0 0.0
  %2076 = vmatpush1.msra.mxu0 0.0
  %2077 = vmatprep.subr.mxu0 0.0
  %2078 = vmatpush1.msra.mxu0 0.0
  %2079 = vmatprep.subr.mxu0 0.0
  %2080 = vmatpush1.msra.mxu0 0.0
  %2081 = vmatprep.subr.mxu0 0.0
  %2082 = vmatpush1.msra.mxu0 0.0
  %2083 = vmatprep.subr.mxu0 0.0
  %2084 = vmatpush1.msra.mxu0 0.0
  %2085 = vmatprep.subr.mxu0 0.0
  %2086 = vmatpush1.msra.mxu0 0.0
  %2087 = vmatprep.subr.mxu0 0.0
  %2088 = vmatpush1.msra.mxu0 0.0
  %2089 = vmatprep.mubr.f32.mxu0 0.0
  %2090 = vmatmul.mubr.f32.gmra.mrb[0].mxu0 %v1705
  %v2091 = vpop.f32.mrb[0].mxu0
  %v2092 = vadd.f32 0.0, %v2091
  %v2093 = vpop.f32.mrb[0].mxu0
  %2094 = vdwg.mxu0
  %v2096 = vrot.slane %v2092, 4
  %v2098 = vadd.f32 %v239, %v2096
  %v2099 = vxor.u32 %v2098, 2147483648
  %v2100 = vmul.f32 %v2099, 1.442695
  %v2101 = vpow.pop %v2100
  %v2102 = vadd.f32 %v2101, 1.0
  %v2103 = vrcp.pop %v2102
  %v2104 = vmul.f32 1.0, %v2103
  %v2105 = vtanh.pop %v2098
  %v2107 = vrot.slane %v1694, 7
  %v2109 = vmul.f32 %v2104, %v2107
  %2111 = vrot.lane.b32.xlu0 %v2105, 64
  %v2112 = vpop.permute.xlu0 %2111
  %v2114 = vmul.f32 %v2104, %v2112
  %2116 = vrot.lane.b32.xlu0 %v2114, 32
  %v2117 = vpop.permute.xlu0 %2116
  %v2119 = vadd.f32 %v2109, %v2117
  %v2120 = vtanh.pop %v2119
  %2122 = vrot.lane.b32.xlu0 %v2120, 64
  %v2123 = vpop.permute.xlu0 %2122
  %v2125 = vmul.f32 %v2104, %v2123
  %v2127 = vrot.slane %v2125, 4
  %2128 = vrot.lane.b32.xlu0 %v2127, 32
  %v2129 = vpop.permute.xlu0 %2128
  %v2130 = vsel %vm70, %v2129, 0
  %2132 = vmatprep.subr.mxu0 0.0
  %2133 = vmatpush1.msra.mxu0 %v18
  %2134 = vmatprep.subr.mxu0 0.0
  %2135 = vmatpush1.msra.mxu0 %v19
  %2136 = vmatprep.subr.mxu0 0.0
  %2137 = vmatpush1.msra.mxu0 %v20
  %2138 = vmatprep.subr.mxu0 0.0
  %2139 = vmatpush1.msra.mxu0 %v21
  %2140 = vmatprep.subr.mxu0 0.0
  %2141 = vmatpush1.msra.mxu0 0.0
  %2142 = vmatprep.subr.mxu0 0.0
  %2143 = vmatpush1.msra.mxu0 0.0
  %2144 = vmatprep.subr.mxu0 0.0
  %2145 = vmatpush1.msra.mxu0 0.0
  %2146 = vmatprep.subr.mxu0 0.0
  %2147 = vmatpush1.msra.mxu0 0.0
  %2148 = vmatprep.subr.mxu0 0.0
  %2149 = vmatpush1.msra.mxu0 0.0
  %2150 = vmatprep.subr.mxu0 0.0
  %2151 = vmatpush1.msra.mxu0 0.0
  %2152 = vmatprep.subr.mxu0 0.0
  %2153 = vmatpush1.msra.mxu0 0.0
  %2154 = vmatprep.subr.mxu0 0.0
  %2155 = vmatpush1.msra.mxu0 0.0
  %2156 = vmatprep.subr.mxu0 0.0
  %2157 = vmatpush1.msra.mxu0 0.0
  %2158 = vmatprep.subr.mxu0 0.0
  %2159 = vmatpush1.msra.mxu0 0.0
  %2160 = vmatprep.subr.mxu0 0.0
  %2161 = vmatpush1.msra.mxu0 0.0
  %2162 = vmatprep.subr.mxu0 0.0
  %2163 = vmatpush1.msra.mxu0 0.0
  %2164 = vmatprep.subr.mxu0 0.0
  %2165 = vmatpush1.msra.mxu0 0.0
  %2166 = vmatprep.subr.mxu0 0.0
  %2167 = vmatpush1.msra.mxu0 0.0
  %2168 = vmatprep.subr.mxu0 0.0
  %2169 = vmatpush1.msra.mxu0 0.0
  %2170 = vmatprep.subr.mxu0 0.0
  %2171 = vmatpush1.msra.mxu0 0.0
  %2172 = vmatprep.subr.mxu0 0.0
  %2173 = vmatpush1.msra.mxu0 0.0
  %2174 = vmatprep.subr.mxu0 0.0
  %2175 = vmatpush1.msra.mxu0 0.0
  %2176 = vmatprep.subr.mxu0 0.0
  %2177 = vmatpush1.msra.mxu0 0.0
  %2178 = vmatprep.subr.mxu0 0.0
  %2179 = vmatpush1.msra.mxu0 0.0
  %2180 = vmatprep.subr.mxu0 0.0
  %2181 = vmatpush1.msra.mxu0 0.0
  %2182 = vmatprep.subr.mxu0 0.0
  %2183 = vmatpush1.msra.mxu0 0.0
  %2184 = vmatprep.subr.mxu0 0.0
  %2185 = vmatpush1.msra.mxu0 0.0
  %2186 = vmatprep.subr.mxu0 0.0
  %2187 = vmatpush1.msra.mxu0 0.0
  %2188 = vmatprep.subr.mxu0 0.0
  %2189 = vmatpush1.msra.mxu0 0.0
  %2190 = vmatprep.subr.mxu0 0.0
  %2191 = vmatpush1.msra.mxu0 0.0
  %2192 = vmatprep.subr.mxu0 0.0
  %2193 = vmatpush1.msra.mxu0 0.0
  %2194 = vmatprep.subr.mxu0 0.0
  %2195 = vmatpush1.msra.mxu0 0.0
  %2196 = vmatprep.mubr.f32.mxu0 0.0
  %2197 = vmatmul.mubr.f32.gmra.mrb[0].mxu0 %v2130
  %v2198 = vpop.f32.mrb[0].mxu0
  %v2199 = vadd.f32 %v2022, %v2198
  %v2200 = vpop.f32.mrb[0].mxu0
  %2201 = vdwg.mxu0
  %v2202 = vadd.f32 %v2199, %v27
  %v2203 = vxor.u32 %v2202, 2147483648
  %v2204 = vmul.f32 %v2203, 1.442695
  %v2205 = vpow.pop %v2204
  %v2206 = vadd.f32 %v2205, 1.0
  %v2207 = vrcp.pop %v2206
  %v2208 = vmul.f32 1.0, %v2207
  %v2209 = vtanh.pop %v2202
  %v2210 = vmul.f32 %v2208, %v1795
  %2212 = vrot.lane.b32.xlu0 %v2209, 64
  %v2213 = vpop.permute.xlu0 %2212
  %v2215 = vmul.f32 %v2208, %v2213
  %2217 = vrot.lane.b32.xlu0 %v2215, 32
  %v2218 = vpop.permute.xlu0 %2217
  %v2220 = vadd.f32 %v2210, %v2218
  %v2221 = vtanh.pop %v2220
  %2223 = vrot.lane.b32.xlu0 %v2221, 64
  %v2224 = vpop.permute.xlu0 %2223
  %v2226 = vmul.f32 %v2208, %v2224
  %2228 = vrot.lane.b32.xlu0 %v2226, 32
  %v2229 = vpop.permute.xlu0 %2228
  %v2230 = vsel %vm70, %v2229, 0
  %2232 = vmatprep.subr.mxu0 0.0
  %2233 = vmatpush1.msra.mxu0 %v514
  %2234 = vmatprep.subr.mxu0 0.0
  %2235 = vmatpush1.msra.mxu0 %v516
  %2236 = vmatprep.subr.mxu0 0.0
  %2237 = vmatpush1.msra.mxu0 %v518
  %2238 = vmatprep.subr.mxu0 0.0
  %2239 = vmatpush1.msra.mxu0 %v520
  %2240 = vmatprep.subr.mxu0 0.0
  %2241 = vmatpush1.msra.mxu0 0.0
  %2242 = vmatprep.subr.mxu0 0.0
  %2243 = vmatpush1.msra.mxu0 0.0
  %2244 = vmatprep.subr.mxu0 0.0
  %2245 = vmatpush1.msra.mxu0 0.0
  %2246 = vmatprep.subr.mxu0 0.0
  %2247 = vmatpush1.msra.mxu0 0.0
  %2248 = vmatprep.subr.mxu0 0.0
  %2249 = vmatpush1.msra.mxu0 0.0
  %2250 = vmatprep.subr.mxu0 0.0
  %2251 = vmatpush1.msra.mxu0 0.0
  %2252 = vmatprep.subr.mxu0 0.0
  %2253 = vmatpush1.msra.mxu0 0.0
  %2254 = vmatprep.subr.mxu0 0.0
  %2255 = vmatpush1.msra.mxu0 0.0
  %2256 = vmatprep.subr.mxu0 0.0
  %2257 = vmatpush1.msra.mxu0 0.0
  %2258 = vmatprep.subr.mxu0 0.0
  %2259 = vmatpush1.msra.mxu0 0.0
  %2260 = vmatprep.subr.mxu0 0.0
  %2261 = vmatpush1.msra.mxu0 0.0
  %2262 = vmatprep.subr.mxu0 0.0
  %2263 = vmatpush1.msra.mxu0 0.0
  %2264 = vmatprep.subr.mxu0 0.0
  %2265 = vmatpush1.msra.mxu0 0.0
  %2266 = vmatprep.subr.mxu0 0.0
  %2267 = vmatpush1.msra.mxu0 0.0
  %2268 = vmatprep.subr.mxu0 0.0
  %2269 = vmatpush1.msra.mxu0 0.0
  %2270 = vmatprep.subr.mxu0 0.0
  %2271 = vmatpush1.msra.mxu0 0.0
  %2272 = vmatprep.subr.mxu0 0.0
  %2273 = vmatpush1.msra.mxu0 0.0
  %2274 = vmatprep.subr.mxu0 0.0
  %2275 = vmatpush1.msra.mxu0 0.0
  %2276 = vmatprep.subr.mxu0 0.0
  %2277 = vmatpush1.msra.mxu0 0.0
  %2278 = vmatprep.subr.mxu0 0.0
  %2279 = vmatpush1.msra.mxu0 0.0
  %2280 = vmatprep.subr.mxu0 0.0
  %2281 = vmatpush1.msra.mxu0 0.0
  %2282 = vmatprep.subr.mxu0 0.0
  %2283 = vmatpush1.msra.mxu0 0.0
  %2284 = vmatprep.subr.mxu0 0.0
  %2285 = vmatpush1.msra.mxu0 0.0
  %2286 = vmatprep.subr.mxu0 0.0
  %2287 = vmatpush1.msra.mxu0 0.0
  %2288 = vmatprep.subr.mxu0 0.0
  %2289 = vmatpush1.msra.mxu0 0.0
  %2290 = vmatprep.subr.mxu0 0.0
  %2291 = vmatpush1.msra.mxu0 0.0
  %2292 = vmatprep.subr.mxu0 0.0
  %2293 = vmatpush1.msra.mxu0 0.0
  %2294 = vmatprep.subr.mxu0 0.0
  %2295 = vmatpush1.msra.mxu0 0.0
  %2296 = vmatprep.mubr.f32.mxu0 0.0
  %2297 = vmatmul.mubr.f32.gmra.mrb[0].mxu0 %v2230
  %v2298 = vpop.f32.mrb[0].mxu0
  %v2299 = vadd.f32 %v527, %v2298
  %v2300 = vpop.f32.mrb[0].mxu0
  %2301 = vdwg.mxu0
  %2302 = vst.msk [vmem:[%s2 + $0x4] sm:$0x1] %vm601, %v2299
  %v2304 = vsel %vm953, %v2299, 0
  %v2307 = vsel %vm957, %v156, 0
  %2309 = vmatprep.subr.mxu0 0.0
  %2310 = vmatpush1.msra.mxu0 %v2307
  %2311 = vmatprep.subr.mxu0 0.0
  %2312 = vmatpush1.msra.mxu0 0.0
  %2313 = vmatprep.subr.mxu0 0.0
  %2314 = vmatpush1.msra.mxu0 0.0
  %2315 = vmatprep.subr.mxu0 0.0
  %2316 = vmatpush1.msra.mxu0 0.0
  %2317 = vmatprep.subr.mxu0 0.0
  %2318 = vmatpush1.msra.mxu0 0.0
  %2319 = vmatprep.subr.mxu0 0.0
  %2320 = vmatpush1.msra.mxu0 0.0
  %2321 = vmatprep.subr.mxu0 0.0
  %2322 = vmatpush1.msra.mxu0 0.0
  %2323 = vmatprep.subr.mxu0 0.0
  %2324 = vmatpush1.msra.mxu0 0.0
  %2325 = vmatprep.subr.mxu0 0.0
  %2326 = vmatpush1.msra.mxu0 0.0
  %2327 = vmatprep.subr.mxu0 0.0
  %2328 = vmatpush1.msra.mxu0 0.0
  %2329 = vmatprep.subr.mxu0 0.0
  %2330 = vmatpush1.msra.mxu0 0.0
  %2331 = vmatprep.subr.mxu0 0.0
  %2332 = vmatpush1.msra.mxu0 0.0
  %2333 = vmatprep.subr.mxu0 0.0
  %2334 = vmatpush1.msra.mxu0 0.0
  %2335 = vmatprep.subr.mxu0 0.0
  %2336 = vmatpush1.msra.mxu0 0.0
  %2337 = vmatprep.subr.mxu0 0.0
  %2338 = vmatpush1.msra.mxu0 0.0
  %2339 = vmatprep.subr.mxu0 0.0
  %2340 = vmatpush1.msra.mxu0 0.0
  %2341 = vmatprep.subr.mxu0 0.0
  %2342 = vmatpush1.msra.mxu0 0.0
  %2343 = vmatprep.subr.mxu0 0.0
  %2344 = vmatpush1.msra.mxu0 0.0
  %2345 = vmatprep.subr.mxu0 0.0
  %2346 = vmatpush1.msra.mxu0 0.0
  %2347 = vmatprep.subr.mxu0 0.0
  %2348 = vmatpush1.msra.mxu0 0.0
  %2349 = vmatprep.subr.mxu0 0.0
  %2350 = vmatpush1.msra.mxu0 0.0
  %2351 = vmatprep.subr.mxu0 0.0
  %2352 = vmatpush1.msra.mxu0 0.0
  %2353 = vmatprep.subr.mxu0 0.0
  %2354 = vmatpush1.msra.mxu0 0.0
  %2355 = vmatprep.subr.mxu0 0.0
  %2356 = vmatpush1.msra.mxu0 0.0
  %2357 = vmatprep.subr.mxu0 0.0
  %2358 = vmatpush1.msra.mxu0 0.0
  %2359 = vmatprep.subr.mxu0 0.0
  %2360 = vmatpush1.msra.mxu0 0.0
  %2361 = vmatprep.subr.mxu0 0.0
  %2362 = vmatpush1.msra.mxu0 0.0
  %2363 = vmatprep.subr.mxu0 0.0
  %2364 = vmatpush1.msra.mxu0 0.0
  %2365 = vmatprep.subr.mxu0 0.0
  %2366 = vmatpush1.msra.mxu0 0.0
  %2367 = vmatprep.subr.mxu0 0.0
  %2368 = vmatpush1.msra.mxu0 0.0
  %2369 = vmatprep.subr.mxu0 0.0
  %2370 = vmatpush1.msra.mxu0 0.0
  %2371 = vmatprep.subr.mxu0 0.0
  %2372 = vmatpush1.msra.mxu0 0.0
  %2373 = vmatprep.mubr.f32.mxu0 0.0
  %2374 = vmatmul.mubr.f32.gmra.mrb[0].mxu0 %v2304
  %v2375 = vpop.f32.mrb[0].mxu0
  %v2376 = vadd.f32 0.0, %v2375
  %v2377 = vpop.f32.mrb[0].mxu0
  %2378 = vdwg.mxu0
  %v2379 = vadd.f32 %v1954, %v2376
  %2380 = vmatprep.subr.mxu0 0.0
  %2381 = vmatpush1.msra.mxu0 %v22
  %2382 = vmatprep.subr.mxu0 0.0
  %2383 = vmatpush1.msra.mxu0 %v23
  %2384 = vmatprep.subr.mxu0 0.0
  %2385 = vmatpush1.msra.mxu0 %v24
  %2386 = vmatprep.subr.mxu0 0.0
  %2387 = vmatpush1.msra.mxu0 %v25
  %2388 = vmatprep.subr.mxu0 0.0
  %2389 = vmatpush1.msra.mxu0 0.0
  %2390 = vmatprep.subr.mxu0 0.0
  %2391 = vmatpush1.msra.mxu0 0.0
  %2392 = vmatprep.subr.mxu0 0.0
  %2393 = vmatpush1.msra.mxu0 0.0
  %2394 = vmatprep.subr.mxu0 0.0
  %2395 = vmatpush1.msra.mxu0 0.0
  %2396 = vmatprep.subr.mxu0 0.0
  %2397 = vmatpush1.msra.mxu0 0.0
  %2398 = vmatprep.subr.mxu0 0.0
  %2399 = vmatpush1.msra.mxu0 0.0
  %2400 = vmatprep.subr.mxu0 0.0
  %2401 = vmatpush1.msra.mxu0 0.0
  %2402 = vmatprep.subr.mxu0 0.0
  %2403 = vmatpush1.msra.mxu0 0.0
  %2404 = vmatprep.subr.mxu0 0.0
  %2405 = vmatpush1.msra.mxu0 0.0
  %2406 = vmatprep.subr.mxu0 0.0
  %2407 = vmatpush1.msra.mxu0 0.0
  %2408 = vmatprep.subr.mxu0 0.0
  %2409 = vmatpush1.msra.mxu0 0.0
  %2410 = vmatprep.subr.mxu0 0.0
  %2411 = vmatpush1.msra.mxu0 0.0
  %2412 = vmatprep.subr.mxu0 0.0
  %2413 = vmatpush1.msra.mxu0 0.0
  %2414 = vmatprep.subr.mxu0 0.0
  %2415 = vmatpush1.msra.mxu0 0.0
  %2416 = vmatprep.subr.mxu0 0.0
  %2417 = vmatpush1.msra.mxu0 0.0
  %2418 = vmatprep.subr.mxu0 0.0
  %2419 = vmatpush1.msra.mxu0 0.0
  %2420 = vmatprep.subr.mxu0 0.0
  %2421 = vmatpush1.msra.mxu0 0.0
  %2422 = vmatprep.subr.mxu0 0.0
  %2423 = vmatpush1.msra.mxu0 0.0
  %2424 = vmatprep.subr.mxu0 0.0
  %2425 = vmatpush1.msra.mxu0 0.0
  %2426 = vmatprep.subr.mxu0 0.0
  %2427 = vmatpush1.msra.mxu0 0.0
  %2428 = vmatprep.subr.mxu0 0.0
  %2429 = vmatpush1.msra.mxu0 0.0
  %2430 = vmatprep.subr.mxu0 0.0
  %2431 = vmatpush1.msra.mxu0 0.0
  %2432 = vmatprep.subr.mxu0 0.0
  %2433 = vmatpush1.msra.mxu0 0.0
  %2434 = vmatprep.subr.mxu0 0.0
  %2435 = vmatpush1.msra.mxu0 0.0
  %2436 = vmatprep.subr.mxu0 0.0
  %2437 = vmatpush1.msra.mxu0 0.0
  %2438 = vmatprep.subr.mxu0 0.0
  %2439 = vmatpush1.msra.mxu0 0.0
  %2440 = vmatprep.subr.mxu0 0.0
  %2441 = vmatpush1.msra.mxu0 0.0
  %2442 = vmatprep.subr.mxu0 0.0
  %2443 = vmatpush1.msra.mxu0 0.0
  %2444 = vmatprep.mubr.f32.mxu0 0.0
  %2445 = vmatmul.mubr.f32.gmra.mrb[0].mxu0 %v2230
  %v2446 = vpop.f32.mrb[0].mxu0
  %v2447 = vadd.f32 0.0, %v2446
  %v2448 = vpop.f32.mrb[0].mxu0
  %2449 = vdwg.mxu0
  %2450 = vmatprep.subr.mxu0 0.0
  %2451 = vmatpush1.msra.mxu0 %v14
  %2452 = vmatprep.subr.mxu0 0.0
  %2453 = vmatpush1.msra.mxu0 %v15
  %2454 = vmatprep.subr.mxu0 0.0
  %2455 = vmatpush1.msra.mxu0 %v16
  %2456 = vmatprep.subr.mxu0 0.0
  %2457 = vmatpush1.msra.mxu0 %v17
  %2458 = vmatprep.subr.mxu0 0.0
  %2459 = vmatpush1.msra.mxu0 0.0
  %2460 = vmatprep.subr.mxu0 0.0
  %2461 = vmatpush1.msra.mxu0 0.0
  %2462 = vmatprep.subr.mxu0 0.0
  %2463 = vmatpush1.msra.mxu0 0.0
  %2464 = vmatprep.subr.mxu0 0.0
  %2465 = vmatpush1.msra.mxu0 0.0
  %2466 = vmatprep.subr.mxu0 0.0
  %2467 = vmatpush1.msra.mxu0 0.0
  %2468 = vmatprep.subr.mxu0 0.0
  %2469 = vmatpush1.msra.mxu0 0.0
  %2470 = vmatprep.subr.mxu0 0.0
  %2471 = vmatpush1.msra.mxu0 0.0
  %2472 = vmatprep.subr.mxu0 0.0
  %2473 = vmatpush1.msra.mxu0 0.0
  %2474 = vmatprep.subr.mxu0 0.0
  %2475 = vmatpush1.msra.mxu0 0.0
  %2476 = vmatprep.subr.mxu0 0.0
  %2477 = vmatpush1.msra.mxu0 0.0
  %2478 = vmatprep.subr.mxu0 0.0
  %2479 = vmatpush1.msra.mxu0 0.0
  %2480 = vmatprep.subr.mxu0 0.0
  %2481 = vmatpush1.msra.mxu0 0.0
  %2482 = vmatprep.subr.mxu0 0.0
  %2483 = vmatpush1.msra.mxu0 0.0
  %2484 = vmatprep.subr.mxu0 0.0
  %2485 = vmatpush1.msra.mxu0 0.0
  %2486 = vmatprep.subr.mxu0 0.0
  %2487 = vmatpush1.msra.mxu0 0.0
  %2488 = vmatprep.subr.mxu0 0.0
  %2489 = vmatpush1.msra.mxu0 0.0
  %2490 = vmatprep.subr.mxu0 0.0
  %2491 = vmatpush1.msra.mxu0 0.0
  %2492 = vmatprep.subr.mxu0 0.0
  %2493 = vmatpush1.msra.mxu0 0.0
  %2494 = vmatprep.subr.mxu0 0.0
  %2495 = vmatpush1.msra.mxu0 0.0
  %2496 = vmatprep.subr.mxu0 0.0
  %2497 = vmatpush1.msra.mxu0 0.0
  %2498 = vmatprep.subr.mxu0 0.0
  %2499 = vmatpush1.msra.mxu0 0.0
  %2500 = vmatprep.subr.mxu0 0.0
  %2501 = vmatpush1.msra.mxu0 0.0
  %2502 = vmatprep.subr.mxu0 0.0
  %2503 = vmatpush1.msra.mxu0 0.0
  %2504 = vmatprep.subr.mxu0 0.0
  %2505 = vmatpush1.msra.mxu0 0.0
  %2506 = vmatprep.subr.mxu0 0.0
  %2507 = vmatpush1.msra.mxu0 0.0
  %2508 = vmatprep.subr.mxu0 0.0
  %2509 = vmatpush1.msra.mxu0 0.0
  %2510 = vmatprep.subr.mxu0 0.0
  %2511 = vmatpush1.msra.mxu0 0.0
  %2512 = vmatprep.subr.mxu0 0.0
  %2513 = vmatpush1.msra.mxu0 0.0
  %2514 = vmatprep.mubr.f32.mxu0 0.0
  %2515 = vmatmul.mubr.f32.gmra.mrb[0].mxu0 %v2130
  %v2516 = vpop.f32.mrb[0].mxu0
  %v2517 = vadd.f32 0.0, %v2516
  %v2518 = vpop.f32.mrb[0].mxu0
  %2519 = vdwg.mxu0
  %v2521 = vrot.slane %v2517, 3
  %v2523 = vadd.f32 %v239, %v2521
  %v2524 = vxor.u32 %v2523, 2147483648
  %v2525 = vmul.f32 %v2524, 1.442695
  %v2526 = vpow.pop %v2525
  %v2527 = vadd.f32 %v2526, 1.0
  %v2528 = vrcp.pop %v2527
  %v2529 = vmul.f32 1.0, %v2528
  %v2530 = vtanh.pop %v2523
  %v2532 = vrot.slane %v2119, 7
  %v2534 = vmul.f32 %v2529, %v2532
  %2536 = vrot.lane.b32.xlu0 %v2530, 64
  %v2537 = vpop.permute.xlu0 %2536
  %v2539 = vmul.f32 %v2529, %v2537
  %2541 = vrot.lane.b32.xlu0 %v2539, 32
  %v2542 = vpop.permute.xlu0 %2541
  %v2544 = vadd.f32 %v2534, %v2542
  %v2545 = vtanh.pop %v2544
  %2547 = vrot.lane.b32.xlu0 %v2545, 64
  %v2548 = vpop.permute.xlu0 %2547
  %v2550 = vmul.f32 %v2529, %v2548
  %v2552 = vrot.slane %v2550, 5
  %2553 = vrot.lane.b32.xlu0 %v2552, 32
  %v2554 = vpop.permute.xlu0 %2553
  %v2555 = vsel %vm70, %v2554, 0
  %2557 = vmatprep.subr.mxu0 0.0
  %2558 = vmatpush1.msra.mxu0 %v18
  %2559 = vmatprep.subr.mxu0 0.0
  %2560 = vmatpush1.msra.mxu0 %v19
  %2561 = vmatprep.subr.mxu0 0.0
  %2562 = vmatpush1.msra.mxu0 %v20
  %2563 = vmatprep.subr.mxu0 0.0
  %2564 = vmatpush1.msra.mxu0 %v21
  %2565 = vmatprep.subr.mxu0 0.0
  %2566 = vmatpush1.msra.mxu0 0.0
  %2567 = vmatprep.subr.mxu0 0.0
  %2568 = vmatpush1.msra.mxu0 0.0
  %2569 = vmatprep.subr.mxu0 0.0
  %2570 = vmatpush1.msra.mxu0 0.0
  %2571 = vmatprep.subr.mxu0 0.0
  %2572 = vmatpush1.msra.mxu0 0.0
  %2573 = vmatprep.subr.mxu0 0.0
  %2574 = vmatpush1.msra.mxu0 0.0
  %2575 = vmatprep.subr.mxu0 0.0
  %2576 = vmatpush1.msra.mxu0 0.0
  %2577 = vmatprep.subr.mxu0 0.0
  %2578 = vmatpush1.msra.mxu0 0.0
  %2579 = vmatprep.subr.mxu0 0.0
  %2580 = vmatpush1.msra.mxu0 0.0
  %2581 = vmatprep.subr.mxu0 0.0
  %2582 = vmatpush1.msra.mxu0 0.0
  %2583 = vmatprep.subr.mxu0 0.0
  %2584 = vmatpush1.msra.mxu0 0.0
  %2585 = vmatprep.subr.mxu0 0.0
  %2586 = vmatpush1.msra.mxu0 0.0
  %2587 = vmatprep.subr.mxu0 0.0
  %2588 = vmatpush1.msra.mxu0 0.0
  %2589 = vmatprep.subr.mxu0 0.0
  %2590 = vmatpush1.msra.mxu0 0.0
  %2591 = vmatprep.subr.mxu0 0.0
  %2592 = vmatpush1.msra.mxu0 0.0
  %2593 = vmatprep.subr.mxu0 0.0
  %2594 = vmatpush1.msra.mxu0 0.0
  %2595 = vmatprep.subr.mxu0 0.0
  %2596 = vmatpush1.msra.mxu0 0.0
  %2597 = vmatprep.subr.mxu0 0.0
  %2598 = vmatpush1.msra.mxu0 0.0
  %2599 = vmatprep.subr.mxu0 0.0
  %2600 = vmatpush1.msra.mxu0 0.0
  %2601 = vmatprep.subr.mxu0 0.0
  %2602 = vmatpush1.msra.mxu0 0.0
  %2603 = vmatprep.subr.mxu0 0.0
  %2604 = vmatpush1.msra.mxu0 0.0
  %2605 = vmatprep.subr.mxu0 0.0
  %2606 = vmatpush1.msra.mxu0 0.0
  %2607 = vmatprep.subr.mxu0 0.0
  %2608 = vmatpush1.msra.mxu0 0.0
  %2609 = vmatprep.subr.mxu0 0.0
  %2610 = vmatpush1.msra.mxu0 0.0
  %2611 = vmatprep.subr.mxu0 0.0
  %2612 = vmatpush1.msra.mxu0 0.0
  %2613 = vmatprep.subr.mxu0 0.0
  %2614 = vmatpush1.msra.mxu0 0.0
  %2615 = vmatprep.subr.mxu0 0.0
  %2616 = vmatpush1.msra.mxu0 0.0
  %2617 = vmatprep.subr.mxu0 0.0
  %2618 = vmatpush1.msra.mxu0 0.0
  %2619 = vmatprep.subr.mxu0 0.0
  %2620 = vmatpush1.msra.mxu0 0.0
  %2621 = vmatprep.mubr.f32.mxu0 0.0
  %2622 = vmatmul.mubr.f32.gmra.mrb[0].mxu0 %v2555
  %v2623 = vpop.f32.mrb[0].mxu0
  %v2624 = vadd.f32 %v2447, %v2623
  %v2625 = vpop.f32.mrb[0].mxu0
  %2626 = vdwg.mxu0
  %v2627 = vadd.f32 %v2624, %v27
  %v2628 = vxor.u32 %v2627, 2147483648
  %v2629 = vmul.f32 %v2628, 1.442695
  %v2630 = vpow.pop %v2629
  %v2631 = vadd.f32 %v2630, 1.0
  %v2632 = vrcp.pop %v2631
  %v2633 = vmul.f32 1.0, %v2632
  %v2634 = vtanh.pop %v2627
  %v2635 = vmul.f32 %v2633, %v2220
  %2637 = vrot.lane.b32.xlu0 %v2634, 64
  %v2638 = vpop.permute.xlu0 %2637
  %v2640 = vmul.f32 %v2633, %v2638
  %2642 = vrot.lane.b32.xlu0 %v2640, 32
  %v2643 = vpop.permute.xlu0 %2642
  %v2645 = vadd.f32 %v2635, %v2643
  %v2646 = vtanh.pop %v2645
  %2648 = vrot.lane.b32.xlu0 %v2646, 64
  %v2649 = vpop.permute.xlu0 %2648
  %v2651 = vmul.f32 %v2633, %v2649
  %2653 = vrot.lane.b32.xlu0 %v2651, 32
  %v2654 = vpop.permute.xlu0 %2653
  %v2655 = vsel %vm70, %v2654, 0
  %2657 = vmatprep.subr.mxu0 0.0
  %2658 = vmatpush1.msra.mxu0 %v514
  %2659 = vmatprep.subr.mxu0 0.0
  %2660 = vmatpush1.msra.mxu0 %v516
  %2661 = vmatprep.subr.mxu0 0.0
  %2662 = vmatpush1.msra.mxu0 %v518
  %2663 = vmatprep.subr.mxu0 0.0
  %2664 = vmatpush1.msra.mxu0 %v520
  %2665 = vmatprep.subr.mxu0 0.0
  %2666 = vmatpush1.msra.mxu0 0.0
  %2667 = vmatprep.subr.mxu0 0.0
  %2668 = vmatpush1.msra.mxu0 0.0
  %2669 = vmatprep.subr.mxu0 0.0
  %2670 = vmatpush1.msra.mxu0 0.0
  %2671 = vmatprep.subr.mxu0 0.0
  %2672 = vmatpush1.msra.mxu0 0.0
  %2673 = vmatprep.subr.mxu0 0.0
  %2674 = vmatpush1.msra.mxu0 0.0
  %2675 = vmatprep.subr.mxu0 0.0
  %2676 = vmatpush1.msra.mxu0 0.0
  %2677 = vmatprep.subr.mxu0 0.0
  %2678 = vmatpush1.msra.mxu0 0.0
  %2679 = vmatprep.subr.mxu0 0.0
  %2680 = vmatpush1.msra.mxu0 0.0
  %2681 = vmatprep.subr.mxu0 0.0
  %2682 = vmatpush1.msra.mxu0 0.0
  %2683 = vmatprep.subr.mxu0 0.0
  %2684 = vmatpush1.msra.mxu0 0.0
  %2685 = vmatprep.subr.mxu0 0.0
  %2686 = vmatpush1.msra.mxu0 0.0
  %2687 = vmatprep.subr.mxu0 0.0
  %2688 = vmatpush1.msra.mxu0 0.0
  %2689 = vmatprep.subr.mxu0 0.0
  %2690 = vmatpush1.msra.mxu0 0.0
  %2691 = vmatprep.subr.mxu0 0.0
  %2692 = vmatpush1.msra.mxu0 0.0
  %2693 = vmatprep.subr.mxu0 0.0
  %2694 = vmatpush1.msra.mxu0 0.0
  %2695 = vmatprep.subr.mxu0 0.0
  %2696 = vmatpush1.msra.mxu0 0.0
  %2697 = vmatprep.subr.mxu0 0.0
  %2698 = vmatpush1.msra.mxu0 0.0
  %2699 = vmatprep.subr.mxu0 0.0
  %2700 = vmatpush1.msra.mxu0 0.0
  %2701 = vmatprep.subr.mxu0 0.0
  %2702 = vmatpush1.msra.mxu0 0.0
  %2703 = vmatprep.subr.mxu0 0.0
  %2704 = vmatpush1.msra.mxu0 0.0
  %2705 = vmatprep.subr.mxu0 0.0
  %2706 = vmatpush1.msra.mxu0 0.0
  %2707 = vmatprep.subr.mxu0 0.0
  %2708 = vmatpush1.msra.mxu0 0.0
  %2709 = vmatprep.subr.mxu0 0.0
  %2710 = vmatpush1.msra.mxu0 0.0
  %2711 = vmatprep.subr.mxu0 0.0
  %2712 = vmatpush1.msra.mxu0 0.0
  %2713 = vmatprep.subr.mxu0 0.0
  %2714 = vmatpush1.msra.mxu0 0.0
  %2715 = vmatprep.subr.mxu0 0.0
  %2716 = vmatpush1.msra.mxu0 0.0
  %2717 = vmatprep.subr.mxu0 0.0
  %2718 = vmatpush1.msra.mxu0 0.0
  %2719 = vmatprep.subr.mxu0 0.0
  %2720 = vmatpush1.msra.mxu0 0.0
  %2721 = vmatprep.mubr.f32.mxu0 0.0
  %2722 = vmatmul.mubr.f32.gmra.mrb[0].mxu0 %v2655
  %v2723 = vpop.f32.mrb[0].mxu0
  %v2724 = vadd.f32 %v527, %v2723
  %v2725 = vpop.f32.mrb[0].mxu0
  %2726 = vdwg.mxu0
  %2727 = vst.msk [vmem:[%s2 + $0x5] sm:$0x1] %vm601, %v2724
  %v2728 = vrot.slane %v156, 4
  %v2730 = vsel %vm953, %v2724, 0
  %v2732 = vsel %vm957, %v2728, 0
  %2734 = vmatprep.subr.mxu0 0.0
  %2735 = vmatpush1.msra.mxu0 %v2732
  %2736 = vmatprep.subr.mxu0 0.0
  %2737 = vmatpush1.msra.mxu0 0.0
  %2738 = vmatprep.subr.mxu0 0.0
  %2739 = vmatpush1.msra.mxu0 0.0
  %2740 = vmatprep.subr.mxu0 0.0
  %2741 = vmatpush1.msra.mxu0 0.0
  %2742 = vmatprep.subr.mxu0 0.0
  %2743 = vmatpush1.msra.mxu0 0.0
  %2744 = vmatprep.subr.mxu0 0.0
  %2745 = vmatpush1.msra.mxu0 0.0
  %2746 = vmatprep.subr.mxu0 0.0
  %2747 = vmatpush1.msra.mxu0 0.0
  %2748 = vmatprep.subr.mxu0 0.0
  %2749 = vmatpush1.msra.mxu0 0.0
  %2750 = vmatprep.subr.mxu0 0.0
  %2751 = vmatpush1.msra.mxu0 0.0
  %2752 = vmatprep.subr.mxu0 0.0
  %2753 = vmatpush1.msra.mxu0 0.0
  %2754 = vmatprep.subr.mxu0 0.0
  %2755 = vmatpush1.msra.mxu0 0.0
  %2756 = vmatprep.subr.mxu0 0.0
  %2757 = vmatpush1.msra.mxu0 0.0
  %2758 = vmatprep.subr.mxu0 0.0
  %2759 = vmatpush1.msra.mxu0 0.0
  %2760 = vmatprep.subr.mxu0 0.0
  %2761 = vmatpush1.msra.mxu0 0.0
  %2762 = vmatprep.subr.mxu0 0.0
  %2763 = vmatpush1.msra.mxu0 0.0
  %2764 = vmatprep.subr.mxu0 0.0
  %2765 = vmatpush1.msra.mxu0 0.0
  %2766 = vmatprep.subr.mxu0 0.0
  %2767 = vmatpush1.msra.mxu0 0.0
  %2768 = vmatprep.subr.mxu0 0.0
  %2769 = vmatpush1.msra.mxu0 0.0
  %2770 = vmatprep.subr.mxu0 0.0
  %2771 = vmatpush1.msra.mxu0 0.0
  %2772 = vmatprep.subr.mxu0 0.0
  %2773 = vmatpush1.msra.mxu0 0.0
  %2774 = vmatprep.subr.mxu0 0.0
  %2775 = vmatpush1.msra.mxu0 0.0
  %2776 = vmatprep.subr.mxu0 0.0
  %2777 = vmatpush1.msra.mxu0 0.0
  %2778 = vmatprep.subr.mxu0 0.0
  %2779 = vmatpush1.msra.mxu0 0.0
  %2780 = vmatprep.subr.mxu0 0.0
  %2781 = vmatpush1.msra.mxu0 0.0
  %2782 = vmatprep.subr.mxu0 0.0
  %2783 = vmatpush1.msra.mxu0 0.0
  %2784 = vmatprep.subr.mxu0 0.0
  %2785 = vmatpush1.msra.mxu0 0.0
  %2786 = vmatprep.subr.mxu0 0.0
  %2787 = vmatpush1.msra.mxu0 0.0
  %2788 = vmatprep.subr.mxu0 0.0
  %2789 = vmatpush1.msra.mxu0 0.0
  %2790 = vmatprep.subr.mxu0 0.0
  %2791 = vmatpush1.msra.mxu0 0.0
  %2792 = vmatprep.subr.mxu0 0.0
  %2793 = vmatpush1.msra.mxu0 0.0
  %2794 = vmatprep.subr.mxu0 0.0
  %2795 = vmatpush1.msra.mxu0 0.0
  %2796 = vmatprep.subr.mxu0 0.0
  %2797 = vmatpush1.msra.mxu0 0.0
  %2798 = vmatprep.mubr.f32.mxu0 0.0
  %2799 = vmatmul.mubr.f32.gmra.mrb[0].mxu0 %v2730
  %v2800 = vpop.f32.mrb[0].mxu0
  %v2801 = vadd.f32 0.0, %v2800
  %v2802 = vpop.f32.mrb[0].mxu0
  %2803 = vdwg.mxu0
  %v2804 = vadd.f32 %v2379, %v2801
  %2805 = vmatprep.subr.mxu0 0.0
  %2806 = vmatpush1.msra.mxu0 %v22
  %2807 = vmatprep.subr.mxu0 0.0
  %2808 = vmatpush1.msra.mxu0 %v23
  %2809 = vmatprep.subr.mxu0 0.0
  %2810 = vmatpush1.msra.mxu0 %v24
  %2811 = vmatprep.subr.mxu0 0.0
  %2812 = vmatpush1.msra.mxu0 %v25
  %2813 = vmatprep.subr.mxu0 0.0
  %2814 = vmatpush1.msra.mxu0 0.0
  %2815 = vmatprep.subr.mxu0 0.0
  %2816 = vmatpush1.msra.mxu0 0.0
  %2817 = vmatprep.subr.mxu0 0.0
  %2818 = vmatpush1.msra.mxu0 0.0
  %2819 = vmatprep.subr.mxu0 0.0
  %2820 = vmatpush1.msra.mxu0 0.0
  %2821 = vmatprep.subr.mxu0 0.0
  %2822 = vmatpush1.msra.mxu0 0.0
  %2823 = vmatprep.subr.mxu0 0.0
  %2824 = vmatpush1.msra.mxu0 0.0
  %2825 = vmatprep.subr.mxu0 0.0
  %2826 = vmatpush1.msra.mxu0 0.0
  %2827 = vmatprep.subr.mxu0 0.0
  %2828 = vmatpush1.msra.mxu0 0.0
  %2829 = vmatprep.subr.mxu0 0.0
  %2830 = vmatpush1.msra.mxu0 0.0
  %2831 = vmatprep.subr.mxu0 0.0
  %2832 = vmatpush1.msra.mxu0 0.0
  %2833 = vmatprep.subr.mxu0 0.0
  %2834 = vmatpush1.msra.mxu0 0.0
  %2835 = vmatprep.subr.mxu0 0.0
  %2836 = vmatpush1.msra.mxu0 0.0
  %2837 = vmatprep.subr.mxu0 0.0
  %2838 = vmatpush1.msra.mxu0 0.0
  %2839 = vmatprep.subr.mxu0 0.0
  %2840 = vmatpush1.msra.mxu0 0.0
  %2841 = vmatprep.subr.mxu0 0.0
  %2842 = vmatpush1.msra.mxu0 0.0
  %2843 = vmatprep.subr.mxu0 0.0
  %2844 = vmatpush1.msra.mxu0 0.0
  %2845 = vmatprep.subr.mxu0 0.0
  %2846 = vmatpush1.msra.mxu0 0.0
  %2847 = vmatprep.subr.mxu0 0.0
  %2848 = vmatpush1.msra.mxu0 0.0
  %2849 = vmatprep.subr.mxu0 0.0
  %2850 = vmatpush1.msra.mxu0 0.0
  %2851 = vmatprep.subr.mxu0 0.0
  %2852 = vmatpush1.msra.mxu0 0.0
  %2853 = vmatprep.subr.mxu0 0.0
  %2854 = vmatpush1.msra.mxu0 0.0
  %2855 = vmatprep.subr.mxu0 0.0
  %2856 = vmatpush1.msra.mxu0 0.0
  %2857 = vmatprep.subr.mxu0 0.0
  %2858 = vmatpush1.msra.mxu0 0.0
  %2859 = vmatprep.subr.mxu0 0.0
  %2860 = vmatpush1.msra.mxu0 0.0
  %2861 = vmatprep.subr.mxu0 0.0
  %2862 = vmatpush1.msra.mxu0 0.0
  %2863 = vmatprep.subr.mxu0 0.0
  %2864 = vmatpush1.msra.mxu0 0.0
  %2865 = vmatprep.subr.mxu0 0.0
  %2866 = vmatpush1.msra.mxu0 0.0
  %2867 = vmatprep.subr.mxu0 0.0
  %2868 = vmatpush1.msra.mxu0 0.0
  %2869 = vmatprep.mubr.f32.mxu0 0.0
  %2870 = vmatmul.mubr.f32.gmra.mrb[0].mxu0 %v2655
  %v2871 = vpop.f32.mrb[0].mxu0
  %v2872 = vadd.f32 0.0, %v2871
  %v2873 = vpop.f32.mrb[0].mxu0
  %2874 = vdwg.mxu0
  %2875 = vmatprep.subr.mxu0 0.0
  %2876 = vmatpush1.msra.mxu0 %v14
  %2877 = vmatprep.subr.mxu0 0.0
  %2878 = vmatpush1.msra.mxu0 %v15
  %2879 = vmatprep.subr.mxu0 0.0
  %2880 = vmatpush1.msra.mxu0 %v16
  %2881 = vmatprep.subr.mxu0 0.0
  %2882 = vmatpush1.msra.mxu0 %v17
  %2883 = vmatprep.subr.mxu0 0.0
  %2884 = vmatpush1.msra.mxu0 0.0
  %2885 = vmatprep.subr.mxu0 0.0
  %2886 = vmatpush1.msra.mxu0 0.0
  %2887 = vmatprep.subr.mxu0 0.0
  %2888 = vmatpush1.msra.mxu0 0.0
  %2889 = vmatprep.subr.mxu0 0.0
  %2890 = vmatpush1.msra.mxu0 0.0
  %2891 = vmatprep.subr.mxu0 0.0
  %2892 = vmatpush1.msra.mxu0 0.0
  %2893 = vmatprep.subr.mxu0 0.0
  %2894 = vmatpush1.msra.mxu0 0.0
  %2895 = vmatprep.subr.mxu0 0.0
  %2896 = vmatpush1.msra.mxu0 0.0
  %2897 = vmatprep.subr.mxu0 0.0
  %2898 = vmatpush1.msra.mxu0 0.0
  %2899 = vmatprep.subr.mxu0 0.0
  %2900 = vmatpush1.msra.mxu0 0.0
  %2901 = vmatprep.subr.mxu0 0.0
  %2902 = vmatpush1.msra.mxu0 0.0
  %2903 = vmatprep.subr.mxu0 0.0
  %2904 = vmatpush1.msra.mxu0 0.0
  %2905 = vmatprep.subr.mxu0 0.0
  %2906 = vmatpush1.msra.mxu0 0.0
  %2907 = vmatprep.subr.mxu0 0.0
  %2908 = vmatpush1.msra.mxu0 0.0
  %2909 = vmatprep.subr.mxu0 0.0
  %2910 = vmatpush1.msra.mxu0 0.0
  %2911 = vmatprep.subr.mxu0 0.0
  %2912 = vmatpush1.msra.mxu0 0.0
  %2913 = vmatprep.subr.mxu0 0.0
  %2914 = vmatpush1.msra.mxu0 0.0
  %2915 = vmatprep.subr.mxu0 0.0
  %2916 = vmatpush1.msra.mxu0 0.0
  %2917 = vmatprep.subr.mxu0 0.0
  %2918 = vmatpush1.msra.mxu0 0.0
  %2919 = vmatprep.subr.mxu0 0.0
  %2920 = vmatpush1.msra.mxu0 0.0
  %2921 = vmatprep.subr.mxu0 0.0
  %2922 = vmatpush1.msra.mxu0 0.0
  %2923 = vmatprep.subr.mxu0 0.0
  %2924 = vmatpush1.msra.mxu0 0.0
  %2925 = vmatprep.subr.mxu0 0.0
  %2926 = vmatpush1.msra.mxu0 0.0
  %2927 = vmatprep.subr.mxu0 0.0
  %2928 = vmatpush1.msra.mxu0 0.0
  %2929 = vmatprep.subr.mxu0 0.0
  %2930 = vmatpush1.msra.mxu0 0.0
  %2931 = vmatprep.subr.mxu0 0.0
  %2932 = vmatpush1.msra.mxu0 0.0
  %2933 = vmatprep.subr.mxu0 0.0
  %2934 = vmatpush1.msra.mxu0 0.0
  %2935 = vmatprep.subr.mxu0 0.0
  %2936 = vmatpush1.msra.mxu0 0.0
  %2937 = vmatprep.subr.mxu0 0.0
  %2938 = vmatpush1.msra.mxu0 0.0
  %2939 = vmatprep.mubr.f32.mxu0 0.0
  %2940 = vmatmul.mubr.f32.gmra.mrb[0].mxu0 %v2555
  %v2941 = vpop.f32.mrb[0].mxu0
  %v2942 = vadd.f32 0.0, %v2941
  %v2943 = vpop.f32.mrb[0].mxu0
  %2944 = vdwg.mxu0
  %v2946 = vrot.slane %v2942, 2
  %v2948 = vadd.f32 %v239, %v2946
  %v2949 = vxor.u32 %v2948, 2147483648
  %v2950 = vmul.f32 %v2949, 1.442695
  %v2951 = vpow.pop %v2950
  %v2952 = vadd.f32 %v2951, 1.0
  %v2953 = vrcp.pop %v2952
  %v2954 = vmul.f32 1.0, %v2953
  %v2955 = vtanh.pop %v2948
  %v2957 = vrot.slane %v2544, 7
  %v2959 = vmul.f32 %v2954, %v2957
  %2961 = vrot.lane.b32.xlu0 %v2955, 64
  %v2962 = vpop.permute.xlu0 %2961
  %v2964 = vmul.f32 %v2954, %v2962
  %2966 = vrot.lane.b32.xlu0 %v2964, 32
  %v2967 = vpop.permute.xlu0 %2966
  %v2969 = vadd.f32 %v2959, %v2967
  %v2970 = vtanh.pop %v2969
  %2972 = vrot.lane.b32.xlu0 %v2970, 64
  %v2973 = vpop.permute.xlu0 %2972
  %v2975 = vmul.f32 %v2954, %v2973
  %v2977 = vrot.slane %v2975, 6
  %2978 = vrot.lane.b32.xlu0 %v2977, 32
  %v2979 = vpop.permute.xlu0 %2978
  %v2980 = vsel %vm70, %v2979, 0
  %2982 = vmatprep.subr.mxu0 0.0
  %2983 = vmatpush1.msra.mxu0 %v18
  %2984 = vmatprep.subr.mxu0 0.0
  %2985 = vmatpush1.msra.mxu0 %v19
  %2986 = vmatprep.subr.mxu0 0.0
  %2987 = vmatpush1.msra.mxu0 %v20
  %2988 = vmatprep.subr.mxu0 0.0
  %2989 = vmatpush1.msra.mxu0 %v21
  %2990 = vmatprep.subr.mxu0 0.0
  %2991 = vmatpush1.msra.mxu0 0.0
  %2992 = vmatprep.subr.mxu0 0.0
  %2993 = vmatpush1.msra.mxu0 0.0
  %2994 = vmatprep.subr.mxu0 0.0
  %2995 = vmatpush1.msra.mxu0 0.0
  %2996 = vmatprep.subr.mxu0 0.0
  %2997 = vmatpush1.msra.mxu0 0.0
  %2998 = vmatprep.subr.mxu0 0.0
  %2999 = vmatpush1.msra.mxu0 0.0
  %3000 = vmatprep.subr.mxu0 0.0
  %3001 = vmatpush1.msra.mxu0 0.0
  %3002 = vmatprep.subr.mxu0 0.0
  %3003 = vmatpush1.msra.mxu0 0.0
  %3004 = vmatprep.subr.mxu0 0.0
  %3005 = vmatpush1.msra.mxu0 0.0
  %3006 = vmatprep.subr.mxu0 0.0
  %3007 = vmatpush1.msra.mxu0 0.0
  %3008 = vmatprep.subr.mxu0 0.0
  %3009 = vmatpush1.msra.mxu0 0.0
  %3010 = vmatprep.subr.mxu0 0.0
  %3011 = vmatpush1.msra.mxu0 0.0
  %3012 = vmatprep.subr.mxu0 0.0
  %3013 = vmatpush1.msra.mxu0 0.0
  %3014 = vmatprep.subr.mxu0 0.0
  %3015 = vmatpush1.msra.mxu0 0.0
  %3016 = vmatprep.subr.mxu0 0.0
  %3017 = vmatpush1.msra.mxu0 0.0
  %3018 = vmatprep.subr.mxu0 0.0
  %3019 = vmatpush1.msra.mxu0 0.0
  %3020 = vmatprep.subr.mxu0 0.0
  %3021 = vmatpush1.msra.mxu0 0.0
  %3022 = vmatprep.subr.mxu0 0.0
  %3023 = vmatpush1.msra.mxu0 0.0
  %3024 = vmatprep.subr.mxu0 0.0
  %3025 = vmatpush1.msra.mxu0 0.0
  %3026 = vmatprep.subr.mxu0 0.0
  %3027 = vmatpush1.msra.mxu0 0.0
  %3028 = vmatprep.subr.mxu0 0.0
  %3029 = vmatpush1.msra.mxu0 0.0
  %3030 = vmatprep.subr.mxu0 0.0
  %3031 = vmatpush1.msra.mxu0 0.0
  %3032 = vmatprep.subr.mxu0 0.0
  %3033 = vmatpush1.msra.mxu0 0.0
  %3034 = vmatprep.subr.mxu0 0.0
  %3035 = vmatpush1.msra.mxu0 0.0
  %3036 = vmatprep.subr.mxu0 0.0
  %3037 = vmatpush1.msra.mxu0 0.0
  %3038 = vmatprep.subr.mxu0 0.0
  %3039 = vmatpush1.msra.mxu0 0.0
  %3040 = vmatprep.subr.mxu0 0.0
  %3041 = vmatpush1.msra.mxu0 0.0
  %3042 = vmatprep.subr.mxu0 0.0
  %3043 = vmatpush1.msra.mxu0 0.0
  %3044 = vmatprep.subr.mxu0 0.0
  %3045 = vmatpush1.msra.mxu0 0.0
  %3046 = vmatprep.mubr.f32.mxu0 0.0
  %3047 = vmatmul.mubr.f32.gmra.mrb[0].mxu0 %v2980
  %v3048 = vpop.f32.mrb[0].mxu0
  %v3049 = vadd.f32 %v2872, %v3048
  %v3050 = vpop.f32.mrb[0].mxu0
  %3051 = vdwg.mxu0
  %v3052 = vadd.f32 %v3049, %v27
  %v3053 = vxor.u32 %v3052, 2147483648
  %v3054 = vmul.f32 %v3053, 1.442695
  %v3055 = vpow.pop %v3054
  %v3056 = vadd.f32 %v3055, 1.0
  %v3057 = vrcp.pop %v3056
  %v3058 = vmul.f32 1.0, %v3057
  %v3059 = vtanh.pop %v3052
  %v3060 = vmul.f32 %v3058, %v2645
  %3062 = vrot.lane.b32.xlu0 %v3059, 64
  %v3063 = vpop.permute.xlu0 %3062
  %v3065 = vmul.f32 %v3058, %v3063
  %3067 = vrot.lane.b32.xlu0 %v3065, 32
  %v3068 = vpop.permute.xlu0 %3067
  %v3070 = vadd.f32 %v3060, %v3068
  %v3071 = vtanh.pop %v3070
  %3073 = vrot.lane.b32.xlu0 %v3071, 64
  %v3074 = vpop.permute.xlu0 %3073
  %v3076 = vmul.f32 %v3058, %v3074
  %3078 = vrot.lane.b32.xlu0 %v3076, 32
  %v3079 = vpop.permute.xlu0 %3078
  %v3080 = vsel %vm70, %v3079, 0
  %3082 = vmatprep.subr.mxu0 0.0
  %3083 = vmatpush1.msra.mxu0 %v514
  %3084 = vmatprep.subr.mxu0 0.0
  %3085 = vmatpush1.msra.mxu0 %v516
  %3086 = vmatprep.subr.mxu0 0.0
  %3087 = vmatpush1.msra.mxu0 %v518
  %3088 = vmatprep.subr.mxu0 0.0
  %3089 = vmatpush1.msra.mxu0 %v520
  %3090 = vmatprep.subr.mxu0 0.0
  %3091 = vmatpush1.msra.mxu0 0.0
  %3092 = vmatprep.subr.mxu0 0.0
  %3093 = vmatpush1.msra.mxu0 0.0
  %3094 = vmatprep.subr.mxu0 0.0
  %3095 = vmatpush1.msra.mxu0 0.0
  %3096 = vmatprep.subr.mxu0 0.0
  %3097 = vmatpush1.msra.mxu0 0.0
  %3098 = vmatprep.subr.mxu0 0.0
  %3099 = vmatpush1.msra.mxu0 0.0
  %3100 = vmatprep.subr.mxu0 0.0
  %3101 = vmatpush1.msra.mxu0 0.0
  %3102 = vmatprep.subr.mxu0 0.0
  %3103 = vmatpush1.msra.mxu0 0.0
  %3104 = vmatprep.subr.mxu0 0.0
  %3105 = vmatpush1.msra.mxu0 0.0
  %3106 = vmatprep.subr.mxu0 0.0
  %3107 = vmatpush1.msra.mxu0 0.0
  %3108 = vmatprep.subr.mxu0 0.0
  %3109 = vmatpush1.msra.mxu0 0.0
  %3110 = vmatprep.subr.mxu0 0.0
  %3111 = vmatpush1.msra.mxu0 0.0
  %3112 = vmatprep.subr.mxu0 0.0
  %3113 = vmatpush1.msra.mxu0 0.0
  %3114 = vmatprep.subr.mxu0 0.0
  %3115 = vmatpush1.msra.mxu0 0.0
  %3116 = vmatprep.subr.mxu0 0.0
  %3117 = vmatpush1.msra.mxu0 0.0
  %3118 = vmatprep.subr.mxu0 0.0
  %3119 = vmatpush1.msra.mxu0 0.0
  %3120 = vmatprep.subr.mxu0 0.0
  %3121 = vmatpush1.msra.mxu0 0.0
  %3122 = vmatprep.subr.mxu0 0.0
  %3123 = vmatpush1.msra.mxu0 0.0
  %3124 = vmatprep.subr.mxu0 0.0
  %3125 = vmatpush1.msra.mxu0 0.0
  %3126 = vmatprep.subr.mxu0 0.0
  %3127 = vmatpush1.msra.mxu0 0.0
  %3128 = vmatprep.subr.mxu0 0.0
  %3129 = vmatpush1.msra.mxu0 0.0
  %3130 = vmatprep.subr.mxu0 0.0
  %3131 = vmatpush1.msra.mxu0 0.0
  %3132 = vmatprep.subr.mxu0 0.0
  %3133 = vmatpush1.msra.mxu0 0.0
  %3134 = vmatprep.subr.mxu0 0.0
  %3135 = vmatpush1.msra.mxu0 0.0
  %3136 = vmatprep.subr.mxu0 0.0
  %3137 = vmatpush1.msra.mxu0 0.0
  %3138 = vmatprep.subr.mxu0 0.0
  %3139 = vmatpush1.msra.mxu0 0.0
  %3140 = vmatprep.subr.mxu0 0.0
  %3141 = vmatpush1.msra.mxu0 0.0
  %3142 = vmatprep.subr.mxu0 0.0
  %3143 = vmatpush1.msra.mxu0 0.0
  %3144 = vmatprep.subr.mxu0 0.0
  %3145 = vmatpush1.msra.mxu0 0.0
  %3146 = vmatprep.mubr.f32.mxu0 0.0
  %3147 = vmatmul.mubr.f32.gmra.mrb[0].mxu0 %v3080
  %v3148 = vpop.f32.mrb[0].mxu0
  %v3149 = vadd.f32 %v527, %v3148
  %v3150 = vpop.f32.mrb[0].mxu0
  %3151 = vdwg.mxu0
  %3152 = vst.msk [vmem:[%s2 + $0x6] sm:$0x1] %vm601, %v3149
  %v3154 = vsel %vm953, %v3149, 0
  %v3157 = vsel %vm957, %v161, 0
  %3159 = vmatprep.subr.mxu0 0.0
  %3160 = vmatpush1.msra.mxu0 %v3157
  %3161 = vmatprep.subr.mxu0 0.0
  %3162 = vmatpush1.msra.mxu0 0.0
  %3163 = vmatprep.subr.mxu0 0.0
  %3164 = vmatpush1.msra.mxu0 0.0
  %3165 = vmatprep.subr.mxu0 0.0
  %3166 = vmatpush1.msra.mxu0 0.0
  %3167 = vmatprep.subr.mxu0 0.0
  %3168 = vmatpush1.msra.mxu0 0.0
  %3169 = vmatprep.subr.mxu0 0.0
  %3170 = vmatpush1.msra.mxu0 0.0
  %3171 = vmatprep.subr.mxu0 0.0
  %3172 = vmatpush1.msra.mxu0 0.0
  %3173 = vmatprep.subr.mxu0 0.0
  %3174 = vmatpush1.msra.mxu0 0.0
  %3175 = vmatprep.subr.mxu0 0.0
  %3176 = vmatpush1.msra.mxu0 0.0
  %3177 = vmatprep.subr.mxu0 0.0
  %3178 = vmatpush1.msra.mxu0 0.0
  %3179 = vmatprep.subr.mxu0 0.0
  %3180 = vmatpush1.msra.mxu0 0.0
  %3181 = vmatprep.subr.mxu0 0.0
  %3182 = vmatpush1.msra.mxu0 0.0
  %3183 = vmatprep.subr.mxu0 0.0
  %3184 = vmatpush1.msra.mxu0 0.0
  %3185 = vmatprep.subr.mxu0 0.0
  %3186 = vmatpush1.msra.mxu0 0.0
  %3187 = vmatprep.subr.mxu0 0.0
  %3188 = vmatpush1.msra.mxu0 0.0
  %3189 = vmatprep.subr.mxu0 0.0
  %3190 = vmatpush1.msra.mxu0 0.0
  %3191 = vmatprep.subr.mxu0 0.0
  %3192 = vmatpush1.msra.mxu0 0.0
  %3193 = vmatprep.subr.mxu0 0.0
  %3194 = vmatpush1.msra.mxu0 0.0
  %3195 = vmatprep.subr.mxu0 0.0
  %3196 = vmatpush1.msra.mxu0 0.0
  %3197 = vmatprep.subr.mxu0 0.0
  %3198 = vmatpush1.msra.mxu0 0.0
  %3199 = vmatprep.subr.mxu0 0.0
  %3200 = vmatpush1.msra.mxu0 0.0
  %3201 = vmatprep.subr.mxu0 0.0
  %3202 = vmatpush1.msra.mxu0 0.0
  %3203 = vmatprep.subr.mxu0 0.0
  %3204 = vmatpush1.msra.mxu0 0.0
  %3205 = vmatprep.subr.mxu0 0.0
  %3206 = vmatpush1.msra.mxu0 0.0
  %3207 = vmatprep.subr.mxu0 0.0
  %3208 = vmatpush1.msra.mxu0 0.0
  %3209 = vmatprep.subr.mxu0 0.0
  %3210 = vmatpush1.msra.mxu0 0.0
  %3211 = vmatprep.subr.mxu0 0.0
  %3212 = vmatpush1.msra.mxu0 0.0
  %3213 = vmatprep.subr.mxu0 0.0
  %3214 = vmatpush1.msra.mxu0 0.0
  %3215 = vmatprep.subr.mxu0 0.0
  %3216 = vmatpush1.msra.mxu0 0.0
  %3217 = vmatprep.subr.mxu0 0.0
  %3218 = vmatpush1.msra.mxu0 0.0
  %3219 = vmatprep.subr.mxu0 0.0
  %3220 = vmatpush1.msra.mxu0 0.0
  %3221 = vmatprep.subr.mxu0 0.0
  %3222 = vmatpush1.msra.mxu0 0.0
  %3223 = vmatprep.mubr.f32.mxu0 0.0
  %3224 = vmatmul.mubr.f32.gmra.mrb[0].mxu0 %v3154
  %v3225 = vpop.f32.mrb[0].mxu0
  %v3226 = vadd.f32 0.0, %v3225
  %v3227 = vpop.f32.mrb[0].mxu0
  %3228 = vdwg.mxu0
  %v3229 = vadd.f32 %v2804, %v3226
  %3230 = vmatprep.subr.mxu0 0.0
  %3231 = vmatpush1.msra.mxu0 %v22
  %3232 = vmatprep.subr.mxu0 0.0
  %3233 = vmatpush1.msra.mxu0 %v23
  %3234 = vmatprep.subr.mxu0 0.0
  %3235 = vmatpush1.msra.mxu0 %v24
  %3236 = vmatprep.subr.mxu0 0.0
  %3237 = vmatpush1.msra.mxu0 %v25
  %3238 = vmatprep.subr.mxu0 0.0
  %3239 = vmatpush1.msra.mxu0 0.0
  %3240 = vmatprep.subr.mxu0 0.0
  %3241 = vmatpush1.msra.mxu0 0.0
  %3242 = vmatprep.subr.mxu0 0.0
  %3243 = vmatpush1.msra.mxu0 0.0
  %3244 = vmatprep.subr.mxu0 0.0
  %3245 = vmatpush1.msra.mxu0 0.0
  %3246 = vmatprep.subr.mxu0 0.0
  %3247 = vmatpush1.msra.mxu0 0.0
  %3248 = vmatprep.subr.mxu0 0.0
  %3249 = vmatpush1.msra.mxu0 0.0
  %3250 = vmatprep.subr.mxu0 0.0
  %3251 = vmatpush1.msra.mxu0 0.0
  %3252 = vmatprep.subr.mxu0 0.0
  %3253 = vmatpush1.msra.mxu0 0.0
  %3254 = vmatprep.subr.mxu0 0.0
  %3255 = vmatpush1.msra.mxu0 0.0
  %3256 = vmatprep.subr.mxu0 0.0
  %3257 = vmatpush1.msra.mxu0 0.0
  %3258 = vmatprep.subr.mxu0 0.0
  %3259 = vmatpush1.msra.mxu0 0.0
  %3260 = vmatprep.subr.mxu0 0.0
  %3261 = vmatpush1.msra.mxu0 0.0
  %3262 = vmatprep.subr.mxu0 0.0
  %3263 = vmatpush1.msra.mxu0 0.0
  %3264 = vmatprep.subr.mxu0 0.0
  %3265 = vmatpush1.msra.mxu0 0.0
  %3266 = vmatprep.subr.mxu0 0.0
  %3267 = vmatpush1.msra.mxu0 0.0
  %3268 = vmatprep.subr.mxu0 0.0
  %3269 = vmatpush1.msra.mxu0 0.0
  %3270 = vmatprep.subr.mxu0 0.0
  %3271 = vmatpush1.msra.mxu0 0.0
  %3272 = vmatprep.subr.mxu0 0.0
  %3273 = vmatpush1.msra.mxu0 0.0
  %3274 = vmatprep.subr.mxu0 0.0
  %3275 = vmatpush1.msra.mxu0 0.0
  %3276 = vmatprep.subr.mxu0 0.0
  %3277 = vmatpush1.msra.mxu0 0.0
  %3278 = vmatprep.subr.mxu0 0.0
  %3279 = vmatpush1.msra.mxu0 0.0
  %3280 = vmatprep.subr.mxu0 0.0
  %3281 = vmatpush1.msra.mxu0 0.0
  %3282 = vmatprep.subr.mxu0 0.0
  %3283 = vmatpush1.msra.mxu0 0.0
  %3284 = vmatprep.subr.mxu0 0.0
  %3285 = vmatpush1.msra.mxu0 0.0
  %3286 = vmatprep.subr.mxu0 0.0
  %3287 = vmatpush1.msra.mxu0 0.0
  %3288 = vmatprep.subr.mxu0 0.0
  %3289 = vmatpush1.msra.mxu0 0.0
  %3290 = vmatprep.subr.mxu0 0.0
  %3291 = vmatpush1.msra.mxu0 0.0
  %3292 = vmatprep.subr.mxu0 0.0
  %3293 = vmatpush1.msra.mxu0 0.0
  %3294 = vmatprep.mubr.f32.mxu0 0.0
  %3295 = vmatmul.mubr.f32.gmra.mrb[0].mxu0 %v3080
  %v3296 = vpop.f32.mrb[0].mxu0
  %v3297 = vadd.f32 0.0, %v3296
  %v3298 = vpop.f32.mrb[0].mxu0
  %3299 = vdwg.mxu0
  %3300 = vmatprep.subr.mxu0 0.0
  %3301 = vmatpush1.msra.mxu0 %v14
  %3302 = vmatprep.subr.mxu0 0.0
  %3303 = vmatpush1.msra.mxu0 %v15
  %3304 = vmatprep.subr.mxu0 0.0
  %3305 = vmatpush1.msra.mxu0 %v16
  %3306 = vmatprep.subr.mxu0 0.0
  %3307 = vmatpush1.msra.mxu0 %v17
  %3308 = vmatprep.subr.mxu0 0.0
  %3309 = vmatpush1.msra.mxu0 0.0
  %3310 = vmatprep.subr.mxu0 0.0
  %3311 = vmatpush1.msra.mxu0 0.0
  %3312 = vmatprep.subr.mxu0 0.0
  %3313 = vmatpush1.msra.mxu0 0.0
  %3314 = vmatprep.subr.mxu0 0.0
  %3315 = vmatpush1.msra.mxu0 0.0
  %3316 = vmatprep.subr.mxu0 0.0
  %3317 = vmatpush1.msra.mxu0 0.0
  %3318 = vmatprep.subr.mxu0 0.0
  %3319 = vmatpush1.msra.mxu0 0.0
  %3320 = vmatprep.subr.mxu0 0.0
  %3321 = vmatpush1.msra.mxu0 0.0
  %3322 = vmatprep.subr.mxu0 0.0
  %3323 = vmatpush1.msra.mxu0 0.0
  %3324 = vmatprep.subr.mxu0 0.0
  %3325 = vmatpush1.msra.mxu0 0.0
  %3326 = vmatprep.subr.mxu0 0.0
  %3327 = vmatpush1.msra.mxu0 0.0
  %3328 = vmatprep.subr.mxu0 0.0
  %3329 = vmatpush1.msra.mxu0 0.0
  %3330 = vmatprep.subr.mxu0 0.0
  %3331 = vmatpush1.msra.mxu0 0.0
  %3332 = vmatprep.subr.mxu0 0.0
  %3333 = vmatpush1.msra.mxu0 0.0
  %3334 = vmatprep.subr.mxu0 0.0
  %3335 = vmatpush1.msra.mxu0 0.0
  %3336 = vmatprep.subr.mxu0 0.0
  %3337 = vmatpush1.msra.mxu0 0.0
  %3338 = vmatprep.subr.mxu0 0.0
  %3339 = vmatpush1.msra.mxu0 0.0
  %3340 = vmatprep.subr.mxu0 0.0
  %3341 = vmatpush1.msra.mxu0 0.0
  %3342 = vmatprep.subr.mxu0 0.0
  %3343 = vmatpush1.msra.mxu0 0.0
  %3344 = vmatprep.subr.mxu0 0.0
  %3345 = vmatpush1.msra.mxu0 0.0
  %3346 = vmatprep.subr.mxu0 0.0
  %3347 = vmatpush1.msra.mxu0 0.0
  %3348 = vmatprep.subr.mxu0 0.0
  %3349 = vmatpush1.msra.mxu0 0.0
  %3350 = vmatprep.subr.mxu0 0.0
  %3351 = vmatpush1.msra.mxu0 0.0
  %3352 = vmatprep.subr.mxu0 0.0
  %3353 = vmatpush1.msra.mxu0 0.0
  %3354 = vmatprep.subr.mxu0 0.0
  %3355 = vmatpush1.msra.mxu0 0.0
  %3356 = vmatprep.subr.mxu0 0.0
  %3357 = vmatpush1.msra.mxu0 0.0
  %3358 = vmatprep.subr.mxu0 0.0
  %3359 = vmatpush1.msra.mxu0 0.0
  %3360 = vmatprep.subr.mxu0 0.0
  %3361 = vmatpush1.msra.mxu0 0.0
  %3362 = vmatprep.subr.mxu0 0.0
  %3363 = vmatpush1.msra.mxu0 0.0
  %3364 = vmatprep.mubr.f32.mxu0 0.0
  %3365 = vmatmul.mubr.f32.gmra.mrb[0].mxu0 %v2980
  %v3366 = vpop.f32.mrb[0].mxu0
  %v3367 = vadd.f32 0.0, %v3366
  %v3368 = vpop.f32.mrb[0].mxu0
  %3369 = vdwg.mxu0
  %v3371 = vrot.slane %v3367, 1
  %v3373 = vadd.f32 %v239, %v3371
  %v3374 = vxor.u32 %v3373, 2147483648
  %v3375 = vmul.f32 %v3374, 1.442695
  %v3376 = vpow.pop %v3375
  %v3377 = vadd.f32 %v3376, 1.0
  %v3378 = vrcp.pop %v3377
  %v3379 = vmul.f32 1.0, %v3378
  %v3380 = vtanh.pop %v3373
  %v3382 = vrot.slane %v2969, 7
  %v3384 = vmul.f32 %v3379, %v3382
  %3386 = vrot.lane.b32.xlu0 %v3380, 64
  %v3387 = vpop.permute.xlu0 %3386
  %v3389 = vmul.f32 %v3379, %v3387
  %3391 = vrot.lane.b32.xlu0 %v3389, 32
  %v3392 = vpop.permute.xlu0 %3391
  %v3394 = vadd.f32 %v3384, %v3392
  %v3395 = vtanh.pop %v3394
  %3397 = vrot.lane.b32.xlu0 %v3395, 64
  %v3398 = vpop.permute.xlu0 %3397
  %v3400 = vmul.f32 %v3379, %v3398
  %v3402 = vrot.slane %v3400, 7
  %3403 = vrot.lane.b32.xlu0 %v3402, 32
  %v3404 = vpop.permute.xlu0 %3403
  %v3405 = vsel %vm70, %v3404, 0
  %3407 = vmatprep.subr.mxu0 0.0
  %3408 = vmatpush1.msra.mxu0 %v18
  %3409 = vmatprep.subr.mxu0 0.0
  %3410 = vmatpush1.msra.mxu0 %v19
  %3411 = vmatprep.subr.mxu0 0.0
  %3412 = vmatpush1.msra.mxu0 %v20
  %3413 = vmatprep.subr.mxu0 0.0
  %3414 = vmatpush1.msra.mxu0 %v21
  %3415 = vmatprep.subr.mxu0 0.0
  %3416 = vmatpush1.msra.mxu0 0.0
  %3417 = vmatprep.subr.mxu0 0.0
  %3418 = vmatpush1.msra.mxu0 0.0
  %3419 = vmatprep.subr.mxu0 0.0
  %3420 = vmatpush1.msra.mxu0 0.0
  %3421 = vmatprep.subr.mxu0 0.0
  %3422 = vmatpush1.msra.mxu0 0.0
  %3423 = vmatprep.subr.mxu0 0.0
  %3424 = vmatpush1.msra.mxu0 0.0
  %3425 = vmatprep.subr.mxu0 0.0
  %3426 = vmatpush1.msra.mxu0 0.0
  %3427 = vmatprep.subr.mxu0 0.0
  %3428 = vmatpush1.msra.mxu0 0.0
  %3429 = vmatprep.subr.mxu0 0.0
  %3430 = vmatpush1.msra.mxu0 0.0
  %3431 = vmatprep.subr.mxu0 0.0
  %3432 = vmatpush1.msra.mxu0 0.0
  %3433 = vmatprep.subr.mxu0 0.0
  %3434 = vmatpush1.msra.mxu0 0.0
  %3435 = vmatprep.subr.mxu0 0.0
  %3436 = vmatpush1.msra.mxu0 0.0
  %3437 = vmatprep.subr.mxu0 0.0
  %3438 = vmatpush1.msra.mxu0 0.0
  %3439 = vmatprep.subr.mxu0 0.0
  %3440 = vmatpush1.msra.mxu0 0.0
  %3441 = vmatprep.subr.mxu0 0.0
  %3442 = vmatpush1.msra.mxu0 0.0
  %3443 = vmatprep.subr.mxu0 0.0
  %3444 = vmatpush1.msra.mxu0 0.0
  %3445 = vmatprep.subr.mxu0 0.0
  %3446 = vmatpush1.msra.mxu0 0.0
  %3447 = vmatprep.subr.mxu0 0.0
  %3448 = vmatpush1.msra.mxu0 0.0
  %3449 = vmatprep.subr.mxu0 0.0
  %3450 = vmatpush1.msra.mxu0 0.0
  %3451 = vmatprep.subr.mxu0 0.0
  %3452 = vmatpush1.msra.mxu0 0.0
  %3453 = vmatprep.subr.mxu0 0.0
  %3454 = vmatpush1.msra.mxu0 0.0
  %3455 = vmatprep.subr.mxu0 0.0
  %3456 = vmatpush1.msra.mxu0 0.0
  %3457 = vmatprep.subr.mxu0 0.0
  %3458 = vmatpush1.msra.mxu0 0.0
  %3459 = vmatprep.subr.mxu0 0.0
  %3460 = vmatpush1.msra.mxu0 0.0
  %3461 = vmatprep.subr.mxu0 0.0
  %3462 = vmatpush1.msra.mxu0 0.0
  %3463 = vmatprep.subr.mxu0 0.0
  %3464 = vmatpush1.msra.mxu0 0.0
  %3465 = vmatprep.subr.mxu0 0.0
  %3466 = vmatpush1.msra.mxu0 0.0
  %3467 = vmatprep.subr.mxu0 0.0
  %3468 = vmatpush1.msra.mxu0 0.0
  %3469 = vmatprep.subr.mxu0 0.0
  %3470 = vmatpush1.msra.mxu0 0.0
  %3471 = vmatprep.mubr.f32.mxu0 0.0
  %3472 = vmatmul.mubr.f32.gmra.mrb[0].mxu0 %v3405
  %v3473 = vpop.f32.mrb[0].mxu0
  %v3474 = vadd.f32 %v3297, %v3473
  %v3475 = vpop.f32.mrb[0].mxu0
  %3476 = vdwg.mxu0
  %v3477 = vadd.f32 %v3474, %v27
  %v3478 = vxor.u32 %v3477, 2147483648
  %v3479 = vmul.f32 %v3478, 1.442695
  %v3480 = vpow.pop %v3479
  %v3481 = vadd.f32 %v3480, 1.0
  %v3482 = vrcp.pop %v3481
  %v3483 = vmul.f32 1.0, %v3482
  %v3484 = vtanh.pop %v3477
  %v3485 = vmul.f32 %v3483, %v3070
  %3487 = vrot.lane.b32.xlu0 %v3484, 64
  %v3488 = vpop.permute.xlu0 %3487
  %v3490 = vmul.f32 %v3483, %v3488
  %3492 = vrot.lane.b32.xlu0 %v3490, 32
  %v3493 = vpop.permute.xlu0 %3492
  %v3495 = vadd.f32 %v3485, %v3493
  %v3496 = vtanh.pop %v3495
  %3498 = vrot.lane.b32.xlu0 %v3496, 64
  %v3499 = vpop.permute.xlu0 %3498
  %v3501 = vmul.f32 %v3483, %v3499
  %3503 = vrot.lane.b32.xlu0 %v3501, 32
  %v3504 = vpop.permute.xlu0 %3503
  %v3505 = vsel %vm70, %v3504, 0
  %3507 = vmatprep.subr.mxu0 0.0
  %3508 = vmatpush1.msra.mxu0 %v514
  %3509 = vmatprep.subr.mxu0 0.0
  %3510 = vmatpush1.msra.mxu0 %v516
  %3511 = vmatprep.subr.mxu0 0.0
  %3512 = vmatpush1.msra.mxu0 %v518
  %3513 = vmatprep.subr.mxu0 0.0
  %3514 = vmatpush1.msra.mxu0 %v520
  %3515 = vmatprep.subr.mxu0 0.0
  %3516 = vmatpush1.msra.mxu0 0.0
  %3517 = vmatprep.subr.mxu0 0.0
  %3518 = vmatpush1.msra.mxu0 0.0
  %3519 = vmatprep.subr.mxu0 0.0
  %3520 = vmatpush1.msra.mxu0 0.0
  %3521 = vmatprep.subr.mxu0 0.0
  %3522 = vmatpush1.msra.mxu0 0.0
  %3523 = vmatprep.subr.mxu0 0.0
  %3524 = vmatpush1.msra.mxu0 0.0
  %3525 = vmatprep.subr.mxu0 0.0
  %3526 = vmatpush1.msra.mxu0 0.0
  %3527 = vmatprep.subr.mxu0 0.0
  %3528 = vmatpush1.msra.mxu0 0.0
  %3529 = vmatprep.subr.mxu0 0.0
  %3530 = vmatpush1.msra.mxu0 0.0
  %3531 = vmatprep.subr.mxu0 0.0
  %3532 = vmatpush1.msra.mxu0 0.0
  %3533 = vmatprep.subr.mxu0 0.0
  %3534 = vmatpush1.msra.mxu0 0.0
  %3535 = vmatprep.subr.mxu0 0.0
  %3536 = vmatpush1.msra.mxu0 0.0
  %3537 = vmatprep.subr.mxu0 0.0
  %3538 = vmatpush1.msra.mxu0 0.0
  %3539 = vmatprep.subr.mxu0 0.0
  %3540 = vmatpush1.msra.mxu0 0.0
  %3541 = vmatprep.subr.mxu0 0.0
  %3542 = vmatpush1.msra.mxu0 0.0
  %3543 = vmatprep.subr.mxu0 0.0
  %3544 = vmatpush1.msra.mxu0 0.0
  %3545 = vmatprep.subr.mxu0 0.0
  %3546 = vmatpush1.msra.mxu0 0.0
  %3547 = vmatprep.subr.mxu0 0.0
  %3548 = vmatpush1.msra.mxu0 0.0
  %3549 = vmatprep.subr.mxu0 0.0
  %3550 = vmatpush1.msra.mxu0 0.0
  %3551 = vmatprep.subr.mxu0 0.0
  %3552 = vmatpush1.msra.mxu0 0.0
  %3553 = vmatprep.subr.mxu0 0.0
  %3554 = vmatpush1.msra.mxu0 0.0
  %3555 = vmatprep.subr.mxu0 0.0
  %3556 = vmatpush1.msra.mxu0 0.0
  %3557 = vmatprep.subr.mxu0 0.0
  %3558 = vmatpush1.msra.mxu0 0.0
  %3559 = vmatprep.subr.mxu0 0.0
  %3560 = vmatpush1.msra.mxu0 0.0
  %3561 = vmatprep.subr.mxu0 0.0
  %3562 = vmatpush1.msra.mxu0 0.0
  %3563 = vmatprep.subr.mxu0 0.0
  %3564 = vmatpush1.msra.mxu0 0.0
  %3565 = vmatprep.subr.mxu0 0.0
  %3566 = vmatpush1.msra.mxu0 0.0
  %3567 = vmatprep.subr.mxu0 0.0
  %3568 = vmatpush1.msra.mxu0 0.0
  %3569 = vmatprep.subr.mxu0 0.0
  %3570 = vmatpush1.msra.mxu0 0.0
  %3571 = vmatprep.mubr.f32.mxu0 0.0
  %3572 = vmatmul.mubr.f32.gmra.mrb[0].mxu0 %v3505
  %v3573 = vpop.f32.mrb[0].mxu0
  %v3574 = vadd.f32 %v527, %v3573
  %v3575 = vpop.f32.mrb[0].mxu0
  %3576 = vdwg.mxu0
  %3577 = vst.msk [vmem:[%s2 + $0x7] sm:$0x1] %vm601, %v3574
  %v3578 = vrot.slane %v161, 4
  %v3580 = vsel %vm953, %v3574, 0
  %v3582 = vsel %vm957, %v3578, 0
  %3584 = vmatprep.subr.mxu0 0.0
  %3585 = vmatpush1.msra.mxu0 %v3582
  %3586 = vmatprep.subr.mxu0 0.0
  %3587 = vmatpush1.msra.mxu0 0.0
  %3588 = vmatprep.subr.mxu0 0.0
  %3589 = vmatpush1.msra.mxu0 0.0
  %3590 = vmatprep.subr.mxu0 0.0
  %3591 = vmatpush1.msra.mxu0 0.0
  %3592 = vmatprep.subr.mxu0 0.0
  %3593 = vmatpush1.msra.mxu0 0.0
  %3594 = vmatprep.subr.mxu0 0.0
  %3595 = vmatpush1.msra.mxu0 0.0
  %3596 = vmatprep.subr.mxu0 0.0
  %3597 = vmatpush1.msra.mxu0 0.0
  %3598 = vmatprep.subr.mxu0 0.0
  %3599 = vmatpush1.msra.mxu0 0.0
  %3600 = vmatprep.subr.mxu0 0.0
  %3601 = vmatpush1.msra.mxu0 0.0
  %3602 = vmatprep.subr.mxu0 0.0
  %3603 = vmatpush1.msra.mxu0 0.0
  %3604 = vmatprep.subr.mxu0 0.0
  %3605 = vmatpush1.msra.mxu0 0.0
  %3606 = vmatprep.subr.mxu0 0.0
  %3607 = vmatpush1.msra.mxu0 0.0
  %3608 = vmatprep.subr.mxu0 0.0
  %3609 = vmatpush1.msra.mxu0 0.0
  %3610 = vmatprep.subr.mxu0 0.0
  %3611 = vmatpush1.msra.mxu0 0.0
  %3612 = vmatprep.subr.mxu0 0.0
  %3613 = vmatpush1.msra.mxu0 0.0
  %3614 = vmatprep.subr.mxu0 0.0
  %3615 = vmatpush1.msra.mxu0 0.0
  %3616 = vmatprep.subr.mxu0 0.0
  %3617 = vmatpush1.msra.mxu0 0.0
  %3618 = vmatprep.subr.mxu0 0.0
  %3619 = vmatpush1.msra.mxu0 0.0
  %3620 = vmatprep.subr.mxu0 0.0
  %3621 = vmatpush1.msra.mxu0 0.0
  %3622 = vmatprep.subr.mxu0 0.0
  %3623 = vmatpush1.msra.mxu0 0.0
  %3624 = vmatprep.subr.mxu0 0.0
  %3625 = vmatpush1.msra.mxu0 0.0
  %3626 = vmatprep.subr.mxu0 0.0
  %3627 = vmatpush1.msra.mxu0 0.0
  %3628 = vmatprep.subr.mxu0 0.0
  %3629 = vmatpush1.msra.mxu0 0.0
  %3630 = vmatprep.subr.mxu0 0.0
  %3631 = vmatpush1.msra.mxu0 0.0
  %3632 = vmatprep.subr.mxu0 0.0
  %3633 = vmatpush1.msra.mxu0 0.0
  %3634 = vmatprep.subr.mxu0 0.0
  %3635 = vmatpush1.msra.mxu0 0.0
  %3636 = vmatprep.subr.mxu0 0.0
  %3637 = vmatpush1.msra.mxu0 0.0
  %3638 = vmatprep.subr.mxu0 0.0
  %3639 = vmatpush1.msra.mxu0 0.0
  %3640 = vmatprep.subr.mxu0 0.0
  %3641 = vmatpush1.msra.mxu0 0.0
  %3642 = vmatprep.subr.mxu0 0.0
  %3643 = vmatpush1.msra.mxu0 0.0
  %3644 = vmatprep.subr.mxu0 0.0
  %3645 = vmatpush1.msra.mxu0 0.0
  %3646 = vmatprep.subr.mxu0 0.0
  %3647 = vmatpush1.msra.mxu0 0.0
  %3648 = vmatprep.mubr.f32.mxu0 0.0
  %3649 = vmatmul.mubr.f32.gmra.mrb[0].mxu0 %v3580
  %v3650 = vpop.f32.mrb[0].mxu0
  %v3651 = vadd.f32 0.0, %v3650
  %v3652 = vpop.f32.mrb[0].mxu0
  %3653 = vdwg.mxu0
  %v3654 = vadd.f32 %v3229, %v3651
  %vm3655 = vcmask 57344
  %v3656 = vsel %vm3655, %v3654, -inf
  %3657 = vmax.xlane.f32.xlu0 %v3656
  %v3658 = vpop.xlane.xlu0 %3657
  %v3659 = vsub.f32 %v3654, %v3658
  %v3660 = vmul.f32 %v3659, 1.442695
  %v3661 = vpow.pop %v3660
  %v3662 = vsel %vm3655, %v3661, 0.0
  %3663 = vadd.xlane.f32.xlu0 %v3662
  %v3664 = vpop.xlane.xlu0 %3663
  %v3665 = vrcp.pop %v3664
  %v3666 = vmul.f32 %v3661, %v3665
  %3668 = vrot.lane.b32.xlu0 %v3666, 8
  %v3669 = vpop.permute.xlu0 %3668
  %vm3671 = vcmask 122944
  %3672 = vst.msk [vmem:[%s2] sm:$0x1] %vm3671, %v3669
  %3673 = vrot.lane.b32.xlu0 %v33, 96
  %v3674 = vpop.permute.xlu0 %3673
  %vm3676 = vcmask 64512
  %v3677 = vsel %vm3676, %v3666, 0
  %3679 = vmatprep.subr.mxu0 0.0
  %3680 = vmatpush1.msra.mxu0 %v3674
  %3681 = vmatprep.subr.mxu0 0.0
  %3682 = vmatpush1.msra.mxu0 0.0
  %3683 = vmatprep.subr.mxu0 0.0
  %3684 = vmatpush1.msra.mxu0 0.0
  %3685 = vmatprep.subr.mxu0 0.0
  %3686 = vmatpush1.msra.mxu0 0.0
  %3687 = vmatprep.subr.mxu0 0.0
  %3688 = vmatpush1.msra.mxu0 0.0
  %3689 = vmatprep.subr.mxu0 0.0
  %3690 = vmatpush1.msra.mxu0 0.0
  %3691 = vmatprep.subr.mxu0 0.0
  %3692 = vmatpush1.msra.mxu0 0.0
  %3693 = vmatprep.subr.mxu0 0.0
  %3694 = vmatpush1.msra.mxu0 0.0
  %3695 = vmatprep.subr.mxu0 0.0
  %3696 = vmatpush1.msra.mxu0 0.0
  %3697 = vmatprep.subr.mxu0 0.0
  %3698 = vmatpush1.msra.mxu0 0.0
  %3699 = vmatprep.subr.mxu0 0.0
  %3700 = vmatpush1.msra.mxu0 0.0
  %3701 = vmatprep.subr.mxu0 0.0
  %3702 = vmatpush1.msra.mxu0 0.0
  %3703 = vmatprep.subr.mxu0 0.0
  %3704 = vmatpush1.msra.mxu0 0.0
  %3705 = vmatprep.subr.mxu0 0.0
  %3706 = vmatpush1.msra.mxu0 0.0
  %3707 = vmatprep.subr.mxu0 0.0
  %3708 = vmatpush1.msra.mxu0 0.0
  %3709 = vmatprep.subr.mxu0 0.0
  %3710 = vmatpush1.msra.mxu0 0.0
  %3711 = vmatprep.subr.mxu0 0.0
  %3712 = vmatpush1.msra.mxu0 0.0
  %3713 = vmatprep.subr.mxu0 0.0
  %3714 = vmatpush1.msra.mxu0 0.0
  %3715 = vmatprep.subr.mxu0 0.0
  %3716 = vmatpush1.msra.mxu0 0.0
  %3717 = vmatprep.subr.mxu0 0.0
  %3718 = vmatpush1.msra.mxu0 0.0
  %3719 = vmatprep.subr.mxu0 0.0
  %3720 = vmatpush1.msra.mxu0 0.0
  %3721 = vmatprep.subr.mxu0 0.0
  %3722 = vmatpush1.msra.mxu0 0.0
  %3723 = vmatprep.subr.mxu0 0.0
  %3724 = vmatpush1.msra.mxu0 0.0
  %3725 = vmatprep.subr.mxu0 0.0
  %3726 = vmatpush1.msra.mxu0 0.0
  %3727 = vmatprep.subr.mxu0 0.0
  %3728 = vmatpush1.msra.mxu0 0.0
  %3729 = vmatprep.subr.mxu0 0.0
  %3730 = vmatpush1.msra.mxu0 0.0
  %3731 = vmatprep.subr.mxu0 0.0
  %3732 = vmatpush1.msra.mxu0 0.0
  %3733 = vmatprep.subr.mxu0 0.0
  %3734 = vmatpush1.msra.mxu0 0.0
  %3735 = vmatprep.subr.mxu0 0.0
  %3736 = vmatpush1.msra.mxu0 0.0
  %3737 = vmatprep.subr.mxu0 0.0
  %3738 = vmatpush1.msra.mxu0 0.0
  %3739 = vmatprep.subr.mxu0 0.0
  %3740 = vmatpush1.msra.mxu0 0.0
  %3741 = vmatprep.subr.mxu0 0.0
  %3742 = vmatpush1.msra.mxu0 0.0
  %3743 = vmatprep.mubr.f32.mxu0 0.0
  %3744 = vmatmul.mubr.f32.gmra.mrb[0].mxu0 %v3677
  %v3745 = vpop.f32.mrb[0].mxu0
  %v3746 = vadd.f32 0.0, %v3745
  %v3747 = vpop.f32.mrb[0].mxu0
  %3748 = vdwg.mxu0
  %3750 = vrot.lane.b32.xlu0 %v3746, 32
  %v3751 = vpop.permute.xlu0 %3750
  %vm3753 = vcmask 516352
  %3754 = vst.msk [vmem:[%s2] sm:$0x1] %vm3753, %v3751
  // Predicated region
  $region10: #{_forward_jit.1} parent=0 // pred_check
    _
  $region11: #{_forward_jit.1} parent=0 // pred_check_branch
    %3756 = sbr.rel (0) target = $region13
  $region12: #{_forward_jit.1} parent=0 // pred_region
    _
  $region13: #{_forward_jit.1} parent=0 // pred_fallthru
    _
  // Predicated region
  $region14: #{_forward_jit.1} parent=0 // pred_check
    _
  $region15: #{_forward_jit.1} parent=0 // pred_check_branch
    %3758 = sbr.rel (0) target = $region17
  $region16: #{_forward_jit.1} parent=0 // pred_region
    _
  $region17: #{_forward_jit.1} parent=0 // pred_fallthru
    _

</llo_original>
